<compile_context>
chip_gen: v5e
topology: v5e:2x2
jax: 0.10.0
libtpu: 0.0.40
codegen_flags: <defaults>
</compile_context>

<pallas_src>
import functools

import jax
import jax.numpy as jnp
import numpy as np
from jax.experimental import pallas as pl
from jax.experimental.pallas import tpu as pltpu

_LANE = 128
_SUBLANE = 8


def _round_up(n, m):
    return ((n + m - 1) // m) * m


def _lstm_bi_kernel(x_ref, wih_f_ref, b_f_ref, wih_b_ref, b_b_ref, whh_ref,
                    wc_ref, bc_ref, out_ref, *, seq_len: int, hidden: int):
    """Fused bi-LSTM (last-step output) + classifier.

    x_ref     : (T*Bp, D)   time-major input, batch padded to a sublane multiple
    wih_f_ref : (D, 4H)     forward-direction input weights (transposed vs torch)
    b_f_ref   : (1, 4H)     forward bias (b_ih + b_hh pre-summed)
    wih_b_ref : (D, 4H)     backward-direction input weights
    b_b_ref   : (1, 4H)     backward bias
    whh_ref   : (H, 4H)     forward-direction recurrent weights
    wc_ref    : (2H, NCp)   classifier [rows for h_fwd ; rows for h_bwd], lane-padded
    bc_ref    : (1, NCp)    classifier bias, lane-padded
    out_ref   : (Bp, NCp)   lane-dense logits
    All buffers f32; matmuls accumulate in f32 (latency-bound -> bf16 buys nothing).
    """
    T, H = seq_len, hidden
    Bp = out_ref.shape[0]

    # [R1] Forward-direction input projection for every timestep in one MXU pass.
    # The backward direction only needs the last timestep (see below), so its
    # projection is NOT hoisted over T -- that was ~44-50% dead work in v2.
    gx_f = jnp.dot(x_ref[...], wih_f_ref[...],
                   preferred_element_type=jnp.float32) + b_f_ref[...]   # (T*Bp, 4H)

    whh = whh_ref[...]                                                  # (H, 4H)

    def cell(gates, c):
        # [R3] H is a multiple of 128, so each gate slice is a whole-vreg,
        # lane-tile-aligned block: no masked extraction / relayout, and each
        # activation is dispatched only on the lanes that need it.
        i = jax.nn.sigmoid(gates[:, 0:H])
        f = jax.nn.sigmoid(gates[:, H:2 * H])
        g = jnp.tanh(gates[:, 2 * H:3 * H])
        o = jax.nn.sigmoid(gates[:, 3 * H:4 * H])
        c_new = f * c + i * g
        h_new = o * jnp.tanh(c_new)
        return h_new, c_new

    # Forward recurrence: fully unrolled (T is small & static); h/c live in vregs.
    h = jnp.zeros((Bp, H), jnp.float32)
    c = jnp.zeros((Bp, H), jnp.float32)
    for t in range(T):
        g_t = gx_f[t * Bp:(t + 1) * Bp, :]                              # full-width
        if t > 0:  # h == 0 at t == 0: the recurrent matmul would be dead work
            g_t = g_t + jnp.dot(h, whh, preferred_element_type=jnp.float32)
        h, c = cell(g_t, c)
    h_fwd = h

    # Backward direction: the bidirectional output at the *last* original
    # timestep is exactly one reverse-LSTM step on x[T-1] from the zero state,
    # so the W_hh_reverse term vanishes.  NOTE: this shortcut is only valid
    # because h0 = c0 = 0 and only the last timestep's output is consumed; it
    # breaks if full bidirectional outputs or a nonzero initial state are needed.
    g_b = jnp.dot(x_ref[(T - 1) * Bp:T * Bp, :], wih_b_ref[...],
                  preferred_element_type=jnp.float32) + b_b_ref[...]    # (Bp, 4H)
    h_bwd, _ = cell(g_b, jnp.zeros((Bp, H), jnp.float32))

    # [R7] Classifier as a single MXU pass on the (lane-aligned) concat; the
    # output tile is lane-dense (NCp is a multiple of 128).
    h_cat = jnp.concatenate([h_fwd, h_bwd], axis=-1)                    # (Bp, 2H)
    logits = jnp.dot(h_cat, wc_ref[...],
                     preferred_element_type=jnp.float32) + bc_ref[...]
    out_ref[...] = logits.astype(out_ref.dtype)


def init_params(key, dim_fc, hidden, num_classes):
    """Deterministic synthetic parameters (PyTorch-style uniform init)."""
    k = 1.0 / float(hidden) ** 0.5
    kc = 1.0 / float(2 * hidden) ** 0.5
    ks = jax.random.split(key, 11)

    def u(kk, shape, s):
        return jax.random.uniform(kk, shape, jnp.float32, -s, s)

    return dict(
        hidden_dim=hidden,
        num_classes=num_classes,
        # LSTM weights stored transposed vs torch: gates = x @ W_ih + h @ W_hh + b
        wih_f=u(ks[0], (dim_fc, 4 * hidden), k),
        whh_f=u(ks[1], (hidden, 4 * hidden), k),
        b_f=u(ks[2], (1, 4 * hidden), k) + u(ks[3], (1, 4 * hidden), k),
        wih_b=u(ks[4], (dim_fc, 4 * hidden), k),
        whh_b=u(ks[5], (hidden, 4 * hidden), k),   # used by the reference only
        b_b=u(ks[6], (1, 4 * hidden), k) + u(ks[7], (1, 4 * hidden), k),
        # classifier Linear(2H -> NC), split into fwd/bwd halves, stored (H, NC)
        wc_f=u(ks[8], (hidden, num_classes), kc),
        wc_b=u(ks[9], (hidden, num_classes), kc),
        bc=u(ks[10], (1, num_classes), kc),
    )


def prepare_weights(params):
    """[R6] One-time weight-side preparation (concat / pad / cast).

    Call once and reuse across forward calls so per-call work is only the x
    transform + the kernel (at these shapes the ~8 tiny XLA weight-prep ops per
    call rivalled the kernel time).
    """
    NC = params["num_classes"]
    NCp = _round_up(NC, _LANE)
    f32 = jnp.float32
    wc = jnp.concatenate([params["wc_f"], params["wc_b"]], axis=0)       # (2H, NC)
    return dict(
        wih_f=params["wih_f"].astype(f32),
        b_f=params["b_f"].astype(f32),
        wih_b=params["wih_b"].astype(f32),
        b_b=params["b_b"].astype(f32),
        whh_f=params["whh_f"].astype(f32),
        wc=jnp.pad(wc, ((0, 0), (0, NCp - NC))).astype(f32),
        bc=jnp.pad(params["bc"], ((0, 0), (0, NCp - NC))).astype(f32),
    )


@functools.partial(jax.jit, static_argnames=("num_classes",))
def lstm_bi_forward(x0, weights, *, num_classes):
    """x0: (B, C, H, W) NCHW, matching the PyTorch module's forward input."""
    B, C, Hh, W = x0.shape
    D = C * Hh          # dim_fc / LSTM input size
    T = W               # sequence length
    H = weights["whh_f"].shape[0]
    NCp = weights["wc"].shape[1]

    Bp = _round_up(B, _SUBLANE)     # pad batch to a full sublane tile

    # x0.view(B, C*H, W).permute(0,2,1) -> time-major (T, B, D), batch-padded,
    # flattened to (T*Bp, D) so the hoisted input projection is one matmul.
    # Padded rows B..Bp-1 carry zeros; they run bounded bias-driven dynamics and
    # are sliced off below (harmless, no NaN/Inf).
    x = jnp.transpose(x0.reshape(B, D, T), (2, 0, 1)).astype(jnp.float32)
    x = jnp.pad(x, ((0, 0), (0, Bp - B), (0, 0))).reshape(T * Bp, D)

    kernel = functools.partial(_lstm_bi_kernel, seq_len=T, hidden=H)
    vmem = pl.BlockSpec(memory_space=pltpu.MemorySpace.VMEM)
    logits_padded = pl.pallas_call(
        kernel,
        out_shape=jax.ShapeDtypeStruct((Bp, NCp), jnp.float32),
        # Everything (< 1 MiB total here) fits comfortably in VMEM -> single
        # grid-less invocation with weights resident.  See module-level TODOs
        # for the large-T / v7x (64 MiB VMEM, 2 TC) streaming & sharding plan.
        in_specs=[vmem] * 8,
        out_specs=vmem,
    )(x, weights["wih_f"], weights["b_f"], weights["wih_b"], weights["b_b"],
      weights["whh_f"], weights["wc"], weights["bc"])

    logits = logits_padded[:B, :num_classes]
    action_all_base = []   # the torch module returns an (always empty) python list
    return logits, action_all_base


def lstm_bi_reference(x0, params):
    """Pure-JAX f32 reference implementing the full bidirectional LSTM."""
    B, C, Hh, W = x0.shape
    D, T, H = C * Hh, W, params["hidden_dim"]
    xs = jnp.transpose(x0.reshape(B, D, T).astype(jnp.float32), (2, 0, 1))  # (T,B,D)

    def run(seq, wih, whh, b):
        gx = jnp.einsum("tbd,dg->tbg", seq, wih) + b

        def step(carry, g):
            h, c = carry
            gates = g + h @ whh
            i = jax.nn.sigmoid(gates[:, :H])
            f = jax.nn.sigmoid(gates[:, H:2 * H])
            gg = jnp.tanh(gates[:, 2 * H:3 * H])
            o = jax.nn.sigmoid(gates[:, 3 * H:])
            c = f * c + i * gg
            h = o * jnp.tanh(c)
            return (h, c), h

        init = (jnp.zeros((B, H), jnp.float32), jnp.zeros((B, H), jnp.float32))
        _, hs = jax.lax.scan(step, init, gx)
        return hs                                                    # (T, B, H)

    hs_f = run(xs, params["wih_f"], params["whh_f"], params["b_f"])
    hs_b = run(xs[::-1], params["wih_b"], params["whh_b"], params["b_b"])[::-1]
    last = jnp.concatenate([hs_f[-1], hs_b[-1]], axis=-1)            # (B, 2H)
    wc = jnp.concatenate([params["wc_f"], params["wc_b"]], axis=0)
    return last @ wc + params["bc"]


if __name__ == "__main__":
    # Small shapes consistent with the module's forward:
    #   B=2, C=4, spatial H=16, W=16  ->  dim_fc = C*H = 64, seq_len = W = 16
    #   hidden = 128 (the real module uses 1024; a multiple of 128 keeps every
    #   gate/state slice lane-tile aligned -- review item R3), num_classes = 10.
    B, C, Hh, W = 2, 4, 16, 16
    hidden, num_classes = 128, 10

    key = jax.random.PRNGKey(0)
    kx, kp = jax.random.split(key)
    x0 = jax.random.normal(kx, (B, C, Hh, W), jnp.float32)
    params = init_params(kp, dim_fc=C * Hh, hidden=hidden,
                         num_classes=num_classes)

    # [R6] weight prep done once, reused for every forward call.
    weights = prepare_weights(params)

    logits, action_all_base = lstm_bi_forward(x0, weights, num_classes=num_classes)
    jax.block_until_ready(logits)
    assert logits.shape == (B, num_classes)
    assert action_all_base == []

    # Correctness vs. pure-JAX f32 reference. All operands are f32 now (no bf16
    # MXU casts), so the tolerance is 5x tighter than v2.
    ref = lstm_bi_reference(x0, params)
    err = float(np.max(np.abs(np.asarray(logits) - np.asarray(ref))))
    assert np.allclose(np.asarray(logits), np.asarray(ref),
                       atol=1e-2, rtol=1e-2), f"max abs err {err}"

    print("KERNEL_OK")
</pallas_src>

<mosaic_0001>
module attributes {stable_mosaic.version = 11 : i64} {
  func.func @_lstm_bi_kernel(%arg0: memref<128x64xf32, #tpu.memory_space<vmem>>, %arg1: memref<64x512xf32, #tpu.memory_space<vmem>>, %arg2: memref<1x512xf32, #tpu.memory_space<vmem>>, %arg3: memref<64x512xf32, #tpu.memory_space<vmem>>, %arg4: memref<1x512xf32, #tpu.memory_space<vmem>>, %arg5: memref<128x512xf32, #tpu.memory_space<vmem>>, %arg6: memref<256x128xf32, #tpu.memory_space<vmem>>, %arg7: memref<1x128xf32, #tpu.memory_space<vmem>>, %arg8: memref<8x128xf32, #tpu.memory_space<vmem>>) attributes {dimension_semantics = [], scalar_prefetch = 0 : i64, scratch_operands = 0 : i64, tpu.core_type = #tpu.core_type<tc>} {
    %c0 = arith.constant 0 : index
    %c0_0 = arith.constant 0 : index
    %0 = vector.load %arg0[%c0, %c0_0] : memref<128x64xf32, #tpu.memory_space<vmem>>, vector<128x64xf32>
    %c0_1 = arith.constant 0 : index
    %c0_2 = arith.constant 0 : index
    %1 = vector.load %arg1[%c0_1, %c0_2] : memref<64x512xf32, #tpu.memory_space<vmem>>, vector<64x512xf32>
    %cst = arith.constant dense<0.000000e+00> : vector<128x512xf32>
    %2 = tpu.matmul %0, %1, %cst {dimension_numbers = #tpu.dot_dimension_numbers<[1], [0], [0], [1], [0, 0, 1, 1], [], []>} : vector<128x64xf32>, vector<64x512xf32>, vector<128x512xf32> -> vector<128x512xf32>
    %c0_3 = arith.constant 0 : index
    %c0_4 = arith.constant 0 : index
    %3 = vector.load %arg2[%c0_3, %c0_4] : memref<1x512xf32, #tpu.memory_space<vmem>>, vector<1x512xf32>
    %4 = vector.broadcast %3 : vector<1x512xf32> to vector<128x512xf32>
    %5 = arith.addf %2, %4 : vector<128x512xf32>
    %c0_5 = arith.constant 0 : index
    %c0_6 = arith.constant 0 : index
    %6 = vector.load %arg5[%c0_5, %c0_6] : memref<128x512xf32, #tpu.memory_space<vmem>>, vector<128x512xf32>
    %cst_7 = arith.constant 0.000000e+00 : f32
    %7 = vector.broadcast %cst_7 : f32 to vector<8x128xf32>
    %8 = vector.extract_strided_slice %5 {offsets = [0, 0], sizes = [8, 512], strides = [1, 1]} : vector<128x512xf32> to vector<8x512xf32>
    %9 = vector.extract_strided_slice %8 {offsets = [0, 0], sizes = [8, 128], strides = [1, 1]} : vector<8x512xf32> to vector<8x128xf32>
    %10 = arith.negf %9 : vector<8x128xf32>
    %11 = math.exp %10 : vector<8x128xf32>
    %cst_8 = arith.constant 1.000000e+00 : f32
    %12 = vector.broadcast %cst_8 : f32 to vector<8x128xf32>
    %13 = arith.addf %12, %11 : vector<8x128xf32>
    %14 = arith.divf %12, %13 : vector<8x128xf32>
    %15 = vector.extract_strided_slice %8 {offsets = [0, 128], sizes = [8, 128], strides = [1, 1]} : vector<8x512xf32> to vector<8x128xf32>
    %16 = arith.negf %15 : vector<8x128xf32>
    %17 = math.exp %16 : vector<8x128xf32>
    %cst_9 = arith.constant 1.000000e+00 : f32
    %18 = vector.broadcast %cst_9 : f32 to vector<8x128xf32>
    %19 = arith.addf %18, %17 : vector<8x128xf32>
    %20 = arith.divf %18, %19 : vector<8x128xf32>
    %21 = vector.extract_strided_slice %8 {offsets = [0, 256], sizes = [8, 128], strides = [1, 1]} : vector<8x512xf32> to vector<8x128xf32>
    %22 = math.tanh %21 : vector<8x128xf32>
    %23 = vector.extract_strided_slice %8 {offsets = [0, 384], sizes = [8, 128], strides = [1, 1]} : vector<8x512xf32> to vector<8x128xf32>
    %24 = arith.negf %23 : vector<8x128xf32>
    %25 = math.exp %24 : vector<8x128xf32>
    %cst_10 = arith.constant 1.000000e+00 : f32
    %26 = vector.broadcast %cst_10 : f32 to vector<8x128xf32>
    %27 = arith.addf %26, %25 : vector<8x128xf32>
    %28 = arith.divf %26, %27 : vector<8x128xf32>
    %29 = arith.mulf %20, %7 : vector<8x128xf32>
    %30 = arith.mulf %14, %22 : vector<8x128xf32>
    %31 = arith.addf %29, %30 : vector<8x128xf32>
    %32 = math.tanh %31 : vector<8x128xf32>
    %33 = arith.mulf %28, %32 : vector<8x128xf32>
    %34 = vector.extract_strided_slice %5 {offsets = [8, 0], sizes = [8, 512], strides = [1, 1]} : vector<128x512xf32> to vector<8x512xf32>
    %cst_11 = arith.constant dense<0.000000e+00> : vector<8x512xf32>
    %35 = tpu.matmul %33, %6, %cst_11 {dimension_numbers = #tpu.dot_dimension_numbers<[1], [0], [0], [1], [0, 0, 1, 1], [], []>} : vector<8x128xf32>, vector<128x512xf32>, vector<8x512xf32> -> vector<8x512xf32>
    %36 = arith.addf %34, %35 : vector<8x512xf32>
    %37 = vector.extract_strided_slice %36 {offsets = [0, 0], sizes = [8, 128], strides = [1, 1]} : vector<8x512xf32> to vector<8x128xf32>
    %38 = arith.negf %37 : vector<8x128xf32>
    %39 = math.exp %38 : vector<8x128xf32>
    %cst_12 = arith.constant 1.000000e+00 : f32
    %40 = vector.broadcast %cst_12 : f32 to vector<8x128xf32>
    %41 = arith.addf %40, %39 : vector<8x128xf32>
    %42 = arith.divf %40, %41 : vector<8x128xf32>
    %43 = vector.extract_strided_slice %36 {offsets = [0, 128], sizes = [8, 128], strides = [1, 1]} : vector<8x512xf32> to vector<8x128xf32>
    %44 = arith.negf %43 : vector<8x128xf32>
    %45 = math.exp %44 : vector<8x128xf32>
    %cst_13 = arith.constant 1.000000e+00 : f32
    %46 = vector.broadcast %cst_13 : f32 to vector<8x128xf32>
    %47 = arith.addf %46, %45 : vector<8x128xf32>
    %48 = arith.divf %46, %47 : vector<8x128xf32>
    %49 = vector.extract_strided_slice %36 {offsets = [0, 256], sizes = [8, 128], strides = [1, 1]} : vector<8x512xf32> to vector<8x128xf32>
    %50 = math.tanh %49 : vector<8x128xf32>
    %51 = vector.extract_strided_slice %36 {offsets = [0, 384], sizes = [8, 128], strides = [1, 1]} : vector<8x512xf32> to vector<8x128xf32>
    %52 = arith.negf %51 : vector<8x128xf32>
    %53 = math.exp %52 : vector<8x128xf32>
    %cst_14 = arith.constant 1.000000e+00 : f32
    %54 = vector.broadcast %cst_14 : f32 to vector<8x128xf32>
    %55 = arith.addf %54, %53 : vector<8x128xf32>
    %56 = arith.divf %54, %55 : vector<8x128xf32>
    %57 = arith.mulf %48, %31 : vector<8x128xf32>
    %58 = arith.mulf %42, %50 : vector<8x128xf32>
    %59 = arith.addf %57, %58 : vector<8x128xf32>
    %60 = math.tanh %59 : vector<8x128xf32>
    %61 = arith.mulf %56, %60 : vector<8x128xf32>
    %62 = vector.extract_strided_slice %5 {offsets = [16, 0], sizes = [8, 512], strides = [1, 1]} : vector<128x512xf32> to vector<8x512xf32>
    %cst_15 = arith.constant dense<0.000000e+00> : vector<8x512xf32>
    %63 = tpu.matmul %61, %6, %cst_15 {dimension_numbers = #tpu.dot_dimension_numbers<[1], [0], [0], [1], [0, 0, 1, 1], [], []>} : vector<8x128xf32>, vector<128x512xf32>, vector<8x512xf32> -> vector<8x512xf32>
    %64 = arith.addf %62, %63 : vector<8x512xf32>
    %65 = vector.extract_strided_slice %64 {offsets = [0, 0], sizes = [8, 128], strides = [1, 1]} : vector<8x512xf32> to vector<8x128xf32>
    %66 = arith.negf %65 : vector<8x128xf32>
    %67 = math.exp %66 : vector<8x128xf32>
    %cst_16 = arith.constant 1.000000e+00 : f32
    %68 = vector.broadcast %cst_16 : f32 to vector<8x128xf32>
    %69 = arith.addf %68, %67 : vector<8x128xf32>
    %70 = arith.divf %68, %69 : vector<8x128xf32>
    %71 = vector.extract_strided_slice %64 {offsets = [0, 128], sizes = [8, 128], strides = [1, 1]} : vector<8x512xf32> to vector<8x128xf32>
    %72 = arith.negf %71 : vector<8x128xf32>
    %73 = math.exp %72 : vector<8x128xf32>
    %cst_17 = arith.constant 1.000000e+00 : f32
    %74 = vector.broadcast %cst_17 : f32 to vector<8x128xf32>
    %75 = arith.addf %74, %73 : vector<8x128xf32>
    %76 = arith.divf %74, %75 : vector<8x128xf32>
    %77 = vector.extract_strided_slice %64 {offsets = [0, 256], sizes = [8, 128], strides = [1, 1]} : vector<8x512xf32> to vector<8x128xf32>
    %78 = math.tanh %77 : vector<8x128xf32>
    %79 = vector.extract_strided_slice %64 {offsets = [0, 384], sizes = [8, 128], strides = [1, 1]} : vector<8x512xf32> to vector<8x128xf32>
    %80 = arith.negf %79 : vector<8x128xf32>
    %81 = math.exp %80 : vector<8x128xf32>
    %cst_18 = arith.constant 1.000000e+00 : f32
    %82 = vector.broadcast %cst_18 : f32 to vector<8x128xf32>
    %83 = arith.addf %82, %81 : vector<8x128xf32>
    %84 = arith.divf %82, %83 : vector<8x128xf32>
    %85 = arith.mulf %76, %59 : vector<8x128xf32>
    %86 = arith.mulf %70, %78 : vector<8x128xf32>
    %87 = arith.addf %85, %86 : vector<8x128xf32>
    %88 = math.tanh %87 : vector<8x128xf32>
    %89 = arith.mulf %84, %88 : vector<8x128xf32>
    %90 = vector.extract_strided_slice %5 {offsets = [24, 0], sizes = [8, 512], strides = [1, 1]} : vector<128x512xf32> to vector<8x512xf32>
    %cst_19 = arith.constant dense<0.000000e+00> : vector<8x512xf32>
    %91 = tpu.matmul %89, %6, %cst_19 {dimension_numbers = #tpu.dot_dimension_numbers<[1], [0], [0], [1], [0, 0, 1, 1], [], []>} : vector<8x128xf32>, vector<128x512xf32>, vector<8x512xf32> -> vector<8x512xf32>
    %92 = arith.addf %90, %91 : vector<8x512xf32>
    %93 = vector.extract_strided_slice %92 {offsets = [0, 0], sizes = [8, 128], strides = [1, 1]} : vector<8x512xf32> to vector<8x128xf32>
    %94 = arith.negf %93 : vector<8x128xf32>
    %95 = math.exp %94 : vector<8x128xf32>
    %cst_20 = arith.constant 1.000000e+00 : f32
    %96 = vector.broadcast %cst_20 : f32 to vector<8x128xf32>
    %97 = arith.addf %96, %95 : vector<8x128xf32>
    %98 = arith.divf %96, %97 : vector<8x128xf32>
    %99 = vector.extract_strided_slice %92 {offsets = [0, 128], sizes = [8, 128], strides = [1, 1]} : vector<8x512xf32> to vector<8x128xf32>
    %100 = arith.negf %99 : vector<8x128xf32>
    %101 = math.exp %100 : vector<8x128xf32>
    %cst_21 = arith.constant 1.000000e+00 : f32
    %102 = vector.broadcast %cst_21 : f32 to vector<8x128xf32>
    %103 = arith.addf %102, %101 : vector<8x128xf32>
    %104 = arith.divf %102, %103 : vector<8x128xf32>
    %105 = vector.extract_strided_slice %92 {offsets = [0, 256], sizes = [8, 128], strides = [1, 1]} : vector<8x512xf32> to vector<8x128xf32>
    %106 = math.tanh %105 : vector<8x128xf32>
    %107 = vector.extract_strided_slice %92 {offsets = [0, 384], sizes = [8, 128], strides = [1, 1]} : vector<8x512xf32> to vector<8x128xf32>
    %108 = arith.negf %107 : vector<8x128xf32>
    %109 = math.exp %108 : vector<8x128xf32>
    %cst_22 = arith.constant 1.000000e+00 : f32
    %110 = vector.broadcast %cst_22 : f32 to vector<8x128xf32>
    %111 = arith.addf %110, %109 : vector<8x128xf32>
    %112 = arith.divf %110, %111 : vector<8x128xf32>
    %113 = arith.mulf %104, %87 : vector<8x128xf32>
    %114 = arith.mulf %98, %106 : vector<8x128xf32>
    %115 = arith.addf %113, %114 : vector<8x128xf32>
    %116 = math.tanh %115 : vector<8x128xf32>
    %117 = arith.mulf %112, %116 : vector<8x128xf32>
    %118 = vector.extract_strided_slice %5 {offsets = [32, 0], sizes = [8, 512], strides = [1, 1]} : vector<128x512xf32> to vector<8x512xf32>
    %cst_23 = arith.constant dense<0.000000e+00> : vector<8x512xf32>
    %119 = tpu.matmul %117, %6, %cst_23 {dimension_numbers = #tpu.dot_dimension_numbers<[1], [0], [0], [1], [0, 0, 1, 1], [], []>} : vector<8x128xf32>, vector<128x512xf32>, vector<8x512xf32> -> vector<8x512xf32>
    %120 = arith.addf %118, %119 : vector<8x512xf32>
    %121 = vector.extract_strided_slice %120 {offsets = [0, 0], sizes = [8, 128], strides = [1, 1]} : vector<8x512xf32> to vector<8x128xf32>
    %122 = arith.negf %121 : vector<8x128xf32>
    %123 = math.exp %122 : vector<8x128xf32>
    %cst_24 = arith.constant 1.000000e+00 : f32
    %124 = vector.broadcast %cst_24 : f32 to vector<8x128xf32>
    %125 = arith.addf %124, %123 : vector<8x128xf32>
    %126 = arith.divf %124, %125 : vector<8x128xf32>
    %127 = vector.extract_strided_slice %120 {offsets = [0, 128], sizes = [8, 128], strides = [1, 1]} : vector<8x512xf32> to vector<8x128xf32>
    %128 = arith.negf %127 : vector<8x128xf32>
    %129 = math.exp %128 : vector<8x128xf32>
    %cst_25 = arith.constant 1.000000e+00 : f32
    %130 = vector.broadcast %cst_25 : f32 to vector<8x128xf32>
    %131 = arith.addf %130, %129 : vector<8x128xf32>
    %132 = arith.divf %130, %131 : vector<8x128xf32>
    %133 = vector.extract_strided_slice %120 {offsets = [0, 256], sizes = [8, 128], strides = [1, 1]} : vector<8x512xf32> to vector<8x128xf32>
    %134 = math.tanh %133 : vector<8x128xf32>
    %135 = vector.extract_strided_slice %120 {offsets = [0, 384], sizes = [8, 128], strides = [1, 1]} : vector<8x512xf32> to vector<8x128xf32>
    %136 = arith.negf %135 : vector<8x128xf32>
    %137 = math.exp %136 : vector<8x128xf32>
    %cst_26 = arith.constant 1.000000e+00 : f32
    %138 = vector.broadcast %cst_26 : f32 to vector<8x128xf32>
    %139 = arith.addf %138, %137 : vector<8x128xf32>
    %140 = arith.divf %138, %139 : vector<8x128xf32>
    %141 = arith.mulf %132, %115 : vector<8x128xf32>
    %142 = arith.mulf %126, %134 : vector<8x128xf32>
    %143 = arith.addf %141, %142 : vector<8x128xf32>
    %144 = math.tanh %143 : vector<8x128xf32>
    %145 = arith.mulf %140, %144 : vector<8x128xf32>
    %146 = vector.extract_strided_slice %5 {offsets = [40, 0], sizes = [8, 512], strides = [1, 1]} : vector<128x512xf32> to vector<8x512xf32>
    %cst_27 = arith.constant dense<0.000000e+00> : vector<8x512xf32>
    %147 = tpu.matmul %145, %6, %cst_27 {dimension_numbers = #tpu.dot_dimension_numbers<[1], [0], [0], [1], [0, 0, 1, 1], [], []>} : vector<8x128xf32>, vector<128x512xf32>, vector<8x512xf32> -> vector<8x512xf32>
    %148 = arith.addf %146, %147 : vector<8x512xf32>
    %149 = vector.extract_strided_slice %148 {offsets = [0, 0], sizes = [8, 128], strides = [1, 1]} : vector<8x512xf32> to vector<8x128xf32>
    %150 = arith.negf %149 : vector<8x128xf32>
    %151 = math.exp %150 : vector<8x128xf32>
    %cst_28 = arith.constant 1.000000e+00 : f32
    %152 = vector.broadcast %cst_28 : f32 to vector<8x128xf32>
    %153 = arith.addf %152, %151 : vector<8x128xf32>
    %154 = arith.divf %152, %153 : vector<8x128xf32>
    %155 = vector.extract_strided_slice %148 {offsets = [0, 128], sizes = [8, 128], strides = [1, 1]} : vector<8x512xf32> to vector<8x128xf32>
    %156 = arith.negf %155 : vector<8x128xf32>
    %157 = math.exp %156 : vector<8x128xf32>
    %cst_29 = arith.constant 1.000000e+00 : f32
    %158 = vector.broadcast %cst_29 : f32 to vector<8x128xf32>
    %159 = arith.addf %158, %157 : vector<8x128xf32>
    %160 = arith.divf %158, %159 : vector<8x128xf32>
    %161 = vector.extract_strided_slice %148 {offsets = [0, 256], sizes = [8, 128], strides = [1, 1]} : vector<8x512xf32> to vector<8x128xf32>
    %162 = math.tanh %161 : vector<8x128xf32>
    %163 = vector.extract_strided_slice %148 {offsets = [0, 384], sizes = [8, 128], strides = [1, 1]} : vector<8x512xf32> to vector<8x128xf32>
    %164 = arith.negf %163 : vector<8x128xf32>
    %165 = math.exp %164 : vector<8x128xf32>
    %cst_30 = arith.constant 1.000000e+00 : f32
    %166 = vector.broadcast %cst_30 : f32 to vector<8x128xf32>
    %167 = arith.addf %166, %165 : vector<8x128xf32>
    %168 = arith.divf %166, %167 : vector<8x128xf32>
    %169 = arith.mulf %160, %143 : vector<8x128xf32>
    %170 = arith.mulf %154, %162 : vector<8x128xf32>
    %171 = arith.addf %169, %170 : vector<8x128xf32>
    %172 = math.tanh %171 : vector<8x128xf32>
    %173 = arith.mulf %168, %172 : vector<8x128xf32>
    %174 = vector.extract_strided_slice %5 {offsets = [48, 0], sizes = [8, 512], strides = [1, 1]} : vector<128x512xf32> to vector<8x512xf32>
    %cst_31 = arith.constant dense<0.000000e+00> : vector<8x512xf32>
    %175 = tpu.matmul %173, %6, %cst_31 {dimension_numbers = #tpu.dot_dimension_numbers<[1], [0], [0], [1], [0, 0, 1, 1], [], []>} : vector<8x128xf32>, vector<128x512xf32>, vector<8x512xf32> -> vector<8x512xf32>
    %176 = arith.addf %174, %175 : vector<8x512xf32>
    %177 = vector.extract_strided_slice %176 {offsets = [0, 0], sizes = [8, 128], strides = [1, 1]} : vector<8x512xf32> to vector<8x128xf32>
    %178 = arith.negf %177 : vector<8x128xf32>
    %179 = math.exp %178 : vector<8x128xf32>
    %cst_32 = arith.constant 1.000000e+00 : f32
    %180 = vector.broadcast %cst_32 : f32 to vector<8x128xf32>
    %181 = arith.addf %180, %179 : vector<8x128xf32>
    %182 = arith.divf %180, %181 : vector<8x128xf32>
    %183 = vector.extract_strided_slice %176 {offsets = [0, 128], sizes = [8, 128], strides = [1, 1]} : vector<8x512xf32> to vector<8x128xf32>
    %184 = arith.negf %183 : vector<8x128xf32>
    %185 = math.exp %184 : vector<8x128xf32>
    %cst_33 = arith.constant 1.000000e+00 : f32
    %186 = vector.broadcast %cst_33 : f32 to vector<8x128xf32>
    %187 = arith.addf %186, %185 : vector<8x128xf32>
    %188 = arith.divf %186, %187 : vector<8x128xf32>
    %189 = vector.extract_strided_slice %176 {offsets = [0, 256], sizes = [8, 128], strides = [1, 1]} : vector<8x512xf32> to vector<8x128xf32>
    %190 = math.tanh %189 : vector<8x128xf32>
    %191 = vector.extract_strided_slice %176 {offsets = [0, 384], sizes = [8, 128], strides = [1, 1]} : vector<8x512xf32> to vector<8x128xf32>
    %192 = arith.negf %191 : vector<8x128xf32>
    %193 = math.exp %192 : vector<8x128xf32>
    %cst_34 = arith.constant 1.000000e+00 : f32
    %194 = vector.broadcast %cst_34 : f32 to vector<8x128xf32>
    %195 = arith.addf %194, %193 : vector<8x128xf32>
    %196 = arith.divf %194, %195 : vector<8x128xf32>
    %197 = arith.mulf %188, %171 : vector<8x128xf32>
    %198 = arith.mulf %182, %190 : vector<8x128xf32>
    %199 = arith.addf %197, %198 : vector<8x128xf32>
    %200 = math.tanh %199 : vector<8x128xf32>
    %201 = arith.mulf %196, %200 : vector<8x128xf32>
    %202 = vector.extract_strided_slice %5 {offsets = [56, 0], sizes = [8, 512], strides = [1, 1]} : vector<128x512xf32> to vector<8x512xf32>
    %cst_35 = arith.constant dense<0.000000e+00> : vector<8x512xf32>
    %203 = tpu.matmul %201, %6, %cst_35 {dimension_numbers = #tpu.dot_dimension_numbers<[1], [0], [0], [1], [0, 0, 1, 1], [], []>} : vector<8x128xf32>, vector<128x512xf32>, vector<8x512xf32> -> vector<8x512xf32>
    %204 = arith.addf %202, %203 : vector<8x512xf32>
    %205 = vector.extract_strided_slice %204 {offsets = [0, 0], sizes = [8, 128], strides = [1, 1]} : vector<8x512xf32> to vector<8x128xf32>
    %206 = arith.negf %205 : vector<8x128xf32>
    %207 = math.exp %206 : vector<8x128xf32>
    %cst_36 = arith.constant 1.000000e+00 : f32
    %208 = vector.broadcast %cst_36 : f32 to vector<8x128xf32>
    %209 = arith.addf %208, %207 : vector<8x128xf32>
    %210 = arith.divf %208, %209 : vector<8x128xf32>
    %211 = vector.extract_strided_slice %204 {offsets = [0, 128], sizes = [8, 128], strides = [1, 1]} : vector<8x512xf32> to vector<8x128xf32>
    %212 = arith.negf %211 : vector<8x128xf32>
    %213 = math.exp %212 : vector<8x128xf32>
    %cst_37 = arith.constant 1.000000e+00 : f32
    %214 = vector.broadcast %cst_37 : f32 to vector<8x128xf32>
    %215 = arith.addf %214, %213 : vector<8x128xf32>
    %216 = arith.divf %214, %215 : vector<8x128xf32>
    %217 = vector.extract_strided_slice %204 {offsets = [0, 256], sizes = [8, 128], strides = [1, 1]} : vector<8x512xf32> to vector<8x128xf32>
    %218 = math.tanh %217 : vector<8x128xf32>
    %219 = vector.extract_strided_slice %204 {offsets = [0, 384], sizes = [8, 128], strides = [1, 1]} : vector<8x512xf32> to vector<8x128xf32>
    %220 = arith.negf %219 : vector<8x128xf32>
    %221 = math.exp %220 : vector<8x128xf32>
    %cst_38 = arith.constant 1.000000e+00 : f32
    %222 = vector.broadcast %cst_38 : f32 to vector<8x128xf32>
    %223 = arith.addf %222, %221 : vector<8x128xf32>
    %224 = arith.divf %222, %223 : vector<8x128xf32>
    %225 = arith.mulf %216, %199 : vector<8x128xf32>
    %226 = arith.mulf %210, %218 : vector<8x128xf32>
    %227 = arith.addf %225, %226 : vector<8x128xf32>
    %228 = math.tanh %227 : vector<8x128xf32>
    %229 = arith.mulf %224, %228 : vector<8x128xf32>
    %230 = vector.extract_strided_slice %5 {offsets = [64, 0], sizes = [8, 512], strides = [1, 1]} : vector<128x512xf32> to vector<8x512xf32>
    %cst_39 = arith.constant dense<0.000000e+00> : vector<8x512xf32>
    %231 = tpu.matmul %229, %6, %cst_39 {dimension_numbers = #tpu.dot_dimension_numbers<[1], [0], [0], [1], [0, 0, 1, 1], [], []>} : vector<8x128xf32>, vector<128x512xf32>, vector<8x512xf32> -> vector<8x512xf32>
    %232 = arith.addf %230, %231 : vector<8x512xf32>
    %233 = vector.extract_strided_slice %232 {offsets = [0, 0], sizes = [8, 128], strides = [1, 1]} : vector<8x512xf32> to vector<8x128xf32>
    %234 = arith.negf %233 : vector<8x128xf32>
    %235 = math.exp %234 : vector<8x128xf32>
    %cst_40 = arith.constant 1.000000e+00 : f32
    %236 = vector.broadcast %cst_40 : f32 to vector<8x128xf32>
    %237 = arith.addf %236, %235 : vector<8x128xf32>
    %238 = arith.divf %236, %237 : vector<8x128xf32>
    %239 = vector.extract_strided_slice %232 {offsets = [0, 128], sizes = [8, 128], strides = [1, 1]} : vector<8x512xf32> to vector<8x128xf32>
    %240 = arith.negf %239 : vector<8x128xf32>
    %241 = math.exp %240 : vector<8x128xf32>
    %cst_41 = arith.constant 1.000000e+00 : f32
    %242 = vector.broadcast %cst_41 : f32 to vector<8x128xf32>
    %243 = arith.addf %242, %241 : vector<8x128xf32>
    %244 = arith.divf %242, %243 : vector<8x128xf32>
    %245 = vector.extract_strided_slice %232 {offsets = [0, 256], sizes = [8, 128], strides = [1, 1]} : vector<8x512xf32> to vector<8x128xf32>
    %246 = math.tanh %245 : vector<8x128xf32>
    %247 = vector.extract_strided_slice %232 {offsets = [0, 384], sizes = [8, 128], strides = [1, 1]} : vector<8x512xf32> to vector<8x128xf32>
    %248 = arith.negf %247 : vector<8x128xf32>
    %249 = math.exp %248 : vector<8x128xf32>
    %cst_42 = arith.constant 1.000000e+00 : f32
    %250 = vector.broadcast %cst_42 : f32 to vector<8x128xf32>
    %251 = arith.addf %250, %249 : vector<8x128xf32>
    %252 = arith.divf %250, %251 : vector<8x128xf32>
    %253 = arith.mulf %244, %227 : vector<8x128xf32>
    %254 = arith.mulf %238, %246 : vector<8x128xf32>
    %255 = arith.addf %253, %254 : vector<8x128xf32>
    %256 = math.tanh %255 : vector<8x128xf32>
    %257 = arith.mulf %252, %256 : vector<8x128xf32>
    %258 = vector.extract_strided_slice %5 {offsets = [72, 0], sizes = [8, 512], strides = [1, 1]} : vector<128x512xf32> to vector<8x512xf32>
    %cst_43 = arith.constant dense<0.000000e+00> : vector<8x512xf32>
    %259 = tpu.matmul %257, %6, %cst_43 {dimension_numbers = #tpu.dot_dimension_numbers<[1], [0], [0], [1], [0, 0, 1, 1], [], []>} : vector<8x128xf32>, vector<128x512xf32>, vector<8x512xf32> -> vector<8x512xf32>
    %260 = arith.addf %258, %259 : vector<8x512xf32>
    %261 = vector.extract_strided_slice %260 {offsets = [0, 0], sizes = [8, 128], strides = [1, 1]} : vector<8x512xf32> to vector<8x128xf32>
    %262 = arith.negf %261 : vector<8x128xf32>
    %263 = math.exp %262 : vector<8x128xf32>
    %cst_44 = arith.constant 1.000000e+00 : f32
    %264 = vector.broadcast %cst_44 : f32 to vector<8x128xf32>
    %265 = arith.addf %264, %263 : vector<8x128xf32>
    %266 = arith.divf %264, %265 : vector<8x128xf32>
    %267 = vector.extract_strided_slice %260 {offsets = [0, 128], sizes = [8, 128], strides = [1, 1]} : vector<8x512xf32> to vector<8x128xf32>
    %268 = arith.negf %267 : vector<8x128xf32>
    %269 = math.exp %268 : vector<8x128xf32>
    %cst_45 = arith.constant 1.000000e+00 : f32
    %270 = vector.broadcast %cst_45 : f32 to vector<8x128xf32>
    %271 = arith.addf %270, %269 : vector<8x128xf32>
    %272 = arith.divf %270, %271 : vector<8x128xf32>
    %273 = vector.extract_strided_slice %260 {offsets = [0, 256], sizes = [8, 128], strides = [1, 1]} : vector<8x512xf32> to vector<8x128xf32>
    %274 = math.tanh %273 : vector<8x128xf32>
    %275 = vector.extract_strided_slice %260 {offsets = [0, 384], sizes = [8, 128], strides = [1, 1]} : vector<8x512xf32> to vector<8x128xf32>
    %276 = arith.negf %275 : vector<8x128xf32>
    %277 = math.exp %276 : vector<8x128xf32>
    %cst_46 = arith.constant 1.000000e+00 : f32
    %278 = vector.broadcast %cst_46 : f32 to vector<8x128xf32>
    %279 = arith.addf %278, %277 : vector<8x128xf32>
    %280 = arith.divf %278, %279 : vector<8x128xf32>
    %281 = arith.mulf %272, %255 : vector<8x128xf32>
    %282 = arith.mulf %266, %274 : vector<8x128xf32>
    %283 = arith.addf %281, %282 : vector<8x128xf32>
    %284 = math.tanh %283 : vector<8x128xf32>
    %285 = arith.mulf %280, %284 : vector<8x128xf32>
    %286 = vector.extract_strided_slice %5 {offsets = [80, 0], sizes = [8, 512], strides = [1, 1]} : vector<128x512xf32> to vector<8x512xf32>
    %cst_47 = arith.constant dense<0.000000e+00> : vector<8x512xf32>
    %287 = tpu.matmul %285, %6, %cst_47 {dimension_numbers = #tpu.dot_dimension_numbers<[1], [0], [0], [1], [0, 0, 1, 1], [], []>} : vector<8x128xf32>, vector<128x512xf32>, vector<8x512xf32> -> vector<8x512xf32>
    %288 = arith.addf %286, %287 : vector<8x512xf32>
    %289 = vector.extract_strided_slice %288 {offsets = [0, 0], sizes = [8, 128], strides = [1, 1]} : vector<8x512xf32> to vector<8x128xf32>
    %290 = arith.negf %289 : vector<8x128xf32>
    %291 = math.exp %290 : vector<8x128xf32>
    %cst_48 = arith.constant 1.000000e+00 : f32
    %292 = vector.broadcast %cst_48 : f32 to vector<8x128xf32>
    %293 = arith.addf %292, %291 : vector<8x128xf32>
    %294 = arith.divf %292, %293 : vector<8x128xf32>
    %295 = vector.extract_strided_slice %288 {offsets = [0, 128], sizes = [8, 128], strides = [1, 1]} : vector<8x512xf32> to vector<8x128xf32>
    %296 = arith.negf %295 : vector<8x128xf32>
    %297 = math.exp %296 : vector<8x128xf32>
    %cst_49 = arith.constant 1.000000e+00 : f32
    %298 = vector.broadcast %cst_49 : f32 to vector<8x128xf32>
    %299 = arith.addf %298, %297 : vector<8x128xf32>
    %300 = arith.divf %298, %299 : vector<8x128xf32>
    %301 = vector.extract_strided_slice %288 {offsets = [0, 256], sizes = [8, 128], strides = [1, 1]} : vector<8x512xf32> to vector<8x128xf32>
    %302 = math.tanh %301 : vector<8x128xf32>
    %303 = vector.extract_strided_slice %288 {offsets = [0, 384], sizes = [8, 128], strides = [1, 1]} : vector<8x512xf32> to vector<8x128xf32>
    %304 = arith.negf %303 : vector<8x128xf32>
    %305 = math.exp %304 : vector<8x128xf32>
    %cst_50 = arith.constant 1.000000e+00 : f32
    %306 = vector.broadcast %cst_50 : f32 to vector<8x128xf32>
    %307 = arith.addf %306, %305 : vector<8x128xf32>
    %308 = arith.divf %306, %307 : vector<8x128xf32>
    %309 = arith.mulf %300, %283 : vector<8x128xf32>
    %310 = arith.mulf %294, %302 : vector<8x128xf32>
    %311 = arith.addf %309, %310 : vector<8x128xf32>
    %312 = math.tanh %311 : vector<8x128xf32>
    %313 = arith.mulf %308, %312 : vector<8x128xf32>
    %314 = vector.extract_strided_slice %5 {offsets = [88, 0], sizes = [8, 512], strides = [1, 1]} : vector<128x512xf32> to vector<8x512xf32>
    %cst_51 = arith.constant dense<0.000000e+00> : vector<8x512xf32>
    %315 = tpu.matmul %313, %6, %cst_51 {dimension_numbers = #tpu.dot_dimension_numbers<[1], [0], [0], [1], [0, 0, 1, 1], [], []>} : vector<8x128xf32>, vector<128x512xf32>, vector<8x512xf32> -> vector<8x512xf32>
    %316 = arith.addf %314, %315 : vector<8x512xf32>
    %317 = vector.extract_strided_slice %316 {offsets = [0, 0], sizes = [8, 128], strides = [1, 1]} : vector<8x512xf32> to vector<8x128xf32>
    %318 = arith.negf %317 : vector<8x128xf32>
    %319 = math.exp %318 : vector<8x128xf32>
    %cst_52 = arith.constant 1.000000e+00 : f32
    %320 = vector.broadcast %cst_52 : f32 to vector<8x128xf32>
    %321 = arith.addf %320, %319 : vector<8x128xf32>
    %322 = arith.divf %320, %321 : vector<8x128xf32>
    %323 = vector.extract_strided_slice %316 {offsets = [0, 128], sizes = [8, 128], strides = [1, 1]} : vector<8x512xf32> to vector<8x128xf32>
    %324 = arith.negf %323 : vector<8x128xf32>
    %325 = math.exp %324 : vector<8x128xf32>
    %cst_53 = arith.constant 1.000000e+00 : f32
    %326 = vector.broadcast %cst_53 : f32 to vector<8x128xf32>
    %327 = arith.addf %326, %325 : vector<8x128xf32>
    %328 = arith.divf %326, %327 : vector<8x128xf32>
    %329 = vector.extract_strided_slice %316 {offsets = [0, 256], sizes = [8, 128], strides = [1, 1]} : vector<8x512xf32> to vector<8x128xf32>
    %330 = math.tanh %329 : vector<8x128xf32>
    %331 = vector.extract_strided_slice %316 {offsets = [0, 384], sizes = [8, 128], strides = [1, 1]} : vector<8x512xf32> to vector<8x128xf32>
    %332 = arith.negf %331 : vector<8x128xf32>
    %333 = math.exp %332 : vector<8x128xf32>
    %cst_54 = arith.constant 1.000000e+00 : f32
    %334 = vector.broadcast %cst_54 : f32 to vector<8x128xf32>
    %335 = arith.addf %334, %333 : vector<8x128xf32>
    %336 = arith.divf %334, %335 : vector<8x128xf32>
    %337 = arith.mulf %328, %311 : vector<8x128xf32>
    %338 = arith.mulf %322, %330 : vector<8x128xf32>
    %339 = arith.addf %337, %338 : vector<8x128xf32>
    %340 = math.tanh %339 : vector<8x128xf32>
    %341 = arith.mulf %336, %340 : vector<8x128xf32>
    %342 = vector.extract_strided_slice %5 {offsets = [96, 0], sizes = [8, 512], strides = [1, 1]} : vector<128x512xf32> to vector<8x512xf32>
    %cst_55 = arith.constant dense<0.000000e+00> : vector<8x512xf32>
    %343 = tpu.matmul %341, %6, %cst_55 {dimension_numbers = #tpu.dot_dimension_numbers<[1], [0], [0], [1], [0, 0, 1, 1], [], []>} : vector<8x128xf32>, vector<128x512xf32>, vector<8x512xf32> -> vector<8x512xf32>
    %344 = arith.addf %342, %343 : vector<8x512xf32>
    %345 = vector.extract_strided_slice %344 {offsets = [0, 0], sizes = [8, 128], strides = [1, 1]} : vector<8x512xf32> to vector<8x128xf32>
    %346 = arith.negf %345 : vector<8x128xf32>
    %347 = math.exp %346 : vector<8x128xf32>
    %cst_56 = arith.constant 1.000000e+00 : f32
    %348 = vector.broadcast %cst_56 : f32 to vector<8x128xf32>
    %349 = arith.addf %348, %347 : vector<8x128xf32>
    %350 = arith.divf %348, %349 : vector<8x128xf32>
    %351 = vector.extract_strided_slice %344 {offsets = [0, 128], sizes = [8, 128], strides = [1, 1]} : vector<8x512xf32> to vector<8x128xf32>
    %352 = arith.negf %351 : vector<8x128xf32>
    %353 = math.exp %352 : vector<8x128xf32>
    %cst_57 = arith.constant 1.000000e+00 : f32
    %354 = vector.broadcast %cst_57 : f32 to vector<8x128xf32>
    %355 = arith.addf %354, %353 : vector<8x128xf32>
    %356 = arith.divf %354, %355 : vector<8x128xf32>
    %357 = vector.extract_strided_slice %344 {offsets = [0, 256], sizes = [8, 128], strides = [1, 1]} : vector<8x512xf32> to vector<8x128xf32>
    %358 = math.tanh %357 : vector<8x128xf32>
    %359 = vector.extract_strided_slice %344 {offsets = [0, 384], sizes = [8, 128], strides = [1, 1]} : vector<8x512xf32> to vector<8x128xf32>
    %360 = arith.negf %359 : vector<8x128xf32>
    %361 = math.exp %360 : vector<8x128xf32>
    %cst_58 = arith.constant 1.000000e+00 : f32
    %362 = vector.broadcast %cst_58 : f32 to vector<8x128xf32>
    %363 = arith.addf %362, %361 : vector<8x128xf32>
    %364 = arith.divf %362, %363 : vector<8x128xf32>
    %365 = arith.mulf %356, %339 : vector<8x128xf32>
    %366 = arith.mulf %350, %358 : vector<8x128xf32>
    %367 = arith.addf %365, %366 : vector<8x128xf32>
    %368 = math.tanh %367 : vector<8x128xf32>
    %369 = arith.mulf %364, %368 : vector<8x128xf32>
    %370 = vector.extract_strided_slice %5 {offsets = [104, 0], sizes = [8, 512], strides = [1, 1]} : vector<128x512xf32> to vector<8x512xf32>
    %cst_59 = arith.constant dense<0.000000e+00> : vector<8x512xf32>
    %371 = tpu.matmul %369, %6, %cst_59 {dimension_numbers = #tpu.dot_dimension_numbers<[1], [0], [0], [1], [0, 0, 1, 1], [], []>} : vector<8x128xf32>, vector<128x512xf32>, vector<8x512xf32> -> vector<8x512xf32>
    %372 = arith.addf %370, %371 : vector<8x512xf32>
    %373 = vector.extract_strided_slice %372 {offsets = [0, 0], sizes = [8, 128], strides = [1, 1]} : vector<8x512xf32> to vector<8x128xf32>
    %374 = arith.negf %373 : vector<8x128xf32>
    %375 = math.exp %374 : vector<8x128xf32>
    %cst_60 = arith.constant 1.000000e+00 : f32
    %376 = vector.broadcast %cst_60 : f32 to vector<8x128xf32>
    %377 = arith.addf %376, %375 : vector<8x128xf32>
    %378 = arith.divf %376, %377 : vector<8x128xf32>
    %379 = vector.extract_strided_slice %372 {offsets = [0, 128], sizes = [8, 128], strides = [1, 1]} : vector<8x512xf32> to vector<8x128xf32>
    %380 = arith.negf %379 : vector<8x128xf32>
    %381 = math.exp %380 : vector<8x128xf32>
    %cst_61 = arith.constant 1.000000e+00 : f32
    %382 = vector.broadcast %cst_61 : f32 to vector<8x128xf32>
    %383 = arith.addf %382, %381 : vector<8x128xf32>
    %384 = arith.divf %382, %383 : vector<8x128xf32>
    %385 = vector.extract_strided_slice %372 {offsets = [0, 256], sizes = [8, 128], strides = [1, 1]} : vector<8x512xf32> to vector<8x128xf32>
    %386 = math.tanh %385 : vector<8x128xf32>
    %387 = vector.extract_strided_slice %372 {offsets = [0, 384], sizes = [8, 128], strides = [1, 1]} : vector<8x512xf32> to vector<8x128xf32>
    %388 = arith.negf %387 : vector<8x128xf32>
    %389 = math.exp %388 : vector<8x128xf32>
    %cst_62 = arith.constant 1.000000e+00 : f32
    %390 = vector.broadcast %cst_62 : f32 to vector<8x128xf32>
    %391 = arith.addf %390, %389 : vector<8x128xf32>
    %392 = arith.divf %390, %391 : vector<8x128xf32>
    %393 = arith.mulf %384, %367 : vector<8x128xf32>
    %394 = arith.mulf %378, %386 : vector<8x128xf32>
    %395 = arith.addf %393, %394 : vector<8x128xf32>
    %396 = math.tanh %395 : vector<8x128xf32>
    %397 = arith.mulf %392, %396 : vector<8x128xf32>
    %398 = vector.extract_strided_slice %5 {offsets = [112, 0], sizes = [8, 512], strides = [1, 1]} : vector<128x512xf32> to vector<8x512xf32>
    %cst_63 = arith.constant dense<0.000000e+00> : vector<8x512xf32>
    %399 = tpu.matmul %397, %6, %cst_63 {dimension_numbers = #tpu.dot_dimension_numbers<[1], [0], [0], [1], [0, 0, 1, 1], [], []>} : vector<8x128xf32>, vector<128x512xf32>, vector<8x512xf32> -> vector<8x512xf32>
    %400 = arith.addf %398, %399 : vector<8x512xf32>
    %401 = vector.extract_strided_slice %400 {offsets = [0, 0], sizes = [8, 128], strides = [1, 1]} : vector<8x512xf32> to vector<8x128xf32>
    %402 = arith.negf %401 : vector<8x128xf32>
    %403 = math.exp %402 : vector<8x128xf32>
    %cst_64 = arith.constant 1.000000e+00 : f32
    %404 = vector.broadcast %cst_64 : f32 to vector<8x128xf32>
    %405 = arith.addf %404, %403 : vector<8x128xf32>
    %406 = arith.divf %404, %405 : vector<8x128xf32>
    %407 = vector.extract_strided_slice %400 {offsets = [0, 128], sizes = [8, 128], strides = [1, 1]} : vector<8x512xf32> to vector<8x128xf32>
    %408 = arith.negf %407 : vector<8x128xf32>
    %409 = math.exp %408 : vector<8x128xf32>
    %cst_65 = arith.constant 1.000000e+00 : f32
    %410 = vector.broadcast %cst_65 : f32 to vector<8x128xf32>
    %411 = arith.addf %410, %409 : vector<8x128xf32>
    %412 = arith.divf %410, %411 : vector<8x128xf32>
    %413 = vector.extract_strided_slice %400 {offsets = [0, 256], sizes = [8, 128], strides = [1, 1]} : vector<8x512xf32> to vector<8x128xf32>
    %414 = math.tanh %413 : vector<8x128xf32>
    %415 = vector.extract_strided_slice %400 {offsets = [0, 384], sizes = [8, 128], strides = [1, 1]} : vector<8x512xf32> to vector<8x128xf32>
    %416 = arith.negf %415 : vector<8x128xf32>
    %417 = math.exp %416 : vector<8x128xf32>
    %cst_66 = arith.constant 1.000000e+00 : f32
    %418 = vector.broadcast %cst_66 : f32 to vector<8x128xf32>
    %419 = arith.addf %418, %417 : vector<8x128xf32>
    %420 = arith.divf %418, %419 : vector<8x128xf32>
    %421 = arith.mulf %412, %395 : vector<8x128xf32>
    %422 = arith.mulf %406, %414 : vector<8x128xf32>
    %423 = arith.addf %421, %422 : vector<8x128xf32>
    %424 = math.tanh %423 : vector<8x128xf32>
    %425 = arith.mulf %420, %424 : vector<8x128xf32>
    %426 = vector.extract_strided_slice %5 {offsets = [120, 0], sizes = [8, 512], strides = [1, 1]} : vector<128x512xf32> to vector<8x512xf32>
    %cst_67 = arith.constant dense<0.000000e+00> : vector<8x512xf32>
    %427 = tpu.matmul %425, %6, %cst_67 {dimension_numbers = #tpu.dot_dimension_numbers<[1], [0], [0], [1], [0, 0, 1, 1], [], []>} : vector<8x128xf32>, vector<128x512xf32>, vector<8x512xf32> -> vector<8x512xf32>
    %428 = arith.addf %426, %427 : vector<8x512xf32>
    %429 = vector.extract_strided_slice %428 {offsets = [0, 0], sizes = [8, 128], strides = [1, 1]} : vector<8x512xf32> to vector<8x128xf32>
    %430 = arith.negf %429 : vector<8x128xf32>
    %431 = math.exp %430 : vector<8x128xf32>
    %cst_68 = arith.constant 1.000000e+00 : f32
    %432 = vector.broadcast %cst_68 : f32 to vector<8x128xf32>
    %433 = arith.addf %432, %431 : vector<8x128xf32>
    %434 = arith.divf %432, %433 : vector<8x128xf32>
    %435 = vector.extract_strided_slice %428 {offsets = [0, 128], sizes = [8, 128], strides = [1, 1]} : vector<8x512xf32> to vector<8x128xf32>
    %436 = arith.negf %435 : vector<8x128xf32>
    %437 = math.exp %436 : vector<8x128xf32>
    %cst_69 = arith.constant 1.000000e+00 : f32
    %438 = vector.broadcast %cst_69 : f32 to vector<8x128xf32>
    %439 = arith.addf %438, %437 : vector<8x128xf32>
    %440 = arith.divf %438, %439 : vector<8x128xf32>
    %441 = vector.extract_strided_slice %428 {offsets = [0, 256], sizes = [8, 128], strides = [1, 1]} : vector<8x512xf32> to vector<8x128xf32>
    %442 = math.tanh %441 : vector<8x128xf32>
    %443 = vector.extract_strided_slice %428 {offsets = [0, 384], sizes = [8, 128], strides = [1, 1]} : vector<8x512xf32> to vector<8x128xf32>
    %444 = arith.negf %443 : vector<8x128xf32>
    %445 = math.exp %444 : vector<8x128xf32>
    %cst_70 = arith.constant 1.000000e+00 : f32
    %446 = vector.broadcast %cst_70 : f32 to vector<8x128xf32>
    %447 = arith.addf %446, %445 : vector<8x128xf32>
    %448 = arith.divf %446, %447 : vector<8x128xf32>
    %449 = arith.mulf %440, %423 : vector<8x128xf32>
    %450 = arith.mulf %434, %442 : vector<8x128xf32>
    %451 = arith.addf %449, %450 : vector<8x128xf32>
    %452 = math.tanh %451 : vector<8x128xf32>
    %453 = arith.mulf %448, %452 : vector<8x128xf32>
    %c120 = arith.constant 120 : index
    %c0_71 = arith.constant 0 : index
    %454 = vector.load %arg0[%c120, %c0_71] : memref<128x64xf32, #tpu.memory_space<vmem>>, vector<8x64xf32>
    %c0_72 = arith.constant 0 : index
    %c0_73 = arith.constant 0 : index
    %455 = vector.load %arg3[%c0_72, %c0_73] : memref<64x512xf32, #tpu.memory_space<vmem>>, vector<64x512xf32>
    %cst_74 = arith.constant dense<0.000000e+00> : vector<8x512xf32>
    %456 = tpu.matmul %454, %455, %cst_74 {dimension_numbers = #tpu.dot_dimension_numbers<[1], [0], [0], [1], [0, 0, 1, 1], [], []>} : vector<8x64xf32>, vector<64x512xf32>, vector<8x512xf32> -> vector<8x512xf32>
    %c0_75 = arith.constant 0 : index
    %c0_76 = arith.constant 0 : index
    %457 = vector.load %arg4[%c0_75, %c0_76] : memref<1x512xf32, #tpu.memory_space<vmem>>, vector<1x512xf32>
    %458 = vector.broadcast %457 : vector<1x512xf32> to vector<8x512xf32>
    %459 = arith.addf %456, %458 : vector<8x512xf32>
    %cst_77 = arith.constant 0.000000e+00 : f32
    %460 = vector.broadcast %cst_77 : f32 to vector<8x128xf32>
    %461 = vector.extract_strided_slice %459 {offsets = [0, 0], sizes = [8, 128], strides = [1, 1]} : vector<8x512xf32> to vector<8x128xf32>
    %462 = arith.negf %461 : vector<8x128xf32>
    %463 = math.exp %462 : vector<8x128xf32>
    %cst_78 = arith.constant 1.000000e+00 : f32
    %464 = vector.broadcast %cst_78 : f32 to vector<8x128xf32>
    %465 = arith.addf %464, %463 : vector<8x128xf32>
    %466 = arith.divf %464, %465 : vector<8x128xf32>
    %467 = vector.extract_strided_slice %459 {offsets = [0, 128], sizes = [8, 128], strides = [1, 1]} : vector<8x512xf32> to vector<8x128xf32>
    %468 = arith.negf %467 : vector<8x128xf32>
    %469 = math.exp %468 : vector<8x128xf32>
    %cst_79 = arith.constant 1.000000e+00 : f32
    %470 = vector.broadcast %cst_79 : f32 to vector<8x128xf32>
    %471 = arith.addf %470, %469 : vector<8x128xf32>
    %472 = arith.divf %470, %471 : vector<8x128xf32>
    %473 = vector.extract_strided_slice %459 {offsets = [0, 256], sizes = [8, 128], strides = [1, 1]} : vector<8x512xf32> to vector<8x128xf32>
    %474 = math.tanh %473 : vector<8x128xf32>
    %475 = vector.extract_strided_slice %459 {offsets = [0, 384], sizes = [8, 128], strides = [1, 1]} : vector<8x512xf32> to vector<8x128xf32>
    %476 = arith.negf %475 : vector<8x128xf32>
    %477 = math.exp %476 : vector<8x128xf32>
    %cst_80 = arith.constant 1.000000e+00 : f32
    %478 = vector.broadcast %cst_80 : f32 to vector<8x128xf32>
    %479 = arith.addf %478, %477 : vector<8x128xf32>
    %480 = arith.divf %478, %479 : vector<8x128xf32>
    %481 = arith.mulf %472, %460 : vector<8x128xf32>
    %482 = arith.mulf %466, %474 : vector<8x128xf32>
    %483 = arith.addf %481, %482 : vector<8x128xf32>
    %484 = math.tanh %483 : vector<8x128xf32>
    %485 = arith.mulf %480, %484 : vector<8x128xf32>
    %486 = tpu.concatenate %453, %485 in 1 : vector<8x128xf32>, vector<8x128xf32> -> vector<8x256xf32>
    %c0_81 = arith.constant 0 : index
    %c0_82 = arith.constant 0 : index
    %487 = vector.load %arg6[%c0_81, %c0_82] : memref<256x128xf32, #tpu.memory_space<vmem>>, vector<256x128xf32>
    %cst_83 = arith.constant dense<0.000000e+00> : vector<8x128xf32>
    %488 = tpu.matmul %486, %487, %cst_83 {dimension_numbers = #tpu.dot_dimension_numbers<[1], [0], [0], [1], [0, 0, 1, 1], [], []>} : vector<8x256xf32>, vector<256x128xf32>, vector<8x128xf32> -> vector<8x128xf32>
    %c0_84 = arith.constant 0 : index
    %c0_85 = arith.constant 0 : index
    %489 = vector.load %arg7[%c0_84, %c0_85] : memref<1x128xf32, #tpu.memory_space<vmem>>, vector<1x128xf32>
    %490 = vector.broadcast %489 : vector<1x128xf32> to vector<8x128xf32>
    %491 = arith.addf %488, %490 : vector<8x128xf32>
    %c0_86 = arith.constant 0 : index
    %c0_87 = arith.constant 0 : index
    %492 = vector.load %arg8[%c0_86, %c0_87] : memref<8x128xf32, #tpu.memory_space<vmem>>, vector<8x128xf32>
    tpu.vector_store %arg8[%c0_86, %c0_87], %491 {strides = array<i32>} : memref<8x128xf32, #tpu.memory_space<vmem>>, vector<8x128xf32>,
    return
  }
}

</mosaic_0001>

<llo_original>
// kernel: lstm_bi_forward.1
$region0: #{lstm_bi_forward.1}
  #allocation0 [shape = 'u32[]', space=smem, size = 0x4, offset = 0x4, fixed_abs, tag = 'smem constant byte address 0x4 - core index']
  #allocation1 [shape = 'u32[72,128]{1,0:T(1,128)}', space=vmem, size = 0x9000, scoped, tag = 'internal scratch']
  %s0 = inlined_call_operand.vmem [shape: f32[128,64], index: 0, kind: input, shape index: {}]
  %s1 = inlined_call_operand.vmem [shape: f32[64,512], index: 1, kind: input, shape index: {}]
  %s2 = inlined_call_operand.vmem [shape: f32[1,512], index: 2, kind: input, shape index: {}]
  %s3 = inlined_call_operand.hbm [shape: f32[64,512], index: 3, kind: input, shape index: {}]
  %s4 = inlined_call_operand.vmem [shape: f32[1,512], index: 4, kind: input, shape index: {}]
  %s5 = inlined_call_operand.hbm [shape: f32[128,512], index: 5, kind: input, shape index: {}]
  %s6 = inlined_call_operand.hbm [shape: f32[256,128], index: 6, kind: input, shape index: {}]
  %s7 = inlined_call_operand.vmem [shape: f32[1,128], index: 7, kind: input, shape index: {}]
  %s8 = inlined_call_operand.vmem [shape: f32[8,128], index: 8, kind: output, shape index: {}]
  %s9 = sld [smem:[#allocation0]]
  $region54: #{lstm_bi_forward.1} parent=0
    _
  %s11 = ssub.s32 1, %s9
  %s12 = scalar_select 0, %s11, %s9
  $region1: #{lstm_bi_forward.1} parent=0
    #allocation2 [shape = 'u8[131072]{0}', space=vmem, size = 0x20000, scoped, tag = 'input window, operand 3, single buffered']
    #allocation3 [shape = 's32[1]{0}', space=sflag, size = 0x4, scoped, tag = 'scoped memory for lstm_bi_forward.1']
    #allocation4 [shape = 'u8[262144]{0}', space=vmem, size = 0x40000, scoped, tag = 'input window, operand 5, single buffered']
    #allocation5 [shape = 's32[1]{0}', space=sflag, size = 0x4, scoped, tag = 'scoped memory for lstm_bi_forward.1']
    #allocation6 [shape = 'u8[131072]{0}', space=vmem, size = 0x20000, scoped, tag = 'input window, operand 6, single buffered']
    %13 = vsyncpa [#allocation3], 0
    %14 = vsyncpa [#allocation5], 0
    // Predicated region
    $region2: #{lstm_bi_forward.1} parent=1 // pred_check
      _
    $region3: #{lstm_bi_forward.1} parent=1 // pred_check_branch
      %16 = sbr.rel (0) target = $region5
    $region4: #{lstm_bi_forward.1} parent=1 // pred_region
      _
    $region5: #{lstm_bi_forward.1} parent=1 // pred_fallthru
      _
    // Predicated region
    $region6: #{lstm_bi_forward.1} parent=1 // pred_check
      _
    $region7: #{lstm_bi_forward.1} parent=1 // pred_check_branch
      %18 = sbr.rel (0) target = $region9
    $region8: #{lstm_bi_forward.1} parent=1 // pred_region
      _
    $region9: #{lstm_bi_forward.1} parent=1 // pred_fallthru
      _
    // Predicated region
    $region10: #{lstm_bi_forward.1} parent=1 // pred_check
      _
    $region11: #{lstm_bi_forward.1} parent=1 // pred_check_branch
      %20 = sbr.rel (0) target = $region13
    $region12: #{lstm_bi_forward.1} parent=1 // pred_region
      _
    $region13: #{lstm_bi_forward.1} parent=1 // pred_fallthru
      _
    // Predicated region
    $region14: #{lstm_bi_forward.1} parent=1 // pred_check
      _
    $region15: #{lstm_bi_forward.1} parent=1 // pred_check_branch
      %22 = sbr.rel (0) target = $region17
    $region16: #{lstm_bi_forward.1} parent=1 // pred_region
      %24 = vsyncadd [#allocation3], 0
      %s25 = sshll.u32 %s3, 4
      %s26 = int_to_ptr.hbm [resolvable:$true] %s25
      %s27 = sshll.u32 [#allocation2], 4
      %s28 = int_to_ptr.vmem [resolvable:$true] %s27
      %33 = dma.hbm_to_vmem [thread:$0]  %s26, 4096, %s28, [#allocation3], 512, 512, 32
    $region17: #{lstm_bi_forward.1} parent=1 // pred_fallthru
      _
    // Predicated region
    $region18: #{lstm_bi_forward.1} parent=1 // pred_check
      _
    $region19: #{lstm_bi_forward.1} parent=1 // pred_check_branch
      %35 = sbr.rel (0) target = $region21
    $region20: #{lstm_bi_forward.1} parent=1 // pred_region
      _
    $region21: #{lstm_bi_forward.1} parent=1 // pred_fallthru
      _
    // Predicated region
    $region22: #{lstm_bi_forward.1} parent=1 // pred_check
      _
    $region23: #{lstm_bi_forward.1} parent=1 // pred_check_branch
      %37 = sbr.rel (0) target = $region25
    $region24: #{lstm_bi_forward.1} parent=1 // pred_region
      %39 = vsyncadd [#allocation5], 0
      %s40 = sshll.u32 %s5, 4
      %s41 = int_to_ptr.hbm [resolvable:$true] %s40
      %s42 = sshll.u32 [#allocation4], 4
      %s43 = int_to_ptr.vmem [resolvable:$true] %s42
      %48 = dma.hbm_to_vmem [thread:$0]  %s41, 8192, %s43, [#allocation5], 512, 512, 32
    $region25: #{lstm_bi_forward.1} parent=1 // pred_fallthru
      _
    // Predicated region
    $region26: #{lstm_bi_forward.1} parent=1 // pred_check
      _
    $region27: #{lstm_bi_forward.1} parent=1 // pred_check_branch
      %50 = sbr.rel (0) target = $region29
    $region28: #{lstm_bi_forward.1} parent=1 // pred_region
      %52 = vsyncadd [#allocation5], 0
      %s53 = sshll.u32 %s6, 4
      %s54 = int_to_ptr.hbm [resolvable:$true] %s53
      %s55 = sshll.u32 [#allocation6], 4
      %s56 = int_to_ptr.vmem [resolvable:$true] %s55
      %61 = dma.hbm_to_vmem [thread:$0]  %s54, 4096, %s56, [#allocation5], 128, 128, 8
    $region29: #{lstm_bi_forward.1} parent=1 // pred_fallthru
      _
    // Predicated region
    $region30: #{lstm_bi_forward.1} parent=1 // pred_check
      _
    $region31: #{lstm_bi_forward.1} parent=1 // pred_check_branch
      %63 = sbr.rel (0) target = $region33
    $region32: #{lstm_bi_forward.1} parent=1 // pred_region
      _
    $region33: #{lstm_bi_forward.1} parent=1 // pred_fallthru
      _
    // Predicated region
    $region34: #{lstm_bi_forward.1} parent=1 // pred_check
      _
    $region35: #{lstm_bi_forward.1} parent=1 // pred_check_branch
      %65 = sbr.rel (0) target = $region37
    $region36: #{lstm_bi_forward.1} parent=1 // pred_region
      %67 = dma.done [#allocation3], 4096
    $region37: #{lstm_bi_forward.1} parent=1 // pred_fallthru
      _
    // Predicated region
    $region38: #{lstm_bi_forward.1} parent=1 // pred_check
      _
    $region39: #{lstm_bi_forward.1} parent=1 // pred_check_branch
      %69 = sbr.rel (0) target = $region41
    $region40: #{lstm_bi_forward.1} parent=1 // pred_region
      %71 = dma.done [#allocation5], 8192
    $region41: #{lstm_bi_forward.1} parent=1 // pred_fallthru
      _
    // Predicated region
    $region42: #{lstm_bi_forward.1} parent=1 // pred_check
      _
    $region43: #{lstm_bi_forward.1} parent=1 // pred_check_branch
      %73 = sbr.rel (0) target = $region45
    $region44: #{lstm_bi_forward.1} parent=1 // pred_region
      %75 = dma.done [#allocation5], 4096
    $region45: #{lstm_bi_forward.1} parent=1 // pred_fallthru
      _
    %v76 = vld [vmem:[%s0] sm:$0xff]
    %v77 = vld [vmem:[%s0 + $0x8] sm:$0xff]
    %v78 = vld [vmem:[%s0 + $0x10] sm:$0xff]
    %v79 = vld [vmem:[%s0 + $0x18] sm:$0xff]
    %v80 = vld [vmem:[%s0 + $0x20] sm:$0xff]
    %v81 = vld [vmem:[%s0 + $0x28] sm:$0xff]
    %v82 = vld [vmem:[%s0 + $0x30] sm:$0xff]
    %v83 = vld [vmem:[%s0 + $0x38] sm:$0xff]
    %v84 = vld [vmem:[%s0 + $0x40] sm:$0xff]
    %v85 = vld [vmem:[%s0 + $0x48] sm:$0xff]
    %v86 = vld [vmem:[%s0 + $0x50] sm:$0xff]
    %v87 = vld [vmem:[%s0 + $0x58] sm:$0xff]
    %v88 = vld [vmem:[%s0 + $0x60] sm:$0xff]
    %v89 = vld [vmem:[%s0 + $0x68] sm:$0xff]
    %v90 = vld [vmem:[%s0 + $0x70] sm:$0xff]
    %v91 = vld [vmem:[%s0 + $0x78] sm:$0xff]
    %v92 = vld [vmem:[%s1] sm:$0xff]
    %v93 = vld [vmem:[%s1 + $0x8] sm:$0xff]
    %v94 = vld [vmem:[%s1 + $0x10] sm:$0xff]
    %v95 = vld [vmem:[%s1 + $0x18] sm:$0xff]
    %v96 = vld [vmem:[%s1 + $0x20] sm:$0xff]
    %v97 = vld [vmem:[%s1 + $0x28] sm:$0xff]
    %v98 = vld [vmem:[%s1 + $0x30] sm:$0xff]
    %v99 = vld [vmem:[%s1 + $0x38] sm:$0xff]
    %v100 = vld [vmem:[%s1 + $0x40] sm:$0xff]
    %v101 = vld [vmem:[%s1 + $0x48] sm:$0xff]
    %v102 = vld [vmem:[%s1 + $0x50] sm:$0xff]
    %v103 = vld [vmem:[%s1 + $0x58] sm:$0xff]
    %v104 = vld [vmem:[%s1 + $0x60] sm:$0xff]
    %v105 = vld [vmem:[%s1 + $0x68] sm:$0xff]
    %v106 = vld [vmem:[%s1 + $0x70] sm:$0xff]
    %v107 = vld [vmem:[%s1 + $0x78] sm:$0xff]
    %v108 = vld [vmem:[%s1 + $0x80] sm:$0xff]
    %v109 = vld [vmem:[%s1 + $0x88] sm:$0xff]
    %v110 = vld [vmem:[%s1 + $0x90] sm:$0xff]
    %v111 = vld [vmem:[%s1 + $0x98] sm:$0xff]
    %v112 = vld [vmem:[%s1 + $0xa0] sm:$0xff]
    %v113 = vld [vmem:[%s1 + $0xa8] sm:$0xff]
    %v114 = vld [vmem:[%s1 + $0xb0] sm:$0xff]
    %v115 = vld [vmem:[%s1 + $0xb8] sm:$0xff]
    %v116 = vld [vmem:[%s1 + $0xc0] sm:$0xff]
    %v117 = vld [vmem:[%s1 + $0xc8] sm:$0xff]
    %v118 = vld [vmem:[%s1 + $0xd0] sm:$0xff]
    %v119 = vld [vmem:[%s1 + $0xd8] sm:$0xff]
    %v120 = vld [vmem:[%s1 + $0xe0] sm:$0xff]
    %v121 = vld [vmem:[%s1 + $0xe8] sm:$0xff]
    %v122 = vld [vmem:[%s1 + $0xf0] sm:$0xff]
    %v123 = vld [vmem:[%s1 + $0xf8] sm:$0xff]
    %v124 = vld [vmem:[%s2] sm:$0xf]
    %v126 = vperm.slane %v124, 0
    %v127 = vperm.slane %v124, 1
    %v128 = vperm.slane %v124, 2
    %v129 = vperm.slane %v124, 3
    %vm134 = vcmask 523264
    %v136 = vsel %vm134, %v76, 0
    %v139 = vsel %vm134, %v77, 0
    %v142 = vsel %vm134, %v78, 0
    %v145 = vsel %vm134, %v79, 0
    %v148 = vsel %vm134, %v80, 0
    %v151 = vsel %vm134, %v81, 0
    %v154 = vsel %vm134, %v82, 0
    %v157 = vsel %vm134, %v83, 0
    %v160 = vsel %vm134, %v84, 0
    %v163 = vsel %vm134, %v85, 0
    %v166 = vsel %vm134, %v86, 0
    %v169 = vsel %vm134, %v87, 0
    %v172 = vsel %vm134, %v88, 0
    %v175 = vsel %vm134, %v89, 0
    %v178 = vsel %vm134, %v90, 0
    %v181 = vsel %vm134, %v91, 0
    %183 = vmatpush.msra.mxu0 0.0
    %184 = vmatpush.msra.mxu0 0.0
    %185 = vmatpush.msra.mxu0 0.0
    %186 = vmatpush.msra.mxu0 0.0
    %187 = vmatpush.msra.mxu0 0.0
    %188 = vmatpush.msra.mxu0 0.0
    %189 = vmatpush.msra.mxu0 0.0
    %190 = vmatpush.msra.mxu0 0.0
    %191 = vmatpush.msra.mxu0 %v120
    %192 = vmatpush.msra.mxu0 %v116
    %193 = vmatpush.msra.mxu0 %v112
    %194 = vmatpush.msra.mxu0 %v108
    %195 = vmatpush.msra.mxu0 %v104
    %196 = vmatpush.msra.mxu0 %v100
    %197 = vmatpush.msra.mxu0 %v96
    %198 = vmatpush.msra.mxu0 %v92
    %199 = vmatmul.f32.gmra.mxu0 %v136
    %v200 = vpop.f32.mrf.mxu0
    %v201 = vadd.f32 %v126, %v200
    %202 = vmatmul.f32.gmra.mxu0 %v139
    %v203 = vpop.f32.mrf.mxu0
    %v204 = vadd.f32 %v126, %v203
    %205 = vmatmul.f32.gmra.mxu0 %v142
    %v206 = vpop.f32.mrf.mxu0
    %v207 = vadd.f32 %v126, %v206
    %208 = vmatmul.f32.gmra.mxu0 %v145
    %v209 = vpop.f32.mrf.mxu0
    %v210 = vadd.f32 %v126, %v209
    %211 = vmatmul.f32.gmra.mxu0 %v148
    %v212 = vpop.f32.mrf.mxu0
    %v213 = vadd.f32 %v126, %v212
    %214 = vmatmul.f32.gmra.mxu0 %v151
    %v215 = vpop.f32.mrf.mxu0
    %v216 = vadd.f32 %v126, %v215
    %217 = vmatmul.f32.gmra.mxu0 %v154
    %v218 = vpop.f32.mrf.mxu0
    %v219 = vadd.f32 %v126, %v218
    %220 = vmatmul.f32.gmra.mxu0 %v157
    %v221 = vpop.f32.mrf.mxu0
    %v222 = vadd.f32 %v126, %v221
    %223 = vmatmul.f32.gmra.mxu0 %v160
    %v224 = vpop.f32.mrf.mxu0
    %v225 = vadd.f32 %v126, %v224
    %226 = vmatmul.f32.gmra.mxu0 %v163
    %v227 = vpop.f32.mrf.mxu0
    %v228 = vadd.f32 %v126, %v227
    %229 = vmatmul.f32.gmra.mxu0 %v166
    %v230 = vpop.f32.mrf.mxu0
    %v231 = vadd.f32 %v126, %v230
    %232 = vmatmul.f32.gmra.mxu0 %v169
    %v233 = vpop.f32.mrf.mxu0
    %v234 = vadd.f32 %v126, %v233
    %235 = vmatmul.f32.gmra.mxu0 %v172
    %v236 = vpop.f32.mrf.mxu0
    %v237 = vadd.f32 %v126, %v236
    %238 = vmatmul.f32.gmra.mxu0 %v175
    %v239 = vpop.f32.mrf.mxu0
    %v240 = vadd.f32 %v126, %v239
    %241 = vmatmul.f32.gmra.mxu0 %v178
    %v242 = vpop.f32.mrf.mxu0
    %v243 = vadd.f32 %v126, %v242
    %244 = vmatmul.f32.gmra.mxu0 %v181
    %v245 = vpop.f32.mrf.mxu0
    %v246 = vadd.f32 %v126, %v245
    %247 = vdwg.mxu0
    %248 = vmatpush.msra.mxu0 0.0
    %249 = vmatpush.msra.mxu0 0.0
    %250 = vmatpush.msra.mxu0 0.0
    %251 = vmatpush.msra.mxu0 0.0
    %252 = vmatpush.msra.mxu0 0.0
    %253 = vmatpush.msra.mxu0 0.0
    %254 = vmatpush.msra.mxu0 0.0
    %255 = vmatpush.msra.mxu0 0.0
    %256 = vmatpush.msra.mxu0 %v121
    %257 = vmatpush.msra.mxu0 %v117
    %258 = vmatpush.msra.mxu0 %v113
    %259 = vmatpush.msra.mxu0 %v109
    %260 = vmatpush.msra.mxu0 %v105
    %261 = vmatpush.msra.mxu0 %v101
    %262 = vmatpush.msra.mxu0 %v97
    %263 = vmatpush.msra.mxu0 %v93
    %264 = vmatmul.f32.gmra.mxu0 %v136
    %v265 = vpop.f32.mrf.mxu0
    %v266 = vadd.f32 %v127, %v265
    %267 = vmatmul.f32.gmra.mxu0 %v139
    %v268 = vpop.f32.mrf.mxu0
    %v269 = vadd.f32 %v127, %v268
    %270 = vmatmul.f32.gmra.mxu0 %v142
    %v271 = vpop.f32.mrf.mxu0
    %v272 = vadd.f32 %v127, %v271
    %273 = vmatmul.f32.gmra.mxu0 %v145
    %v274 = vpop.f32.mrf.mxu0
    %v275 = vadd.f32 %v127, %v274
    %276 = vmatmul.f32.gmra.mxu0 %v148
    %v277 = vpop.f32.mrf.mxu0
    %v278 = vadd.f32 %v127, %v277
    %279 = vmatmul.f32.gmra.mxu0 %v151
    %v280 = vpop.f32.mrf.mxu0
    %v281 = vadd.f32 %v127, %v280
    %282 = vmatmul.f32.gmra.mxu0 %v154
    %v283 = vpop.f32.mrf.mxu0
    %v284 = vadd.f32 %v127, %v283
    %285 = vmatmul.f32.gmra.mxu0 %v157
    %v286 = vpop.f32.mrf.mxu0
    %v287 = vadd.f32 %v127, %v286
    %288 = vmatmul.f32.gmra.mxu0 %v160
    %v289 = vpop.f32.mrf.mxu0
    %v290 = vadd.f32 %v127, %v289
    %291 = vmatmul.f32.gmra.mxu0 %v163
    %v292 = vpop.f32.mrf.mxu0
    %v293 = vadd.f32 %v127, %v292
    %294 = vmatmul.f32.gmra.mxu0 %v166
    %v295 = vpop.f32.mrf.mxu0
    %v296 = vadd.f32 %v127, %v295
    %297 = vmatmul.f32.gmra.mxu0 %v169
    %v298 = vpop.f32.mrf.mxu0
    %v299 = vadd.f32 %v127, %v298
    %300 = vmatmul.f32.gmra.mxu0 %v172
    %v301 = vpop.f32.mrf.mxu0
    %v302 = vadd.f32 %v127, %v301
    %303 = vmatmul.f32.gmra.mxu0 %v175
    %v304 = vpop.f32.mrf.mxu0
    %v305 = vadd.f32 %v127, %v304
    %306 = vmatmul.f32.gmra.mxu0 %v178
    %v307 = vpop.f32.mrf.mxu0
    %v308 = vadd.f32 %v127, %v307
    %309 = vmatmul.f32.gmra.mxu0 %v181
    %v310 = vpop.f32.mrf.mxu0
    %v311 = vadd.f32 %v127, %v310
    %312 = vdwg.mxu0
    %313 = vmatpush.msra.mxu0 0.0
    %314 = vmatpush.msra.mxu0 0.0
    %315 = vmatpush.msra.mxu0 0.0
    %316 = vmatpush.msra.mxu0 0.0
    %317 = vmatpush.msra.mxu0 0.0
    %318 = vmatpush.msra.mxu0 0.0
    %319 = vmatpush.msra.mxu0 0.0
    %320 = vmatpush.msra.mxu0 0.0
    %321 = vmatpush.msra.mxu0 %v122
    %322 = vmatpush.msra.mxu0 %v118
    %323 = vmatpush.msra.mxu0 %v114
    %324 = vmatpush.msra.mxu0 %v110
    %325 = vmatpush.msra.mxu0 %v106
    %326 = vmatpush.msra.mxu0 %v102
    %327 = vmatpush.msra.mxu0 %v98
    %328 = vmatpush.msra.mxu0 %v94
    %329 = vmatmul.f32.gmra.mxu0 %v136
    %v330 = vpop.f32.mrf.mxu0
    %v331 = vadd.f32 %v128, %v330
    %332 = vmatmul.f32.gmra.mxu0 %v139
    %v333 = vpop.f32.mrf.mxu0
    %v334 = vadd.f32 %v128, %v333
    %335 = vmatmul.f32.gmra.mxu0 %v142
    %v336 = vpop.f32.mrf.mxu0
    %v337 = vadd.f32 %v128, %v336
    %338 = vmatmul.f32.gmra.mxu0 %v145
    %v339 = vpop.f32.mrf.mxu0
    %v340 = vadd.f32 %v128, %v339
    %341 = vmatmul.f32.gmra.mxu0 %v148
    %v342 = vpop.f32.mrf.mxu0
    %v343 = vadd.f32 %v128, %v342
    %344 = vmatmul.f32.gmra.mxu0 %v151
    %v345 = vpop.f32.mrf.mxu0
    %v346 = vadd.f32 %v128, %v345
    %347 = vmatmul.f32.gmra.mxu0 %v154
    %v348 = vpop.f32.mrf.mxu0
    %v349 = vadd.f32 %v128, %v348
    %350 = vmatmul.f32.gmra.mxu0 %v157
    %v351 = vpop.f32.mrf.mxu0
    %v352 = vadd.f32 %v128, %v351
    %353 = vmatmul.f32.gmra.mxu0 %v160
    %v354 = vpop.f32.mrf.mxu0
    %v355 = vadd.f32 %v128, %v354
    %356 = vmatmul.f32.gmra.mxu0 %v163
    %v357 = vpop.f32.mrf.mxu0
    %v358 = vadd.f32 %v128, %v357
    %359 = vmatmul.f32.gmra.mxu0 %v166
    %v360 = vpop.f32.mrf.mxu0
    %v361 = vadd.f32 %v128, %v360
    %362 = vmatmul.f32.gmra.mxu0 %v169
    %v363 = vpop.f32.mrf.mxu0
    %v364 = vadd.f32 %v128, %v363
    %365 = vmatmul.f32.gmra.mxu0 %v172
    %v366 = vpop.f32.mrf.mxu0
    %v367 = vadd.f32 %v128, %v366
    %368 = vmatmul.f32.gmra.mxu0 %v175
    %v369 = vpop.f32.mrf.mxu0
    %v370 = vadd.f32 %v128, %v369
    %371 = vmatmul.f32.gmra.mxu0 %v178
    %v372 = vpop.f32.mrf.mxu0
    %v373 = vadd.f32 %v128, %v372
    %374 = vmatmul.f32.gmra.mxu0 %v181
    %v375 = vpop.f32.mrf.mxu0
    %v376 = vadd.f32 %v128, %v375
    %377 = vdwg.mxu0
    %378 = vmatpush.msra.mxu0 0.0
    %379 = vmatpush.msra.mxu0 0.0
    %380 = vmatpush.msra.mxu0 0.0
    %381 = vmatpush.msra.mxu0 0.0
    %382 = vmatpush.msra.mxu0 0.0
    %383 = vmatpush.msra.mxu0 0.0
    %384 = vmatpush.msra.mxu0 0.0
    %385 = vmatpush.msra.mxu0 0.0
    %386 = vmatpush.msra.mxu0 %v123
    %387 = vmatpush.msra.mxu0 %v119
    %388 = vmatpush.msra.mxu0 %v115
    %389 = vmatpush.msra.mxu0 %v111
    %390 = vmatpush.msra.mxu0 %v107
    %391 = vmatpush.msra.mxu0 %v103
    %392 = vmatpush.msra.mxu0 %v99
    %393 = vmatpush.msra.mxu0 %v95
    %394 = vmatmul.f32.gmra.mxu0 %v136
    %v395 = vpop.f32.mrf.mxu0
    %v396 = vadd.f32 %v129, %v395
    %397 = vmatmul.f32.gmra.mxu0 %v139
    %v398 = vpop.f32.mrf.mxu0
    %v399 = vadd.f32 %v129, %v398
    %400 = vmatmul.f32.gmra.mxu0 %v142
    %v401 = vpop.f32.mrf.mxu0
    %v402 = vadd.f32 %v129, %v401
    %403 = vmatmul.f32.gmra.mxu0 %v145
    %v404 = vpop.f32.mrf.mxu0
    %v405 = vadd.f32 %v129, %v404
    %406 = vmatmul.f32.gmra.mxu0 %v148
    %v407 = vpop.f32.mrf.mxu0
    %v408 = vadd.f32 %v129, %v407
    %409 = vmatmul.f32.gmra.mxu0 %v151
    %v410 = vpop.f32.mrf.mxu0
    %v411 = vadd.f32 %v129, %v410
    %412 = vmatmul.f32.gmra.mxu0 %v154
    %v413 = vpop.f32.mrf.mxu0
    %v414 = vadd.f32 %v129, %v413
    %415 = vmatmul.f32.gmra.mxu0 %v157
    %v416 = vpop.f32.mrf.mxu0
    %v417 = vadd.f32 %v129, %v416
    %418 = vmatmul.f32.gmra.mxu0 %v160
    %v419 = vpop.f32.mrf.mxu0
    %v420 = vadd.f32 %v129, %v419
    %421 = vmatmul.f32.gmra.mxu0 %v163
    %v422 = vpop.f32.mrf.mxu0
    %v423 = vadd.f32 %v129, %v422
    %424 = vmatmul.f32.gmra.mxu0 %v166
    %v425 = vpop.f32.mrf.mxu0
    %v426 = vadd.f32 %v129, %v425
    %427 = vmatmul.f32.gmra.mxu0 %v169
    %v428 = vpop.f32.mrf.mxu0
    %v429 = vadd.f32 %v129, %v428
    %430 = vmatmul.f32.gmra.mxu0 %v172
    %v431 = vpop.f32.mrf.mxu0
    %v432 = vadd.f32 %v129, %v431
    %433 = vmatmul.f32.gmra.mxu0 %v175
    %v434 = vpop.f32.mrf.mxu0
    %v435 = vadd.f32 %v129, %v434
    %436 = vmatmul.f32.gmra.mxu0 %v178
    %v437 = vpop.f32.mrf.mxu0
    %v438 = vadd.f32 %v129, %v437
    %439 = vmatmul.f32.gmra.mxu0 %v181
    %v440 = vpop.f32.mrf.mxu0
    %v441 = vadd.f32 %v129, %v440
    %442 = vdwg.mxu0
    %v443 = vld [vmem:[#allocation4] sm:$0xff]
    %v444 = vld [vmem:[#allocation4 + $0x8] sm:$0xff]
    %v445 = vld [vmem:[#allocation4 + $0x10] sm:$0xff]
    %v446 = vld [vmem:[#allocation4 + $0x18] sm:$0xff]
    %v447 = vld [vmem:[#allocation4 + $0x20] sm:$0xff]
    %v448 = vld [vmem:[#allocation4 + $0x28] sm:$0xff]
    %v449 = vld [vmem:[#allocation4 + $0x30] sm:$0xff]
    %v450 = vld [vmem:[#allocation4 + $0x38] sm:$0xff]
    %v451 = vld [vmem:[#allocation4 + $0x40] sm:$0xff]
    %v452 = vld [vmem:[#allocation4 + $0x48] sm:$0xff]
    %v453 = vld [vmem:[#allocation4 + $0x50] sm:$0xff]
    %v454 = vld [vmem:[#allocation4 + $0x58] sm:$0xff]
    %v455 = vld [vmem:[#allocation4 + $0x60] sm:$0xff]
    %v456 = vld [vmem:[#allocation4 + $0x68] sm:$0xff]
    %v457 = vld [vmem:[#allocation4 + $0x70] sm:$0xff]
    %v458 = vld [vmem:[#allocation4 + $0x78] sm:$0xff]
    %v459 = vld [vmem:[#allocation4 + $0x80] sm:$0xff]
    %v460 = vld [vmem:[#allocation4 + $0x88] sm:$0xff]
    %v461 = vld [vmem:[#allocation4 + $0x90] sm:$0xff]
    %v462 = vld [vmem:[#allocation4 + $0x98] sm:$0xff]
    %v463 = vld [vmem:[#allocation4 + $0xa0] sm:$0xff]
    %v464 = vld [vmem:[#allocation4 + $0xa8] sm:$0xff]
    %v465 = vld [vmem:[#allocation4 + $0xb0] sm:$0xff]
    %v466 = vld [vmem:[#allocation4 + $0xb8] sm:$0xff]
    %v467 = vld [vmem:[#allocation4 + $0xc0] sm:$0xff]
    %v468 = vld [vmem:[#allocation4 + $0xc8] sm:$0xff]
    %v469 = vld [vmem:[#allocation4 + $0xd0] sm:$0xff]
    %v470 = vld [vmem:[#allocation4 + $0xd8] sm:$0xff]
    %v471 = vld [vmem:[#allocation4 + $0xe0] sm:$0xff]
    %v472 = vld [vmem:[#allocation4 + $0xe8] sm:$0xff]
    %v473 = vld [vmem:[#allocation4 + $0xf0] sm:$0xff]
    %v474 = vld [vmem:[#allocation4 + $0xf8] sm:$0xff]
    %v475 = vld [vmem:[#allocation4 + $0x100] sm:$0xff]
    %v476 = vld [vmem:[#allocation4 + $0x108] sm:$0xff]
    %v477 = vld [vmem:[#allocation4 + $0x110] sm:$0xff]
    %v478 = vld [vmem:[#allocation4 + $0x118] sm:$0xff]
    %v479 = vld [vmem:[#allocation4 + $0x120] sm:$0xff]
    %v480 = vld [vmem:[#allocation4 + $0x128] sm:$0xff]
    %v481 = vld [vmem:[#allocation4 + $0x130] sm:$0xff]
    %v482 = vld [vmem:[#allocation4 + $0x138] sm:$0xff]
    %v483 = vld [vmem:[#allocation4 + $0x140] sm:$0xff]
    %v484 = vld [vmem:[#allocation4 + $0x148] sm:$0xff]
    %v485 = vld [vmem:[#allocation4 + $0x150] sm:$0xff]
    %v486 = vld [vmem:[#allocation4 + $0x158] sm:$0xff]
    %v487 = vld [vmem:[#allocation4 + $0x160] sm:$0xff]
    %v488 = vld [vmem:[#allocation4 + $0x168] sm:$0xff]
    %v489 = vld [vmem:[#allocation4 + $0x170] sm:$0xff]
    %v490 = vld [vmem:[#allocation4 + $0x178] sm:$0xff]
    %v491 = vld [vmem:[#allocation4 + $0x180] sm:$0xff]
    %v492 = vld [vmem:[#allocation4 + $0x188] sm:$0xff]
    %v493 = vld [vmem:[#allocation4 + $0x190] sm:$0xff]
    %v494 = vld [vmem:[#allocation4 + $0x198] sm:$0xff]
    %v495 = vld [vmem:[#allocation4 + $0x1a0] sm:$0xff]
    %v496 = vld [vmem:[#allocation4 + $0x1a8] sm:$0xff]
    %v497 = vld [vmem:[#allocation4 + $0x1b0] sm:$0xff]
    %v498 = vld [vmem:[#allocation4 + $0x1b8] sm:$0xff]
    %v499 = vld [vmem:[#allocation4 + $0x1c0] sm:$0xff]
    %v500 = vld [vmem:[#allocation4 + $0x1c8] sm:$0xff]
    %v501 = vld [vmem:[#allocation4 + $0x1d0] sm:$0xff]
    %v502 = vld [vmem:[#allocation4 + $0x1d8] sm:$0xff]
    %v503 = vld [vmem:[#allocation4 + $0x1e0] sm:$0xff]
    %v504 = vld [vmem:[#allocation4 + $0x1e8] sm:$0xff]
    %v505 = vld [vmem:[#allocation4 + $0x1f0] sm:$0xff]
    %v506 = vld [vmem:[#allocation4 + $0x1f8] sm:$0xff]
    %v507 = vxor.u32 %v201, 2147483648
    %v508 = vmul.f32 %v507, 1.442695
    %v509 = vpow.pop %v508
    %v510 = vadd.f32 %v509, 1.0
    %v511 = vrcp.pop %v510
    %v512 = vmul.f32 %v510, %v511
    %v513 = vsub.f32 1.0, %v512
    %v514 = vmul.f32 %v511, %v513
    %v515 = vadd.f32 %v511, %v514
    %vm516 = vweird.f32 %v510
    %vm517 = vweird.f32 %v511
    %vm518 = vmor %vm516, %vm517
    %v519 = vsel %vm518, %v511, %v515
    %v520 = vand.u32 2147483647, %v510
    %vm521 = vcmp.eq.f32.partialorder %v520, 8.507059e+37
    %v522 = vand.u32 %v510, 2147483648
    %v523 = vor.u32 1.1754944e-38, %v522
    %v524 = vsel %vm521, %v523, %v519
    %v525 = vmul.f32 1.0, %v524
    %v526 = vxor.u32 %v266, 2147483648
    %v527 = vmul.f32 %v526, 1.442695
    %v528 = vpow.pop %v527
    %v529 = vadd.f32 %v528, 1.0
    %v530 = vrcp.pop %v529
    %v531 = vmul.f32 %v529, %v530
    %v532 = vsub.f32 1.0, %v531
    %v533 = vmul.f32 %v530, %v532
    %v534 = vadd.f32 %v530, %v533
    %vm535 = vweird.f32 %v529
    %vm536 = vweird.f32 %v530
    %vm537 = vmor %vm535, %vm536
    %v538 = vsel %vm537, %v530, %v534
    %v539 = vand.u32 2147483647, %v529
    %vm540 = vcmp.eq.f32.partialorder %v539, 8.507059e+37
    %v541 = vand.u32 %v529, 2147483648
    %v542 = vor.u32 1.1754944e-38, %v541
    %v543 = vsel %vm540, %v542, %v538
    %v544 = vmul.f32 1.0, %v543
    %v545 = vtanh.pop %v331
    %v546 = vxor.u32 %v396, 2147483648
    %v547 = vmul.f32 %v546, 1.442695
    %v548 = vpow.pop %v547
    %v549 = vadd.f32 %v548, 1.0
    %v550 = vrcp.pop %v549
    %v551 = vmul.f32 %v549, %v550
    %v552 = vsub.f32 1.0, %v551
    %v553 = vmul.f32 %v550, %v552
    %v554 = vadd.f32 %v550, %v553
    %vm555 = vweird.f32 %v549
    %vm556 = vweird.f32 %v550
    %vm557 = vmor %vm555, %vm556
    %v558 = vsel %vm557, %v550, %v554
    %v559 = vand.u32 2147483647, %v549
    %vm560 = vcmp.eq.f32.partialorder %v559, 8.507059e+37
    %v561 = vand.u32 %v549, 2147483648
    %v562 = vor.u32 1.1754944e-38, %v561
    %v563 = vsel %vm560, %v562, %v558
    %v564 = vmul.f32 1.0, %v563
    %v565 = vmul.f32 %v544, 0.0
    %v566 = vmul.f32 %v525, %v545
    %v567 = vadd.f32 %v565, %v566
    %v568 = vtanh.pop %v567
    %v569 = vmul.f32 %v564, %v568
    %570 = vmatpush.msra.mxu0 %v503
    %571 = vmatpush.msra.mxu0 %v499
    %572 = vmatpush.msra.mxu0 %v495
    %573 = vmatpush.msra.mxu0 %v491
    %574 = vmatpush.msra.mxu0 %v487
    %575 = vmatpush.msra.mxu0 %v483
    %576 = vmatpush.msra.mxu0 %v479
    %577 = vmatpush.msra.mxu0 %v475
    %578 = vmatpush.msra.mxu0 %v471
    %579 = vmatpush.msra.mxu0 %v467
    %580 = vmatpush.msra.mxu0 %v463
    %581 = vmatpush.msra.mxu0 %v459
    %582 = vmatpush.msra.mxu0 %v455
    %583 = vmatpush.msra.mxu0 %v451
    %584 = vmatpush.msra.mxu0 %v447
    %585 = vmatpush.msra.mxu0 %v443
    %586 = vmatmul.f32.gmra.mxu0 %v569
    %v587 = vpop.f32.mrf.mxu0
    %v588 = vadd.f32 0.0, %v587
    %589 = vdwg.mxu0
    %590 = vmatpush.msra.mxu0 %v504
    %591 = vmatpush.msra.mxu0 %v500
    %592 = vmatpush.msra.mxu0 %v496
    %593 = vmatpush.msra.mxu0 %v492
    %594 = vmatpush.msra.mxu0 %v488
    %595 = vmatpush.msra.mxu0 %v484
    %596 = vmatpush.msra.mxu0 %v480
    %597 = vmatpush.msra.mxu0 %v476
    %598 = vmatpush.msra.mxu0 %v472
    %599 = vmatpush.msra.mxu0 %v468
    %600 = vmatpush.msra.mxu0 %v464
    %601 = vmatpush.msra.mxu0 %v460
    %602 = vmatpush.msra.mxu0 %v456
    %603 = vmatpush.msra.mxu0 %v452
    %604 = vmatpush.msra.mxu0 %v448
    %605 = vmatpush.msra.mxu0 %v444
    %606 = vmatmul.f32.gmra.mxu0 %v569
    %v607 = vpop.f32.mrf.mxu0
    %v608 = vadd.f32 0.0, %v607
    %609 = vdwg.mxu0
    %610 = vmatpush.msra.mxu0 %v505
    %611 = vmatpush.msra.mxu0 %v501
    %612 = vmatpush.msra.mxu0 %v497
    %613 = vmatpush.msra.mxu0 %v493
    %614 = vmatpush.msra.mxu0 %v489
    %615 = vmatpush.msra.mxu0 %v485
    %616 = vmatpush.msra.mxu0 %v481
    %617 = vmatpush.msra.mxu0 %v477
    %618 = vmatpush.msra.mxu0 %v473
    %619 = vmatpush.msra.mxu0 %v469
    %620 = vmatpush.msra.mxu0 %v465
    %621 = vmatpush.msra.mxu0 %v461
    %622 = vmatpush.msra.mxu0 %v457
    %623 = vmatpush.msra.mxu0 %v453
    %624 = vmatpush.msra.mxu0 %v449
    %625 = vmatpush.msra.mxu0 %v445
    %626 = vmatmul.f32.gmra.mxu0 %v569
    %v627 = vpop.f32.mrf.mxu0
    %v628 = vadd.f32 0.0, %v627
    %629 = vdwg.mxu0
    %630 = vmatpush.msra.mxu0 %v506
    %631 = vmatpush.msra.mxu0 %v502
    %632 = vmatpush.msra.mxu0 %v498
    %633 = vmatpush.msra.mxu0 %v494
    %634 = vmatpush.msra.mxu0 %v490
    %635 = vmatpush.msra.mxu0 %v486
    %636 = vmatpush.msra.mxu0 %v482
    %637 = vmatpush.msra.mxu0 %v478
    %638 = vmatpush.msra.mxu0 %v474
    %639 = vmatpush.msra.mxu0 %v470
    %640 = vmatpush.msra.mxu0 %v466
    %641 = vmatpush.msra.mxu0 %v462
    %642 = vmatpush.msra.mxu0 %v458
    %643 = vmatpush.msra.mxu0 %v454
    %644 = vmatpush.msra.mxu0 %v450
    %645 = vmatpush.msra.mxu0 %v446
    %646 = vmatmul.f32.gmra.mxu0 %v569
    %v647 = vpop.f32.mrf.mxu0
    %v648 = vadd.f32 0.0, %v647
    %649 = vdwg.mxu0
    %v650 = vadd.f32 %v204, %v588
    %v651 = vadd.f32 %v269, %v608
    %v652 = vadd.f32 %v334, %v628
    %v653 = vadd.f32 %v399, %v648
    %v654 = vxor.u32 %v650, 2147483648
    %v655 = vmul.f32 %v654, 1.442695
    %v656 = vpow.pop %v655
    %v657 = vadd.f32 %v656, 1.0
    %v658 = vrcp.pop %v657
    %v659 = vmul.f32 %v657, %v658
    %v660 = vsub.f32 1.0, %v659
    %v661 = vmul.f32 %v658, %v660
    %v662 = vadd.f32 %v658, %v661
    %vm663 = vweird.f32 %v657
    %vm664 = vweird.f32 %v658
    %vm665 = vmor %vm663, %vm664
    %v666 = vsel %vm665, %v658, %v662
    %v667 = vand.u32 2147483647, %v657
    %vm668 = vcmp.eq.f32.partialorder %v667, 8.507059e+37
    %v669 = vand.u32 %v657, 2147483648
    %v670 = vor.u32 1.1754944e-38, %v669
    %v671 = vsel %vm668, %v670, %v666
    %v672 = vmul.f32 1.0, %v671
    %v673 = vxor.u32 %v651, 2147483648
    %v674 = vmul.f32 %v673, 1.442695
    %v675 = vpow.pop %v674
    %v676 = vadd.f32 %v675, 1.0
    %v677 = vrcp.pop %v676
    %v678 = vmul.f32 %v676, %v677
    %v679 = vsub.f32 1.0, %v678
    %v680 = vmul.f32 %v677, %v679
    %v681 = vadd.f32 %v677, %v680
    %vm682 = vweird.f32 %v676
    %vm683 = vweird.f32 %v677
    %vm684 = vmor %vm682, %vm683
    %v685 = vsel %vm684, %v677, %v681
    %v686 = vand.u32 2147483647, %v676
    %vm687 = vcmp.eq.f32.partialorder %v686, 8.507059e+37
    %v688 = vand.u32 %v676, 2147483648
    %v689 = vor.u32 1.1754944e-38, %v688
    %v690 = vsel %vm687, %v689, %v685
    %v691 = vmul.f32 1.0, %v690
    %v692 = vtanh.pop %v652
    %v693 = vxor.u32 %v653, 2147483648
    %v694 = vmul.f32 %v693, 1.442695
    %v695 = vpow.pop %v694
    %v696 = vadd.f32 %v695, 1.0
    %v697 = vrcp.pop %v696
    %v698 = vmul.f32 %v696, %v697
    %v699 = vsub.f32 1.0, %v698
    %v700 = vmul.f32 %v697, %v699
    %v701 = vadd.f32 %v697, %v700
    %vm702 = vweird.f32 %v696
    %vm703 = vweird.f32 %v697
    %vm704 = vmor %vm702, %vm703
    %v705 = vsel %vm704, %v697, %v701
    %v706 = vand.u32 2147483647, %v696
    %vm707 = vcmp.eq.f32.partialorder %v706, 8.507059e+37
    %v708 = vand.u32 %v696, 2147483648
    %v709 = vor.u32 1.1754944e-38, %v708
    %v710 = vsel %vm707, %v709, %v705
    %v711 = vmul.f32 1.0, %v710
    %v712 = vmul.f32 %v691, %v567
    %v713 = vmul.f32 %v672, %v692
    %v714 = vadd.f32 %v712, %v713
    %v715 = vtanh.pop %v714
    %v716 = vmul.f32 %v711, %v715
    %717 = vmatpush.msra.mxu0 %v503
    %718 = vmatpush.msra.mxu0 %v499
    %719 = vmatpush.msra.mxu0 %v495
    %720 = vmatpush.msra.mxu0 %v491
    %721 = vmatpush.msra.mxu0 %v487
    %722 = vmatpush.msra.mxu0 %v483
    %723 = vmatpush.msra.mxu0 %v479
    %724 = vmatpush.msra.mxu0 %v475
    %725 = vmatpush.msra.mxu0 %v471
    %726 = vmatpush.msra.mxu0 %v467
    %727 = vmatpush.msra.mxu0 %v463
    %728 = vmatpush.msra.mxu0 %v459
    %729 = vmatpush.msra.mxu0 %v455
    %730 = vmatpush.msra.mxu0 %v451
    %731 = vmatpush.msra.mxu0 %v447
    %732 = vmatpush.msra.mxu0 %v443
    %733 = vmatmul.f32.gmra.mxu0 %v716
    %v734 = vpop.f32.mrf.mxu0
    %v735 = vadd.f32 0.0, %v734
    %736 = vdwg.mxu0
    %737 = vmatpush.msra.mxu0 %v504
    %738 = vmatpush.msra.mxu0 %v500
    %739 = vmatpush.msra.mxu0 %v496
    %740 = vmatpush.msra.mxu0 %v492
    %741 = vmatpush.msra.mxu0 %v488
    %742 = vmatpush.msra.mxu0 %v484
    %743 = vmatpush.msra.mxu0 %v480
    %744 = vmatpush.msra.mxu0 %v476
    %745 = vmatpush.msra.mxu0 %v472
    %746 = vmatpush.msra.mxu0 %v468
    %747 = vmatpush.msra.mxu0 %v464
    %748 = vmatpush.msra.mxu0 %v460
    %749 = vmatpush.msra.mxu0 %v456
    %750 = vmatpush.msra.mxu0 %v452
    %751 = vmatpush.msra.mxu0 %v448
    %752 = vmatpush.msra.mxu0 %v444
    %753 = vmatmul.f32.gmra.mxu0 %v716
    %v754 = vpop.f32.mrf.mxu0
    %v755 = vadd.f32 0.0, %v754
    %756 = vdwg.mxu0
    %757 = vmatpush.msra.mxu0 %v505
    %758 = vmatpush.msra.mxu0 %v501
    %759 = vmatpush.msra.mxu0 %v497
    %760 = vmatpush.msra.mxu0 %v493
    %761 = vmatpush.msra.mxu0 %v489
    %762 = vmatpush.msra.mxu0 %v485
    %763 = vmatpush.msra.mxu0 %v481
    %764 = vmatpush.msra.mxu0 %v477
    %765 = vmatpush.msra.mxu0 %v473
    %766 = vmatpush.msra.mxu0 %v469
    %767 = vmatpush.msra.mxu0 %v465
    %768 = vmatpush.msra.mxu0 %v461
    %769 = vmatpush.msra.mxu0 %v457
    %770 = vmatpush.msra.mxu0 %v453
    %771 = vmatpush.msra.mxu0 %v449
    %772 = vmatpush.msra.mxu0 %v445
    %773 = vmatmul.f32.gmra.mxu0 %v716
    %v774 = vpop.f32.mrf.mxu0
    %v775 = vadd.f32 0.0, %v774
    %776 = vdwg.mxu0
    %777 = vmatpush.msra.mxu0 %v506
    %778 = vmatpush.msra.mxu0 %v502
    %779 = vmatpush.msra.mxu0 %v498
    %780 = vmatpush.msra.mxu0 %v494
    %781 = vmatpush.msra.mxu0 %v490
    %782 = vmatpush.msra.mxu0 %v486
    %783 = vmatpush.msra.mxu0 %v482
    %784 = vmatpush.msra.mxu0 %v478
    %785 = vmatpush.msra.mxu0 %v474
    %786 = vmatpush.msra.mxu0 %v470
    %787 = vmatpush.msra.mxu0 %v466
    %788 = vmatpush.msra.mxu0 %v462
    %789 = vmatpush.msra.mxu0 %v458
    %790 = vmatpush.msra.mxu0 %v454
    %791 = vmatpush.msra.mxu0 %v450
    %792 = vmatpush.msra.mxu0 %v446
    %793 = vmatmul.f32.gmra.mxu0 %v716
    %v794 = vpop.f32.mrf.mxu0
    %v795 = vadd.f32 0.0, %v794
    %796 = vdwg.mxu0
    %v797 = vadd.f32 %v207, %v735
    %v798 = vadd.f32 %v272, %v755
    %v799 = vadd.f32 %v337, %v775
    %v800 = vadd.f32 %v402, %v795
    %v801 = vxor.u32 %v797, 2147483648
    %v802 = vmul.f32 %v801, 1.442695
    %v803 = vpow.pop %v802
    %v804 = vadd.f32 %v803, 1.0
    %v805 = vrcp.pop %v804
    %v806 = vmul.f32 %v804, %v805
    %v807 = vsub.f32 1.0, %v806
    %v808 = vmul.f32 %v805, %v807
    %v809 = vadd.f32 %v805, %v808
    %vm810 = vweird.f32 %v804
    %vm811 = vweird.f32 %v805
    %vm812 = vmor %vm810, %vm811
    %v813 = vsel %vm812, %v805, %v809
    %v814 = vand.u32 2147483647, %v804
    %vm815 = vcmp.eq.f32.partialorder %v814, 8.507059e+37
    %v816 = vand.u32 %v804, 2147483648
    %v817 = vor.u32 1.1754944e-38, %v816
    %v818 = vsel %vm815, %v817, %v813
    %v819 = vmul.f32 1.0, %v818
    %v820 = vxor.u32 %v798, 2147483648
    %v821 = vmul.f32 %v820, 1.442695
    %v822 = vpow.pop %v821
    %v823 = vadd.f32 %v822, 1.0
    %v824 = vrcp.pop %v823
    %v825 = vmul.f32 %v823, %v824
    %v826 = vsub.f32 1.0, %v825
    %v827 = vmul.f32 %v824, %v826
    %v828 = vadd.f32 %v824, %v827
    %vm829 = vweird.f32 %v823
    %vm830 = vweird.f32 %v824
    %vm831 = vmor %vm829, %vm830
    %v832 = vsel %vm831, %v824, %v828
    %v833 = vand.u32 2147483647, %v823
    %vm834 = vcmp.eq.f32.partialorder %v833, 8.507059e+37
    %v835 = vand.u32 %v823, 2147483648
    %v836 = vor.u32 1.1754944e-38, %v835
    %v837 = vsel %vm834, %v836, %v832
    %v838 = vmul.f32 1.0, %v837
    %v839 = vtanh.pop %v799
    %v840 = vxor.u32 %v800, 2147483648
    %v841 = vmul.f32 %v840, 1.442695
    %v842 = vpow.pop %v841
    %v843 = vadd.f32 %v842, 1.0
    %v844 = vrcp.pop %v843
    %v845 = vmul.f32 %v843, %v844
    %v846 = vsub.f32 1.0, %v845
    %v847 = vmul.f32 %v844, %v846
    %v848 = vadd.f32 %v844, %v847
    %vm849 = vweird.f32 %v843
    %vm850 = vweird.f32 %v844
    %vm851 = vmor %vm849, %vm850
    %v852 = vsel %vm851, %v844, %v848
    %v853 = vand.u32 2147483647, %v843
    %vm854 = vcmp.eq.f32.partialorder %v853, 8.507059e+37
    %v855 = vand.u32 %v843, 2147483648
    %v856 = vor.u32 1.1754944e-38, %v855
    %v857 = vsel %vm854, %v856, %v852
    %v858 = vmul.f32 1.0, %v857
    %v859 = vmul.f32 %v838, %v714
    %v860 = vmul.f32 %v819, %v839
    %v861 = vadd.f32 %v859, %v860
    %v862 = vtanh.pop %v861
    %v863 = vmul.f32 %v858, %v862
    %864 = vmatpush.msra.mxu0 %v503
    %865 = vmatpush.msra.mxu0 %v499
    %866 = vmatpush.msra.mxu0 %v495
    %867 = vmatpush.msra.mxu0 %v491
    %868 = vmatpush.msra.mxu0 %v487
    %869 = vmatpush.msra.mxu0 %v483
    %870 = vmatpush.msra.mxu0 %v479
    %871 = vmatpush.msra.mxu0 %v475
    %872 = vmatpush.msra.mxu0 %v471
    %873 = vmatpush.msra.mxu0 %v467
    %874 = vmatpush.msra.mxu0 %v463
    %875 = vmatpush.msra.mxu0 %v459
    %876 = vmatpush.msra.mxu0 %v455
    %877 = vmatpush.msra.mxu0 %v451
    %878 = vmatpush.msra.mxu0 %v447
    %879 = vmatpush.msra.mxu0 %v443
    %880 = vmatmul.f32.gmra.mxu0 %v863
    %v881 = vpop.f32.mrf.mxu0
    %v882 = vadd.f32 0.0, %v881
    %883 = vdwg.mxu0
    %884 = vmatpush.msra.mxu0 %v504
    %885 = vmatpush.msra.mxu0 %v500
    %886 = vmatpush.msra.mxu0 %v496
    %887 = vmatpush.msra.mxu0 %v492
    %888 = vmatpush.msra.mxu0 %v488
    %889 = vmatpush.msra.mxu0 %v484
    %890 = vmatpush.msra.mxu0 %v480
    %891 = vmatpush.msra.mxu0 %v476
    %892 = vmatpush.msra.mxu0 %v472
    %893 = vmatpush.msra.mxu0 %v468
    %894 = vmatpush.msra.mxu0 %v464
    %895 = vmatpush.msra.mxu0 %v460
    %896 = vmatpush.msra.mxu0 %v456
    %897 = vmatpush.msra.mxu0 %v452
    %898 = vmatpush.msra.mxu0 %v448
    %899 = vmatpush.msra.mxu0 %v444
    %900 = vmatmul.f32.gmra.mxu0 %v863
    %v901 = vpop.f32.mrf.mxu0
    %v902 = vadd.f32 0.0, %v901
    %903 = vdwg.mxu0
    %904 = vmatpush.msra.mxu0 %v505
    %905 = vmatpush.msra.mxu0 %v501
    %906 = vmatpush.msra.mxu0 %v497
    %907 = vmatpush.msra.mxu0 %v493
    %908 = vmatpush.msra.mxu0 %v489
    %909 = vmatpush.msra.mxu0 %v485
    %910 = vmatpush.msra.mxu0 %v481
    %911 = vmatpush.msra.mxu0 %v477
    %912 = vmatpush.msra.mxu0 %v473
    %913 = vmatpush.msra.mxu0 %v469
    %914 = vmatpush.msra.mxu0 %v465
    %915 = vmatpush.msra.mxu0 %v461
    %916 = vmatpush.msra.mxu0 %v457
    %917 = vmatpush.msra.mxu0 %v453
    %918 = vmatpush.msra.mxu0 %v449
    %919 = vmatpush.msra.mxu0 %v445
    %920 = vmatmul.f32.gmra.mxu0 %v863
    %v921 = vpop.f32.mrf.mxu0
    %v922 = vadd.f32 0.0, %v921
    %923 = vdwg.mxu0
    %924 = vmatpush.msra.mxu0 %v506
    %925 = vmatpush.msra.mxu0 %v502
    %926 = vmatpush.msra.mxu0 %v498
    %927 = vmatpush.msra.mxu0 %v494
    %928 = vmatpush.msra.mxu0 %v490
    %929 = vmatpush.msra.mxu0 %v486
    %930 = vmatpush.msra.mxu0 %v482
    %931 = vmatpush.msra.mxu0 %v478
    %932 = vmatpush.msra.mxu0 %v474
    %933 = vmatpush.msra.mxu0 %v470
    %934 = vmatpush.msra.mxu0 %v466
    %935 = vmatpush.msra.mxu0 %v462
    %936 = vmatpush.msra.mxu0 %v458
    %937 = vmatpush.msra.mxu0 %v454
    %938 = vmatpush.msra.mxu0 %v450
    %939 = vmatpush.msra.mxu0 %v446
    %940 = vmatmul.f32.gmra.mxu0 %v863
    %v941 = vpop.f32.mrf.mxu0
    %v942 = vadd.f32 0.0, %v941
    %943 = vdwg.mxu0
    %v944 = vadd.f32 %v210, %v882
    %v945 = vadd.f32 %v275, %v902
    %v946 = vadd.f32 %v340, %v922
    %v947 = vadd.f32 %v405, %v942
    %v948 = vxor.u32 %v944, 2147483648
    %v949 = vmul.f32 %v948, 1.442695
    %v950 = vpow.pop %v949
    %v951 = vadd.f32 %v950, 1.0
    %v952 = vrcp.pop %v951
    %v953 = vmul.f32 %v951, %v952
    %v954 = vsub.f32 1.0, %v953
    %v955 = vmul.f32 %v952, %v954
    %v956 = vadd.f32 %v952, %v955
    %vm957 = vweird.f32 %v951
    %vm958 = vweird.f32 %v952
    %vm959 = vmor %vm957, %vm958
    %v960 = vsel %vm959, %v952, %v956
    %v961 = vand.u32 2147483647, %v951
    %vm962 = vcmp.eq.f32.partialorder %v961, 8.507059e+37
    %v963 = vand.u32 %v951, 2147483648
    %v964 = vor.u32 1.1754944e-38, %v963
    %v965 = vsel %vm962, %v964, %v960
    %v966 = vmul.f32 1.0, %v965
    %v967 = vxor.u32 %v945, 2147483648
    %v968 = vmul.f32 %v967, 1.442695
    %v969 = vpow.pop %v968
    %v970 = vadd.f32 %v969, 1.0
    %v971 = vrcp.pop %v970
    %v972 = vmul.f32 %v970, %v971
    %v973 = vsub.f32 1.0, %v972
    %v974 = vmul.f32 %v971, %v973
    %v975 = vadd.f32 %v971, %v974
    %vm976 = vweird.f32 %v970
    %vm977 = vweird.f32 %v971
    %vm978 = vmor %vm976, %vm977
    %v979 = vsel %vm978, %v971, %v975
    %v980 = vand.u32 2147483647, %v970
    %vm981 = vcmp.eq.f32.partialorder %v980, 8.507059e+37
    %v982 = vand.u32 %v970, 2147483648
    %v983 = vor.u32 1.1754944e-38, %v982
    %v984 = vsel %vm981, %v983, %v979
    %v985 = vmul.f32 1.0, %v984
    %v986 = vtanh.pop %v946
    %v987 = vxor.u32 %v947, 2147483648
    %v988 = vmul.f32 %v987, 1.442695
    %v989 = vpow.pop %v988
    %v990 = vadd.f32 %v989, 1.0
    %v991 = vrcp.pop %v990
    %v992 = vmul.f32 %v990, %v991
    %v993 = vsub.f32 1.0, %v992
    %v994 = vmul.f32 %v991, %v993
    %v995 = vadd.f32 %v991, %v994
    %vm996 = vweird.f32 %v990
    %vm997 = vweird.f32 %v991
    %vm998 = vmor %vm996, %vm997
    %v999 = vsel %vm998, %v991, %v995
    %v1000 = vand.u32 2147483647, %v990
    %vm1001 = vcmp.eq.f32.partialorder %v1000, 8.507059e+37
    %v1002 = vand.u32 %v990, 2147483648
    %v1003 = vor.u32 1.1754944e-38, %v1002
    %v1004 = vsel %vm1001, %v1003, %v999
    %v1005 = vmul.f32 1.0, %v1004
    %v1006 = vmul.f32 %v985, %v861
    %v1007 = vmul.f32 %v966, %v986
    %v1008 = vadd.f32 %v1006, %v1007
    %v1009 = vtanh.pop %v1008
    %v1010 = vmul.f32 %v1005, %v1009
    %1011 = vmatpush.msra.mxu0 %v503
    %1012 = vmatpush.msra.mxu0 %v499
    %1013 = vmatpush.msra.mxu0 %v495
    %1014 = vmatpush.msra.mxu0 %v491
    %1015 = vmatpush.msra.mxu0 %v487
    %1016 = vmatpush.msra.mxu0 %v483
    %1017 = vmatpush.msra.mxu0 %v479
    %1018 = vmatpush.msra.mxu0 %v475
    %1019 = vmatpush.msra.mxu0 %v471
    %1020 = vmatpush.msra.mxu0 %v467
    %1021 = vmatpush.msra.mxu0 %v463
    %1022 = vmatpush.msra.mxu0 %v459
    %1023 = vmatpush.msra.mxu0 %v455
    %1024 = vmatpush.msra.mxu0 %v451
    %1025 = vmatpush.msra.mxu0 %v447
    %1026 = vmatpush.msra.mxu0 %v443
    %1027 = vmatmul.f32.gmra.mxu0 %v1010
    %v1028 = vpop.f32.mrf.mxu0
    %v1029 = vadd.f32 0.0, %v1028
    %1030 = vdwg.mxu0
    %1031 = vmatpush.msra.mxu0 %v504
    %1032 = vmatpush.msra.mxu0 %v500
    %1033 = vmatpush.msra.mxu0 %v496
    %1034 = vmatpush.msra.mxu0 %v492
    %1035 = vmatpush.msra.mxu0 %v488
    %1036 = vmatpush.msra.mxu0 %v484
    %1037 = vmatpush.msra.mxu0 %v480
    %1038 = vmatpush.msra.mxu0 %v476
    %1039 = vmatpush.msra.mxu0 %v472
    %1040 = vmatpush.msra.mxu0 %v468
    %1041 = vmatpush.msra.mxu0 %v464
    %1042 = vmatpush.msra.mxu0 %v460
    %1043 = vmatpush.msra.mxu0 %v456
    %1044 = vmatpush.msra.mxu0 %v452
    %1045 = vmatpush.msra.mxu0 %v448
    %1046 = vmatpush.msra.mxu0 %v444
    %1047 = vmatmul.f32.gmra.mxu0 %v1010
    %v1048 = vpop.f32.mrf.mxu0
    %v1049 = vadd.f32 0.0, %v1048
    %1050 = vdwg.mxu0
    %1051 = vmatpush.msra.mxu0 %v505
    %1052 = vmatpush.msra.mxu0 %v501
    %1053 = vmatpush.msra.mxu0 %v497
    %1054 = vmatpush.msra.mxu0 %v493
    %1055 = vmatpush.msra.mxu0 %v489
    %1056 = vmatpush.msra.mxu0 %v485
    %1057 = vmatpush.msra.mxu0 %v481
    %1058 = vmatpush.msra.mxu0 %v477
    %1059 = vmatpush.msra.mxu0 %v473
    %1060 = vmatpush.msra.mxu0 %v469
    %1061 = vmatpush.msra.mxu0 %v465
    %1062 = vmatpush.msra.mxu0 %v461
    %1063 = vmatpush.msra.mxu0 %v457
    %1064 = vmatpush.msra.mxu0 %v453
    %1065 = vmatpush.msra.mxu0 %v449
    %1066 = vmatpush.msra.mxu0 %v445
    %1067 = vmatmul.f32.gmra.mxu0 %v1010
    %v1068 = vpop.f32.mrf.mxu0
    %v1069 = vadd.f32 0.0, %v1068
    %1070 = vdwg.mxu0
    %1071 = vmatpush.msra.mxu0 %v506
    %1072 = vmatpush.msra.mxu0 %v502
    %1073 = vmatpush.msra.mxu0 %v498
    %1074 = vmatpush.msra.mxu0 %v494
    %1075 = vmatpush.msra.mxu0 %v490
    %1076 = vmatpush.msra.mxu0 %v486
    %1077 = vmatpush.msra.mxu0 %v482
    %1078 = vmatpush.msra.mxu0 %v478
    %1079 = vmatpush.msra.mxu0 %v474
    %1080 = vmatpush.msra.mxu0 %v470
    %1081 = vmatpush.msra.mxu0 %v466
    %1082 = vmatpush.msra.mxu0 %v462
    %1083 = vmatpush.msra.mxu0 %v458
    %1084 = vmatpush.msra.mxu0 %v454
    %1085 = vmatpush.msra.mxu0 %v450
    %1086 = vmatpush.msra.mxu0 %v446
    %1087 = vmatmul.f32.gmra.mxu0 %v1010
    %v1088 = vpop.f32.mrf.mxu0
    %v1089 = vadd.f32 0.0, %v1088
    %1090 = vdwg.mxu0
    %v1091 = vadd.f32 %v213, %v1029
    %v1092 = vadd.f32 %v278, %v1049
    %v1093 = vadd.f32 %v343, %v1069
    %v1094 = vadd.f32 %v408, %v1089
    %v1095 = vxor.u32 %v1091, 2147483648
    %v1096 = vmul.f32 %v1095, 1.442695
    %v1097 = vpow.pop %v1096
    %v1098 = vadd.f32 %v1097, 1.0
    %v1099 = vrcp.pop %v1098
    %v1100 = vmul.f32 %v1098, %v1099
    %v1101 = vsub.f32 1.0, %v1100
    %v1102 = vmul.f32 %v1099, %v1101
    %v1103 = vadd.f32 %v1099, %v1102
    %vm1104 = vweird.f32 %v1098
    %vm1105 = vweird.f32 %v1099
    %vm1106 = vmor %vm1104, %vm1105
    %v1107 = vsel %vm1106, %v1099, %v1103
    %v1108 = vand.u32 2147483647, %v1098
    %vm1109 = vcmp.eq.f32.partialorder %v1108, 8.507059e+37
    %v1110 = vand.u32 %v1098, 2147483648
    %v1111 = vor.u32 1.1754944e-38, %v1110
    %v1112 = vsel %vm1109, %v1111, %v1107
    %v1113 = vmul.f32 1.0, %v1112
    %v1114 = vxor.u32 %v1092, 2147483648
    %v1115 = vmul.f32 %v1114, 1.442695
    %v1116 = vpow.pop %v1115
    %v1117 = vadd.f32 %v1116, 1.0
    %v1118 = vrcp.pop %v1117
    %v1119 = vmul.f32 %v1117, %v1118
    %v1120 = vsub.f32 1.0, %v1119
    %v1121 = vmul.f32 %v1118, %v1120
    %v1122 = vadd.f32 %v1118, %v1121
    %vm1123 = vweird.f32 %v1117
    %vm1124 = vweird.f32 %v1118
    %vm1125 = vmor %vm1123, %vm1124
    %v1126 = vsel %vm1125, %v1118, %v1122
    %v1127 = vand.u32 2147483647, %v1117
    %vm1128 = vcmp.eq.f32.partialorder %v1127, 8.507059e+37
    %v1129 = vand.u32 %v1117, 2147483648
    %v1130 = vor.u32 1.1754944e-38, %v1129
    %v1131 = vsel %vm1128, %v1130, %v1126
    %v1132 = vmul.f32 1.0, %v1131
    %v1133 = vtanh.pop %v1093
    %v1134 = vxor.u32 %v1094, 2147483648
    %v1135 = vmul.f32 %v1134, 1.442695
    %v1136 = vpow.pop %v1135
    %v1137 = vadd.f32 %v1136, 1.0
    %v1138 = vrcp.pop %v1137
    %v1139 = vmul.f32 %v1137, %v1138
    %v1140 = vsub.f32 1.0, %v1139
    %v1141 = vmul.f32 %v1138, %v1140
    %v1142 = vadd.f32 %v1138, %v1141
    %vm1143 = vweird.f32 %v1137
    %vm1144 = vweird.f32 %v1138
    %vm1145 = vmor %vm1143, %vm1144
    %v1146 = vsel %vm1145, %v1138, %v1142
    %v1147 = vand.u32 2147483647, %v1137
    %vm1148 = vcmp.eq.f32.partialorder %v1147, 8.507059e+37
    %v1149 = vand.u32 %v1137, 2147483648
    %v1150 = vor.u32 1.1754944e-38, %v1149
    %v1151 = vsel %vm1148, %v1150, %v1146
    %v1152 = vmul.f32 1.0, %v1151
    %v1153 = vmul.f32 %v1132, %v1008
    %v1154 = vmul.f32 %v1113, %v1133
    %v1155 = vadd.f32 %v1153, %v1154
    %v1156 = vtanh.pop %v1155
    %v1157 = vmul.f32 %v1152, %v1156
    %1158 = vmatpush.msra.mxu0 %v503
    %1159 = vmatpush.msra.mxu0 %v499
    %1160 = vmatpush.msra.mxu0 %v495
    %1161 = vmatpush.msra.mxu0 %v491
    %1162 = vmatpush.msra.mxu0 %v487
    %1163 = vmatpush.msra.mxu0 %v483
    %1164 = vmatpush.msra.mxu0 %v479
    %1165 = vmatpush.msra.mxu0 %v475
    %1166 = vmatpush.msra.mxu0 %v471
    %1167 = vmatpush.msra.mxu0 %v467
    %1168 = vmatpush.msra.mxu0 %v463
    %1169 = vmatpush.msra.mxu0 %v459
    %1170 = vmatpush.msra.mxu0 %v455
    %1171 = vmatpush.msra.mxu0 %v451
    %1172 = vmatpush.msra.mxu0 %v447
    %1173 = vmatpush.msra.mxu0 %v443
    %1174 = vmatmul.f32.gmra.mxu0 %v1157
    %v1175 = vpop.f32.mrf.mxu0
    %v1176 = vadd.f32 0.0, %v1175
    %1177 = vdwg.mxu0
    %1178 = vmatpush.msra.mxu0 %v504
    %1179 = vmatpush.msra.mxu0 %v500
    %1180 = vmatpush.msra.mxu0 %v496
    %1181 = vmatpush.msra.mxu0 %v492
    %1182 = vmatpush.msra.mxu0 %v488
    %1183 = vmatpush.msra.mxu0 %v484
    %1184 = vmatpush.msra.mxu0 %v480
    %1185 = vmatpush.msra.mxu0 %v476
    %1186 = vmatpush.msra.mxu0 %v472
    %1187 = vmatpush.msra.mxu0 %v468
    %1188 = vmatpush.msra.mxu0 %v464
    %1189 = vmatpush.msra.mxu0 %v460
    %1190 = vmatpush.msra.mxu0 %v456
    %1191 = vmatpush.msra.mxu0 %v452
    %1192 = vmatpush.msra.mxu0 %v448
    %1193 = vmatpush.msra.mxu0 %v444
    %1194 = vmatmul.f32.gmra.mxu0 %v1157
    %v1195 = vpop.f32.mrf.mxu0
    %v1196 = vadd.f32 0.0, %v1195
    %1197 = vdwg.mxu0
    %1198 = vmatpush.msra.mxu0 %v505
    %1199 = vmatpush.msra.mxu0 %v501
    %1200 = vmatpush.msra.mxu0 %v497
    %1201 = vmatpush.msra.mxu0 %v493
    %1202 = vmatpush.msra.mxu0 %v489
    %1203 = vmatpush.msra.mxu0 %v485
    %1204 = vmatpush.msra.mxu0 %v481
    %1205 = vmatpush.msra.mxu0 %v477
    %1206 = vmatpush.msra.mxu0 %v473
    %1207 = vmatpush.msra.mxu0 %v469
    %1208 = vmatpush.msra.mxu0 %v465
    %1209 = vmatpush.msra.mxu0 %v461
    %1210 = vmatpush.msra.mxu0 %v457
    %1211 = vmatpush.msra.mxu0 %v453
    %1212 = vmatpush.msra.mxu0 %v449
    %1213 = vmatpush.msra.mxu0 %v445
    %1214 = vmatmul.f32.gmra.mxu0 %v1157
    %v1215 = vpop.f32.mrf.mxu0
    %v1216 = vadd.f32 0.0, %v1215
    %1217 = vdwg.mxu0
    %1218 = vmatpush.msra.mxu0 %v506
    %1219 = vmatpush.msra.mxu0 %v502
    %1220 = vmatpush.msra.mxu0 %v498
    %1221 = vmatpush.msra.mxu0 %v494
    %1222 = vmatpush.msra.mxu0 %v490
    %1223 = vmatpush.msra.mxu0 %v486
    %1224 = vmatpush.msra.mxu0 %v482
    %1225 = vmatpush.msra.mxu0 %v478
    %1226 = vmatpush.msra.mxu0 %v474
    %1227 = vmatpush.msra.mxu0 %v470
    %1228 = vmatpush.msra.mxu0 %v466
    %1229 = vmatpush.msra.mxu0 %v462
    %1230 = vmatpush.msra.mxu0 %v458
    %1231 = vmatpush.msra.mxu0 %v454
    %1232 = vmatpush.msra.mxu0 %v450
    %1233 = vmatpush.msra.mxu0 %v446
    %1234 = vmatmul.f32.gmra.mxu0 %v1157
    %v1235 = vpop.f32.mrf.mxu0
    %v1236 = vadd.f32 0.0, %v1235
    %1237 = vdwg.mxu0
    %v1238 = vadd.f32 %v216, %v1176
    %v1239 = vadd.f32 %v281, %v1196
    %v1240 = vadd.f32 %v346, %v1216
    %v1241 = vadd.f32 %v411, %v1236
    %v1242 = vxor.u32 %v1238, 2147483648
    %v1243 = vmul.f32 %v1242, 1.442695
    %v1244 = vpow.pop %v1243
    %v1245 = vadd.f32 %v1244, 1.0
    %v1246 = vrcp.pop %v1245
    %v1247 = vmul.f32 %v1245, %v1246
    %v1248 = vsub.f32 1.0, %v1247
    %v1249 = vmul.f32 %v1246, %v1248
    %v1250 = vadd.f32 %v1246, %v1249
    %vm1251 = vweird.f32 %v1245
    %vm1252 = vweird.f32 %v1246
    %vm1253 = vmor %vm1251, %vm1252
    %v1254 = vsel %vm1253, %v1246, %v1250
    %v1255 = vand.u32 2147483647, %v1245
    %vm1256 = vcmp.eq.f32.partialorder %v1255, 8.507059e+37
    %v1257 = vand.u32 %v1245, 2147483648
    %v1258 = vor.u32 1.1754944e-38, %v1257
    %v1259 = vsel %vm1256, %v1258, %v1254
    %v1260 = vmul.f32 1.0, %v1259
    %v1261 = vxor.u32 %v1239, 2147483648
    %v1262 = vmul.f32 %v1261, 1.442695
    %v1263 = vpow.pop %v1262
    %v1264 = vadd.f32 %v1263, 1.0
    %v1265 = vrcp.pop %v1264
    %v1266 = vmul.f32 %v1264, %v1265
    %v1267 = vsub.f32 1.0, %v1266
    %v1268 = vmul.f32 %v1265, %v1267
    %v1269 = vadd.f32 %v1265, %v1268
    %vm1270 = vweird.f32 %v1264
    %vm1271 = vweird.f32 %v1265
    %vm1272 = vmor %vm1270, %vm1271
    %v1273 = vsel %vm1272, %v1265, %v1269
    %v1274 = vand.u32 2147483647, %v1264
    %vm1275 = vcmp.eq.f32.partialorder %v1274, 8.507059e+37
    %v1276 = vand.u32 %v1264, 2147483648
    %v1277 = vor.u32 1.1754944e-38, %v1276
    %v1278 = vsel %vm1275, %v1277, %v1273
    %v1279 = vmul.f32 1.0, %v1278
    %v1280 = vtanh.pop %v1240
    %v1281 = vxor.u32 %v1241, 2147483648
    %v1282 = vmul.f32 %v1281, 1.442695
    %v1283 = vpow.pop %v1282
    %v1284 = vadd.f32 %v1283, 1.0
    %v1285 = vrcp.pop %v1284
    %v1286 = vmul.f32 %v1284, %v1285
    %v1287 = vsub.f32 1.0, %v1286
    %v1288 = vmul.f32 %v1285, %v1287
    %v1289 = vadd.f32 %v1285, %v1288
    %vm1290 = vweird.f32 %v1284
    %vm1291 = vweird.f32 %v1285
    %vm1292 = vmor %vm1290, %vm1291
    %v1293 = vsel %vm1292, %v1285, %v1289
    %v1294 = vand.u32 2147483647, %v1284
    %vm1295 = vcmp.eq.f32.partialorder %v1294, 8.507059e+37
    %v1296 = vand.u32 %v1284, 2147483648
    %v1297 = vor.u32 1.1754944e-38, %v1296
    %v1298 = vsel %vm1295, %v1297, %v1293
    %v1299 = vmul.f32 1.0, %v1298
    %v1300 = vmul.f32 %v1279, %v1155
    %v1301 = vmul.f32 %v1260, %v1280
    %v1302 = vadd.f32 %v1300, %v1301
    %v1303 = vtanh.pop %v1302
    %v1304 = vmul.f32 %v1299, %v1303
    %1305 = vmatpush.msra.mxu0 %v503
    %1306 = vmatpush.msra.mxu0 %v499
    %1307 = vmatpush.msra.mxu0 %v495
    %1308 = vmatpush.msra.mxu0 %v491
    %1309 = vmatpush.msra.mxu0 %v487
    %1310 = vmatpush.msra.mxu0 %v483
    %1311 = vmatpush.msra.mxu0 %v479
    %1312 = vmatpush.msra.mxu0 %v475
    %1313 = vmatpush.msra.mxu0 %v471
    %1314 = vmatpush.msra.mxu0 %v467
    %1315 = vmatpush.msra.mxu0 %v463
    %1316 = vmatpush.msra.mxu0 %v459
    %1317 = vmatpush.msra.mxu0 %v455
    %1318 = vmatpush.msra.mxu0 %v451
    %1319 = vmatpush.msra.mxu0 %v447
    %1320 = vmatpush.msra.mxu0 %v443
    %1321 = vmatmul.f32.gmra.mxu0 %v1304
    %v1322 = vpop.f32.mrf.mxu0
    %v1323 = vadd.f32 0.0, %v1322
    %1324 = vdwg.mxu0
    %1325 = vmatpush.msra.mxu0 %v504
    %1326 = vmatpush.msra.mxu0 %v500
    %1327 = vmatpush.msra.mxu0 %v496
    %1328 = vmatpush.msra.mxu0 %v492
    %1329 = vmatpush.msra.mxu0 %v488
    %1330 = vmatpush.msra.mxu0 %v484
    %1331 = vmatpush.msra.mxu0 %v480
    %1332 = vmatpush.msra.mxu0 %v476
    %1333 = vmatpush.msra.mxu0 %v472
    %1334 = vmatpush.msra.mxu0 %v468
    %1335 = vmatpush.msra.mxu0 %v464
    %1336 = vmatpush.msra.mxu0 %v460
    %1337 = vmatpush.msra.mxu0 %v456
    %1338 = vmatpush.msra.mxu0 %v452
    %1339 = vmatpush.msra.mxu0 %v448
    %1340 = vmatpush.msra.mxu0 %v444
    %1341 = vmatmul.f32.gmra.mxu0 %v1304
    %v1342 = vpop.f32.mrf.mxu0
    %v1343 = vadd.f32 0.0, %v1342
    %1344 = vdwg.mxu0
    %1345 = vmatpush.msra.mxu0 %v505
    %1346 = vmatpush.msra.mxu0 %v501
    %1347 = vmatpush.msra.mxu0 %v497
    %1348 = vmatpush.msra.mxu0 %v493
    %1349 = vmatpush.msra.mxu0 %v489
    %1350 = vmatpush.msra.mxu0 %v485
    %1351 = vmatpush.msra.mxu0 %v481
    %1352 = vmatpush.msra.mxu0 %v477
    %1353 = vmatpush.msra.mxu0 %v473
    %1354 = vmatpush.msra.mxu0 %v469
    %1355 = vmatpush.msra.mxu0 %v465
    %1356 = vmatpush.msra.mxu0 %v461
    %1357 = vmatpush.msra.mxu0 %v457
    %1358 = vmatpush.msra.mxu0 %v453
    %1359 = vmatpush.msra.mxu0 %v449
    %1360 = vmatpush.msra.mxu0 %v445
    %1361 = vmatmul.f32.gmra.mxu0 %v1304
    %v1362 = vpop.f32.mrf.mxu0
    %v1363 = vadd.f32 0.0, %v1362
    %1364 = vdwg.mxu0
    %1365 = vmatpush.msra.mxu0 %v506
    %1366 = vmatpush.msra.mxu0 %v502
    %1367 = vmatpush.msra.mxu0 %v498
    %1368 = vmatpush.msra.mxu0 %v494
    %1369 = vmatpush.msra.mxu0 %v490
    %1370 = vmatpush.msra.mxu0 %v486
    %1371 = vmatpush.msra.mxu0 %v482
    %1372 = vmatpush.msra.mxu0 %v478
    %1373 = vmatpush.msra.mxu0 %v474
    %1374 = vmatpush.msra.mxu0 %v470
    %1375 = vmatpush.msra.mxu0 %v466
    %1376 = vmatpush.msra.mxu0 %v462
    %1377 = vmatpush.msra.mxu0 %v458
    %1378 = vmatpush.msra.mxu0 %v454
    %1379 = vmatpush.msra.mxu0 %v450
    %1380 = vmatpush.msra.mxu0 %v446
    %1381 = vmatmul.f32.gmra.mxu0 %v1304
    %v1382 = vpop.f32.mrf.mxu0
    %v1383 = vadd.f32 0.0, %v1382
    %1384 = vdwg.mxu0
    %v1385 = vadd.f32 %v219, %v1323
    %v1386 = vadd.f32 %v284, %v1343
    %v1387 = vadd.f32 %v349, %v1363
    %v1388 = vadd.f32 %v414, %v1383
    %v1389 = vxor.u32 %v1385, 2147483648
    %v1390 = vmul.f32 %v1389, 1.442695
    %v1391 = vpow.pop %v1390
    %v1392 = vadd.f32 %v1391, 1.0
    %v1393 = vrcp.pop %v1392
    %v1394 = vmul.f32 %v1392, %v1393
    %v1395 = vsub.f32 1.0, %v1394
    %v1396 = vmul.f32 %v1393, %v1395
    %v1397 = vadd.f32 %v1393, %v1396
    %vm1398 = vweird.f32 %v1392
    %vm1399 = vweird.f32 %v1393
    %vm1400 = vmor %vm1398, %vm1399
    %v1401 = vsel %vm1400, %v1393, %v1397
    %v1402 = vand.u32 2147483647, %v1392
    %vm1403 = vcmp.eq.f32.partialorder %v1402, 8.507059e+37
    %v1404 = vand.u32 %v1392, 2147483648
    %v1405 = vor.u32 1.1754944e-38, %v1404
    %v1406 = vsel %vm1403, %v1405, %v1401
    %v1407 = vmul.f32 1.0, %v1406
    %v1408 = vxor.u32 %v1386, 2147483648
    %v1409 = vmul.f32 %v1408, 1.442695
    %v1410 = vpow.pop %v1409
    %v1411 = vadd.f32 %v1410, 1.0
    %v1412 = vrcp.pop %v1411
    %v1413 = vmul.f32 %v1411, %v1412
    %v1414 = vsub.f32 1.0, %v1413
    %v1415 = vmul.f32 %v1412, %v1414
    %v1416 = vadd.f32 %v1412, %v1415
    %vm1417 = vweird.f32 %v1411
    %vm1418 = vweird.f32 %v1412
    %vm1419 = vmor %vm1417, %vm1418
    %v1420 = vsel %vm1419, %v1412, %v1416
    %v1421 = vand.u32 2147483647, %v1411
    %vm1422 = vcmp.eq.f32.partialorder %v1421, 8.507059e+37
    %v1423 = vand.u32 %v1411, 2147483648
    %v1424 = vor.u32 1.1754944e-38, %v1423
    %v1425 = vsel %vm1422, %v1424, %v1420
    %v1426 = vmul.f32 1.0, %v1425
    %v1427 = vtanh.pop %v1387
    %v1428 = vxor.u32 %v1388, 2147483648
    %v1429 = vmul.f32 %v1428, 1.442695
    %v1430 = vpow.pop %v1429
    %v1431 = vadd.f32 %v1430, 1.0
    %v1432 = vrcp.pop %v1431
    %v1433 = vmul.f32 %v1431, %v1432
    %v1434 = vsub.f32 1.0, %v1433
    %v1435 = vmul.f32 %v1432, %v1434
    %v1436 = vadd.f32 %v1432, %v1435
    %vm1437 = vweird.f32 %v1431
    %vm1438 = vweird.f32 %v1432
    %vm1439 = vmor %vm1437, %vm1438
    %v1440 = vsel %vm1439, %v1432, %v1436
    %v1441 = vand.u32 2147483647, %v1431
    %vm1442 = vcmp.eq.f32.partialorder %v1441, 8.507059e+37
    %v1443 = vand.u32 %v1431, 2147483648
    %v1444 = vor.u32 1.1754944e-38, %v1443
    %v1445 = vsel %vm1442, %v1444, %v1440
    %v1446 = vmul.f32 1.0, %v1445
    %v1447 = vmul.f32 %v1426, %v1302
    %v1448 = vmul.f32 %v1407, %v1427
    %v1449 = vadd.f32 %v1447, %v1448
    %v1450 = vtanh.pop %v1449
    %v1451 = vmul.f32 %v1446, %v1450
    %1452 = vmatpush.msra.mxu0 %v503
    %1453 = vmatpush.msra.mxu0 %v499
    %1454 = vmatpush.msra.mxu0 %v495
    %1455 = vmatpush.msra.mxu0 %v491
    %1456 = vmatpush.msra.mxu0 %v487
    %1457 = vmatpush.msra.mxu0 %v483
    %1458 = vmatpush.msra.mxu0 %v479
    %1459 = vmatpush.msra.mxu0 %v475
    %1460 = vmatpush.msra.mxu0 %v471
    %1461 = vmatpush.msra.mxu0 %v467
    %1462 = vmatpush.msra.mxu0 %v463
    %1463 = vmatpush.msra.mxu0 %v459
    %1464 = vmatpush.msra.mxu0 %v455
    %1465 = vmatpush.msra.mxu0 %v451
    %1466 = vmatpush.msra.mxu0 %v447
    %1467 = vmatpush.msra.mxu0 %v443
    %1468 = vmatmul.f32.gmra.mxu0 %v1451
    %v1469 = vpop.f32.mrf.mxu0
    %v1470 = vadd.f32 0.0, %v1469
    %1471 = vdwg.mxu0
    %1472 = vmatpush.msra.mxu0 %v504
    %1473 = vmatpush.msra.mxu0 %v500
    %1474 = vmatpush.msra.mxu0 %v496
    %1475 = vmatpush.msra.mxu0 %v492
    %1476 = vmatpush.msra.mxu0 %v488
    %1477 = vmatpush.msra.mxu0 %v484
    %1478 = vmatpush.msra.mxu0 %v480
    %1479 = vmatpush.msra.mxu0 %v476
    %1480 = vmatpush.msra.mxu0 %v472
    %1481 = vmatpush.msra.mxu0 %v468
    %1482 = vmatpush.msra.mxu0 %v464
    %1483 = vmatpush.msra.mxu0 %v460
    %1484 = vmatpush.msra.mxu0 %v456
    %1485 = vmatpush.msra.mxu0 %v452
    %1486 = vmatpush.msra.mxu0 %v448
    %1487 = vmatpush.msra.mxu0 %v444
    %1488 = vmatmul.f32.gmra.mxu0 %v1451
    %v1489 = vpop.f32.mrf.mxu0
    %v1490 = vadd.f32 0.0, %v1489
    %1491 = vdwg.mxu0
    %1492 = vmatpush.msra.mxu0 %v505
    %1493 = vmatpush.msra.mxu0 %v501
    %1494 = vmatpush.msra.mxu0 %v497
    %1495 = vmatpush.msra.mxu0 %v493
    %1496 = vmatpush.msra.mxu0 %v489
    %1497 = vmatpush.msra.mxu0 %v485
    %1498 = vmatpush.msra.mxu0 %v481
    %1499 = vmatpush.msra.mxu0 %v477
    %1500 = vmatpush.msra.mxu0 %v473
    %1501 = vmatpush.msra.mxu0 %v469
    %1502 = vmatpush.msra.mxu0 %v465
    %1503 = vmatpush.msra.mxu0 %v461
    %1504 = vmatpush.msra.mxu0 %v457
    %1505 = vmatpush.msra.mxu0 %v453
    %1506 = vmatpush.msra.mxu0 %v449
    %1507 = vmatpush.msra.mxu0 %v445
    %1508 = vmatmul.f32.gmra.mxu0 %v1451
    %v1509 = vpop.f32.mrf.mxu0
    %v1510 = vadd.f32 0.0, %v1509
    %1511 = vdwg.mxu0
    %1512 = vmatpush.msra.mxu0 %v506
    %1513 = vmatpush.msra.mxu0 %v502
    %1514 = vmatpush.msra.mxu0 %v498
    %1515 = vmatpush.msra.mxu0 %v494
    %1516 = vmatpush.msra.mxu0 %v490
    %1517 = vmatpush.msra.mxu0 %v486
    %1518 = vmatpush.msra.mxu0 %v482
    %1519 = vmatpush.msra.mxu0 %v478
    %1520 = vmatpush.msra.mxu0 %v474
    %1521 = vmatpush.msra.mxu0 %v470
    %1522 = vmatpush.msra.mxu0 %v466
    %1523 = vmatpush.msra.mxu0 %v462
    %1524 = vmatpush.msra.mxu0 %v458
    %1525 = vmatpush.msra.mxu0 %v454
    %1526 = vmatpush.msra.mxu0 %v450
    %1527 = vmatpush.msra.mxu0 %v446
    %1528 = vmatmul.f32.gmra.mxu0 %v1451
    %v1529 = vpop.f32.mrf.mxu0
    %v1530 = vadd.f32 0.0, %v1529
    %1531 = vdwg.mxu0
    %v1532 = vadd.f32 %v222, %v1470
    %v1533 = vadd.f32 %v287, %v1490
    %v1534 = vadd.f32 %v352, %v1510
    %v1535 = vadd.f32 %v417, %v1530
    %v1536 = vxor.u32 %v1532, 2147483648
    %v1537 = vmul.f32 %v1536, 1.442695
    %v1538 = vpow.pop %v1537
    %v1539 = vadd.f32 %v1538, 1.0
    %v1540 = vrcp.pop %v1539
    %v1541 = vmul.f32 %v1539, %v1540
    %v1542 = vsub.f32 1.0, %v1541
    %v1543 = vmul.f32 %v1540, %v1542
    %v1544 = vadd.f32 %v1540, %v1543
    %vm1545 = vweird.f32 %v1539
    %vm1546 = vweird.f32 %v1540
    %vm1547 = vmor %vm1545, %vm1546
    %v1548 = vsel %vm1547, %v1540, %v1544
    %v1549 = vand.u32 2147483647, %v1539
    %vm1550 = vcmp.eq.f32.partialorder %v1549, 8.507059e+37
    %v1551 = vand.u32 %v1539, 2147483648
    %v1552 = vor.u32 1.1754944e-38, %v1551
    %v1553 = vsel %vm1550, %v1552, %v1548
    %v1554 = vmul.f32 1.0, %v1553
    %v1555 = vxor.u32 %v1533, 2147483648
    %v1556 = vmul.f32 %v1555, 1.442695
    %v1557 = vpow.pop %v1556
    %v1558 = vadd.f32 %v1557, 1.0
    %v1559 = vrcp.pop %v1558
    %v1560 = vmul.f32 %v1558, %v1559
    %v1561 = vsub.f32 1.0, %v1560
    %v1562 = vmul.f32 %v1559, %v1561
    %v1563 = vadd.f32 %v1559, %v1562
    %vm1564 = vweird.f32 %v1558
    %vm1565 = vweird.f32 %v1559
    %vm1566 = vmor %vm1564, %vm1565
    %v1567 = vsel %vm1566, %v1559, %v1563
    %v1568 = vand.u32 2147483647, %v1558
    %vm1569 = vcmp.eq.f32.partialorder %v1568, 8.507059e+37
    %v1570 = vand.u32 %v1558, 2147483648
    %v1571 = vor.u32 1.1754944e-38, %v1570
    %v1572 = vsel %vm1569, %v1571, %v1567
    %v1573 = vmul.f32 1.0, %v1572
    %v1574 = vtanh.pop %v1534
    %v1575 = vxor.u32 %v1535, 2147483648
    %v1576 = vmul.f32 %v1575, 1.442695
    %v1577 = vpow.pop %v1576
    %v1578 = vadd.f32 %v1577, 1.0
    %v1579 = vrcp.pop %v1578
    %v1580 = vmul.f32 %v1578, %v1579
    %v1581 = vsub.f32 1.0, %v1580
    %v1582 = vmul.f32 %v1579, %v1581
    %v1583 = vadd.f32 %v1579, %v1582
    %vm1584 = vweird.f32 %v1578
    %vm1585 = vweird.f32 %v1579
    %vm1586 = vmor %vm1584, %vm1585
    %v1587 = vsel %vm1586, %v1579, %v1583
    %v1588 = vand.u32 2147483647, %v1578
    %vm1589 = vcmp.eq.f32.partialorder %v1588, 8.507059e+37
    %v1590 = vand.u32 %v1578, 2147483648
    %v1591 = vor.u32 1.1754944e-38, %v1590
    %v1592 = vsel %vm1589, %v1591, %v1587
    %v1593 = vmul.f32 1.0, %v1592
    %v1594 = vmul.f32 %v1573, %v1449
    %v1595 = vmul.f32 %v1554, %v1574
    %v1596 = vadd.f32 %v1594, %v1595
    %v1597 = vtanh.pop %v1596
    %v1598 = vmul.f32 %v1593, %v1597
    %1599 = vmatpush.msra.mxu0 %v503
    %1600 = vmatpush.msra.mxu0 %v499
    %1601 = vmatpush.msra.mxu0 %v495
    %1602 = vmatpush.msra.mxu0 %v491
    %1603 = vmatpush.msra.mxu0 %v487
    %1604 = vmatpush.msra.mxu0 %v483
    %1605 = vmatpush.msra.mxu0 %v479
    %1606 = vmatpush.msra.mxu0 %v475
    %1607 = vmatpush.msra.mxu0 %v471
    %1608 = vmatpush.msra.mxu0 %v467
    %1609 = vmatpush.msra.mxu0 %v463
    %1610 = vmatpush.msra.mxu0 %v459
    %1611 = vmatpush.msra.mxu0 %v455
    %1612 = vmatpush.msra.mxu0 %v451
    %1613 = vmatpush.msra.mxu0 %v447
    %1614 = vmatpush.msra.mxu0 %v443
    %1615 = vmatmul.f32.gmra.mxu0 %v1598
    %v1616 = vpop.f32.mrf.mxu0
    %v1617 = vadd.f32 0.0, %v1616
    %1618 = vdwg.mxu0
    %1619 = vmatpush.msra.mxu0 %v504
    %1620 = vmatpush.msra.mxu0 %v500
    %1621 = vmatpush.msra.mxu0 %v496
    %1622 = vmatpush.msra.mxu0 %v492
    %1623 = vmatpush.msra.mxu0 %v488
    %1624 = vmatpush.msra.mxu0 %v484
    %1625 = vmatpush.msra.mxu0 %v480
    %1626 = vmatpush.msra.mxu0 %v476
    %1627 = vmatpush.msra.mxu0 %v472
    %1628 = vmatpush.msra.mxu0 %v468
    %1629 = vmatpush.msra.mxu0 %v464
    %1630 = vmatpush.msra.mxu0 %v460
    %1631 = vmatpush.msra.mxu0 %v456
    %1632 = vmatpush.msra.mxu0 %v452
    %1633 = vmatpush.msra.mxu0 %v448
    %1634 = vmatpush.msra.mxu0 %v444
    %1635 = vmatmul.f32.gmra.mxu0 %v1598
    %v1636 = vpop.f32.mrf.mxu0
    %v1637 = vadd.f32 0.0, %v1636
    %1638 = vdwg.mxu0
    %1639 = vmatpush.msra.mxu0 %v505
    %1640 = vmatpush.msra.mxu0 %v501
    %1641 = vmatpush.msra.mxu0 %v497
    %1642 = vmatpush.msra.mxu0 %v493
    %1643 = vmatpush.msra.mxu0 %v489
    %1644 = vmatpush.msra.mxu0 %v485
    %1645 = vmatpush.msra.mxu0 %v481
    %1646 = vmatpush.msra.mxu0 %v477
    %1647 = vmatpush.msra.mxu0 %v473
    %1648 = vmatpush.msra.mxu0 %v469
    %1649 = vmatpush.msra.mxu0 %v465
    %1650 = vmatpush.msra.mxu0 %v461
    %1651 = vmatpush.msra.mxu0 %v457
    %1652 = vmatpush.msra.mxu0 %v453
    %1653 = vmatpush.msra.mxu0 %v449
    %1654 = vmatpush.msra.mxu0 %v445
    %1655 = vmatmul.f32.gmra.mxu0 %v1598
    %v1656 = vpop.f32.mrf.mxu0
    %v1657 = vadd.f32 0.0, %v1656
    %1658 = vdwg.mxu0
    %1659 = vmatpush.msra.mxu0 %v506
    %1660 = vmatpush.msra.mxu0 %v502
    %1661 = vmatpush.msra.mxu0 %v498
    %1662 = vmatpush.msra.mxu0 %v494
    %1663 = vmatpush.msra.mxu0 %v490
    %1664 = vmatpush.msra.mxu0 %v486
    %1665 = vmatpush.msra.mxu0 %v482
    %1666 = vmatpush.msra.mxu0 %v478
    %1667 = vmatpush.msra.mxu0 %v474
    %1668 = vmatpush.msra.mxu0 %v470
    %1669 = vmatpush.msra.mxu0 %v466
    %1670 = vmatpush.msra.mxu0 %v462
    %1671 = vmatpush.msra.mxu0 %v458
    %1672 = vmatpush.msra.mxu0 %v454
    %1673 = vmatpush.msra.mxu0 %v450
    %1674 = vmatpush.msra.mxu0 %v446
    %1675 = vmatmul.f32.gmra.mxu0 %v1598
    %v1676 = vpop.f32.mrf.mxu0
    %v1677 = vadd.f32 0.0, %v1676
    %1678 = vdwg.mxu0
    %v1679 = vadd.f32 %v225, %v1617
    %v1680 = vadd.f32 %v290, %v1637
    %v1681 = vadd.f32 %v355, %v1657
    %v1682 = vadd.f32 %v420, %v1677
    %v1683 = vxor.u32 %v1679, 2147483648
    %v1684 = vmul.f32 %v1683, 1.442695
    %v1685 = vpow.pop %v1684
    %v1686 = vadd.f32 %v1685, 1.0
    %v1687 = vrcp.pop %v1686
    %v1688 = vmul.f32 %v1686, %v1687
    %v1689 = vsub.f32 1.0, %v1688
    %v1690 = vmul.f32 %v1687, %v1689
    %v1691 = vadd.f32 %v1687, %v1690
    %vm1692 = vweird.f32 %v1686
    %vm1693 = vweird.f32 %v1687
    %vm1694 = vmor %vm1692, %vm1693
    %v1695 = vsel %vm1694, %v1687, %v1691
    %v1696 = vand.u32 2147483647, %v1686
    %vm1697 = vcmp.eq.f32.partialorder %v1696, 8.507059e+37
    %v1698 = vand.u32 %v1686, 2147483648
    %v1699 = vor.u32 1.1754944e-38, %v1698
    %v1700 = vsel %vm1697, %v1699, %v1695
    %v1701 = vmul.f32 1.0, %v1700
    %v1702 = vxor.u32 %v1680, 2147483648
    %v1703 = vmul.f32 %v1702, 1.442695
    %v1704 = vpow.pop %v1703
    %v1705 = vadd.f32 %v1704, 1.0
    %v1706 = vrcp.pop %v1705
    %v1707 = vmul.f32 %v1705, %v1706
    %v1708 = vsub.f32 1.0, %v1707
    %v1709 = vmul.f32 %v1706, %v1708
    %v1710 = vadd.f32 %v1706, %v1709
    %vm1711 = vweird.f32 %v1705
    %vm1712 = vweird.f32 %v1706
    %vm1713 = vmor %vm1711, %vm1712
    %v1714 = vsel %vm1713, %v1706, %v1710
    %v1715 = vand.u32 2147483647, %v1705
    %vm1716 = vcmp.eq.f32.partialorder %v1715, 8.507059e+37
    %v1717 = vand.u32 %v1705, 2147483648
    %v1718 = vor.u32 1.1754944e-38, %v1717
    %v1719 = vsel %vm1716, %v1718, %v1714
    %v1720 = vmul.f32 1.0, %v1719
    %v1721 = vtanh.pop %v1681
    %v1722 = vxor.u32 %v1682, 2147483648
    %v1723 = vmul.f32 %v1722, 1.442695
    %v1724 = vpow.pop %v1723
    %v1725 = vadd.f32 %v1724, 1.0
    %v1726 = vrcp.pop %v1725
    %v1727 = vmul.f32 %v1725, %v1726
    %v1728 = vsub.f32 1.0, %v1727
    %v1729 = vmul.f32 %v1726, %v1728
    %v1730 = vadd.f32 %v1726, %v1729
    %vm1731 = vweird.f32 %v1725
    %vm1732 = vweird.f32 %v1726
    %vm1733 = vmor %vm1731, %vm1732
    %v1734 = vsel %vm1733, %v1726, %v1730
    %v1735 = vand.u32 2147483647, %v1725
    %vm1736 = vcmp.eq.f32.partialorder %v1735, 8.507059e+37
    %v1737 = vand.u32 %v1725, 2147483648
    %v1738 = vor.u32 1.1754944e-38, %v1737
    %v1739 = vsel %vm1736, %v1738, %v1734
    %v1740 = vmul.f32 1.0, %v1739
    %v1741 = vmul.f32 %v1720, %v1596
    %v1742 = vmul.f32 %v1701, %v1721
    %v1743 = vadd.f32 %v1741, %v1742
    %v1744 = vtanh.pop %v1743
    %v1745 = vmul.f32 %v1740, %v1744
    %1746 = vmatpush.msra.mxu0 %v503
    %1747 = vmatpush.msra.mxu0 %v499
    %1748 = vmatpush.msra.mxu0 %v495
    %1749 = vmatpush.msra.mxu0 %v491
    %1750 = vmatpush.msra.mxu0 %v487
    %1751 = vmatpush.msra.mxu0 %v483
    %1752 = vmatpush.msra.mxu0 %v479
    %1753 = vmatpush.msra.mxu0 %v475
    %1754 = vmatpush.msra.mxu0 %v471
    %1755 = vmatpush.msra.mxu0 %v467
    %1756 = vmatpush.msra.mxu0 %v463
    %1757 = vmatpush.msra.mxu0 %v459
    %1758 = vmatpush.msra.mxu0 %v455
    %1759 = vmatpush.msra.mxu0 %v451
    %1760 = vmatpush.msra.mxu0 %v447
    %1761 = vmatpush.msra.mxu0 %v443
    %1762 = vmatmul.f32.gmra.mxu0 %v1745
    %v1763 = vpop.f32.mrf.mxu0
    %v1764 = vadd.f32 0.0, %v1763
    %1765 = vdwg.mxu0
    %1766 = vmatpush.msra.mxu0 %v504
    %1767 = vmatpush.msra.mxu0 %v500
    %1768 = vmatpush.msra.mxu0 %v496
    %1769 = vmatpush.msra.mxu0 %v492
    %1770 = vmatpush.msra.mxu0 %v488
    %1771 = vmatpush.msra.mxu0 %v484
    %1772 = vmatpush.msra.mxu0 %v480
    %1773 = vmatpush.msra.mxu0 %v476
    %1774 = vmatpush.msra.mxu0 %v472
    %1775 = vmatpush.msra.mxu0 %v468
    %1776 = vmatpush.msra.mxu0 %v464
    %1777 = vmatpush.msra.mxu0 %v460
    %1778 = vmatpush.msra.mxu0 %v456
    %1779 = vmatpush.msra.mxu0 %v452
    %1780 = vmatpush.msra.mxu0 %v448
    %1781 = vmatpush.msra.mxu0 %v444
    %1782 = vmatmul.f32.gmra.mxu0 %v1745
    %v1783 = vpop.f32.mrf.mxu0
    %v1784 = vadd.f32 0.0, %v1783
    %1785 = vdwg.mxu0
    %1786 = vmatpush.msra.mxu0 %v505
    %1787 = vmatpush.msra.mxu0 %v501
    %1788 = vmatpush.msra.mxu0 %v497
    %1789 = vmatpush.msra.mxu0 %v493
    %1790 = vmatpush.msra.mxu0 %v489
    %1791 = vmatpush.msra.mxu0 %v485
    %1792 = vmatpush.msra.mxu0 %v481
    %1793 = vmatpush.msra.mxu0 %v477
    %1794 = vmatpush.msra.mxu0 %v473
    %1795 = vmatpush.msra.mxu0 %v469
    %1796 = vmatpush.msra.mxu0 %v465
    %1797 = vmatpush.msra.mxu0 %v461
    %1798 = vmatpush.msra.mxu0 %v457
    %1799 = vmatpush.msra.mxu0 %v453
    %1800 = vmatpush.msra.mxu0 %v449
    %1801 = vmatpush.msra.mxu0 %v445
    %1802 = vmatmul.f32.gmra.mxu0 %v1745
    %v1803 = vpop.f32.mrf.mxu0
    %v1804 = vadd.f32 0.0, %v1803
    %1805 = vdwg.mxu0
    %1806 = vmatpush.msra.mxu0 %v506
    %1807 = vmatpush.msra.mxu0 %v502
    %1808 = vmatpush.msra.mxu0 %v498
    %1809 = vmatpush.msra.mxu0 %v494
    %1810 = vmatpush.msra.mxu0 %v490
    %1811 = vmatpush.msra.mxu0 %v486
    %1812 = vmatpush.msra.mxu0 %v482
    %1813 = vmatpush.msra.mxu0 %v478
    %1814 = vmatpush.msra.mxu0 %v474
    %1815 = vmatpush.msra.mxu0 %v470
    %1816 = vmatpush.msra.mxu0 %v466
    %1817 = vmatpush.msra.mxu0 %v462
    %1818 = vmatpush.msra.mxu0 %v458
    %1819 = vmatpush.msra.mxu0 %v454
    %1820 = vmatpush.msra.mxu0 %v450
    %1821 = vmatpush.msra.mxu0 %v446
    %1822 = vmatmul.f32.gmra.mxu0 %v1745
    %v1823 = vpop.f32.mrf.mxu0
    %v1824 = vadd.f32 0.0, %v1823
    %1825 = vdwg.mxu0
    %v1826 = vadd.f32 %v228, %v1764
    %v1827 = vadd.f32 %v293, %v1784
    %v1828 = vadd.f32 %v358, %v1804
    %v1829 = vadd.f32 %v423, %v1824
    %v1830 = vxor.u32 %v1826, 2147483648
    %v1831 = vmul.f32 %v1830, 1.442695
    %v1832 = vpow.pop %v1831
    %v1833 = vadd.f32 %v1832, 1.0
    %v1834 = vrcp.pop %v1833
    %v1835 = vmul.f32 %v1833, %v1834
    %v1836 = vsub.f32 1.0, %v1835
    %v1837 = vmul.f32 %v1834, %v1836
    %v1838 = vadd.f32 %v1834, %v1837
    %vm1839 = vweird.f32 %v1833
    %vm1840 = vweird.f32 %v1834
    %vm1841 = vmor %vm1839, %vm1840
    %v1842 = vsel %vm1841, %v1834, %v1838
    %v1843 = vand.u32 2147483647, %v1833
    %vm1844 = vcmp.eq.f32.partialorder %v1843, 8.507059e+37
    %v1845 = vand.u32 %v1833, 2147483648
    %v1846 = vor.u32 1.1754944e-38, %v1845
    %v1847 = vsel %vm1844, %v1846, %v1842
    %v1848 = vmul.f32 1.0, %v1847
    %v1849 = vxor.u32 %v1827, 2147483648
    %v1850 = vmul.f32 %v1849, 1.442695
    %v1851 = vpow.pop %v1850
    %v1852 = vadd.f32 %v1851, 1.0
    %v1853 = vrcp.pop %v1852
    %v1854 = vmul.f32 %v1852, %v1853
    %v1855 = vsub.f32 1.0, %v1854
    %v1856 = vmul.f32 %v1853, %v1855
    %v1857 = vadd.f32 %v1853, %v1856
    %vm1858 = vweird.f32 %v1852
    %vm1859 = vweird.f32 %v1853
    %vm1860 = vmor %vm1858, %vm1859
    %v1861 = vsel %vm1860, %v1853, %v1857
    %v1862 = vand.u32 2147483647, %v1852
    %vm1863 = vcmp.eq.f32.partialorder %v1862, 8.507059e+37
    %v1864 = vand.u32 %v1852, 2147483648
    %v1865 = vor.u32 1.1754944e-38, %v1864
    %v1866 = vsel %vm1863, %v1865, %v1861
    %v1867 = vmul.f32 1.0, %v1866
    %v1868 = vtanh.pop %v1828
    %v1869 = vxor.u32 %v1829, 2147483648
    %v1870 = vmul.f32 %v1869, 1.442695
    %v1871 = vpow.pop %v1870
    %v1872 = vadd.f32 %v1871, 1.0
    %v1873 = vrcp.pop %v1872
    %v1874 = vmul.f32 %v1872, %v1873
    %v1875 = vsub.f32 1.0, %v1874
    %v1876 = vmul.f32 %v1873, %v1875
    %v1877 = vadd.f32 %v1873, %v1876
    %vm1878 = vweird.f32 %v1872
    %vm1879 = vweird.f32 %v1873
    %vm1880 = vmor %vm1878, %vm1879
    %v1881 = vsel %vm1880, %v1873, %v1877
    %v1882 = vand.u32 2147483647, %v1872
    %vm1883 = vcmp.eq.f32.partialorder %v1882, 8.507059e+37
    %v1884 = vand.u32 %v1872, 2147483648
    %v1885 = vor.u32 1.1754944e-38, %v1884
    %v1886 = vsel %vm1883, %v1885, %v1881
    %v1887 = vmul.f32 1.0, %v1886
    %v1888 = vmul.f32 %v1867, %v1743
    %v1889 = vmul.f32 %v1848, %v1868
    %v1890 = vadd.f32 %v1888, %v1889
    %v1891 = vtanh.pop %v1890
    %v1892 = vmul.f32 %v1887, %v1891
    %1893 = vmatpush.msra.mxu0 %v503
    %1894 = vmatpush.msra.mxu0 %v499
    %1895 = vmatpush.msra.mxu0 %v495
    %1896 = vmatpush.msra.mxu0 %v491
    %1897 = vmatpush.msra.mxu0 %v487
    %1898 = vmatpush.msra.mxu0 %v483
    %1899 = vmatpush.msra.mxu0 %v479
    %1900 = vmatpush.msra.mxu0 %v475
    %1901 = vmatpush.msra.mxu0 %v471
    %1902 = vmatpush.msra.mxu0 %v467
    %1903 = vmatpush.msra.mxu0 %v463
    %1904 = vmatpush.msra.mxu0 %v459
    %1905 = vmatpush.msra.mxu0 %v455
    %1906 = vmatpush.msra.mxu0 %v451
    %1907 = vmatpush.msra.mxu0 %v447
    %1908 = vmatpush.msra.mxu0 %v443
    %1909 = vmatmul.f32.gmra.mxu0 %v1892
    %v1910 = vpop.f32.mrf.mxu0
    %v1911 = vadd.f32 0.0, %v1910
    %1912 = vdwg.mxu0
    %1913 = vmatpush.msra.mxu0 %v504
    %1914 = vmatpush.msra.mxu0 %v500
    %1915 = vmatpush.msra.mxu0 %v496
    %1916 = vmatpush.msra.mxu0 %v492
    %1917 = vmatpush.msra.mxu0 %v488
    %1918 = vmatpush.msra.mxu0 %v484
    %1919 = vmatpush.msra.mxu0 %v480
    %1920 = vmatpush.msra.mxu0 %v476
    %1921 = vmatpush.msra.mxu0 %v472
    %1922 = vmatpush.msra.mxu0 %v468
    %1923 = vmatpush.msra.mxu0 %v464
    %1924 = vmatpush.msra.mxu0 %v460
    %1925 = vmatpush.msra.mxu0 %v456
    %1926 = vmatpush.msra.mxu0 %v452
    %1927 = vmatpush.msra.mxu0 %v448
    %1928 = vmatpush.msra.mxu0 %v444
    %1929 = vmatmul.f32.gmra.mxu0 %v1892
    %v1930 = vpop.f32.mrf.mxu0
    %v1931 = vadd.f32 0.0, %v1930
    %1932 = vdwg.mxu0
    %1933 = vmatpush.msra.mxu0 %v505
    %1934 = vmatpush.msra.mxu0 %v501
    %1935 = vmatpush.msra.mxu0 %v497
    %1936 = vmatpush.msra.mxu0 %v493
    %1937 = vmatpush.msra.mxu0 %v489
    %1938 = vmatpush.msra.mxu0 %v485
    %1939 = vmatpush.msra.mxu0 %v481
    %1940 = vmatpush.msra.mxu0 %v477
    %1941 = vmatpush.msra.mxu0 %v473
    %1942 = vmatpush.msra.mxu0 %v469
    %1943 = vmatpush.msra.mxu0 %v465
    %1944 = vmatpush.msra.mxu0 %v461
    %1945 = vmatpush.msra.mxu0 %v457
    %1946 = vmatpush.msra.mxu0 %v453
    %1947 = vmatpush.msra.mxu0 %v449
    %1948 = vmatpush.msra.mxu0 %v445
    %1949 = vmatmul.f32.gmra.mxu0 %v1892
    %v1950 = vpop.f32.mrf.mxu0
    %v1951 = vadd.f32 0.0, %v1950
    %1952 = vdwg.mxu0
    %1953 = vmatpush.msra.mxu0 %v506
    %1954 = vmatpush.msra.mxu0 %v502
    %1955 = vmatpush.msra.mxu0 %v498
    %1956 = vmatpush.msra.mxu0 %v494
    %1957 = vmatpush.msra.mxu0 %v490
    %1958 = vmatpush.msra.mxu0 %v486
    %1959 = vmatpush.msra.mxu0 %v482
    %1960 = vmatpush.msra.mxu0 %v478
    %1961 = vmatpush.msra.mxu0 %v474
    %1962 = vmatpush.msra.mxu0 %v470
    %1963 = vmatpush.msra.mxu0 %v466
    %1964 = vmatpush.msra.mxu0 %v462
    %1965 = vmatpush.msra.mxu0 %v458
    %1966 = vmatpush.msra.mxu0 %v454
    %1967 = vmatpush.msra.mxu0 %v450
    %1968 = vmatpush.msra.mxu0 %v446
    %1969 = vmatmul.f32.gmra.mxu0 %v1892
    %v1970 = vpop.f32.mrf.mxu0
    %v1971 = vadd.f32 0.0, %v1970
    %1972 = vdwg.mxu0
    %v1973 = vadd.f32 %v231, %v1911
    %v1974 = vadd.f32 %v296, %v1931
    %v1975 = vadd.f32 %v361, %v1951
    %v1976 = vadd.f32 %v426, %v1971
    %v1977 = vxor.u32 %v1973, 2147483648
    %v1978 = vmul.f32 %v1977, 1.442695
    %v1979 = vpow.pop %v1978
    %v1980 = vadd.f32 %v1979, 1.0
    %v1981 = vrcp.pop %v1980
    %v1982 = vmul.f32 %v1980, %v1981
    %v1983 = vsub.f32 1.0, %v1982
    %v1984 = vmul.f32 %v1981, %v1983
    %v1985 = vadd.f32 %v1981, %v1984
    %vm1986 = vweird.f32 %v1980
    %vm1987 = vweird.f32 %v1981
    %vm1988 = vmor %vm1986, %vm1987
    %v1989 = vsel %vm1988, %v1981, %v1985
    %v1990 = vand.u32 2147483647, %v1980
    %vm1991 = vcmp.eq.f32.partialorder %v1990, 8.507059e+37
    %v1992 = vand.u32 %v1980, 2147483648
    %v1993 = vor.u32 1.1754944e-38, %v1992
    %v1994 = vsel %vm1991, %v1993, %v1989
    %v1995 = vmul.f32 1.0, %v1994
    %v1996 = vxor.u32 %v1974, 2147483648
    %v1997 = vmul.f32 %v1996, 1.442695
    %v1998 = vpow.pop %v1997
    %v1999 = vadd.f32 %v1998, 1.0
    %v2000 = vrcp.pop %v1999
    %v2001 = vmul.f32 %v1999, %v2000
    %v2002 = vsub.f32 1.0, %v2001
    %v2003 = vmul.f32 %v2000, %v2002
    %v2004 = vadd.f32 %v2000, %v2003
    %vm2005 = vweird.f32 %v1999
    %vm2006 = vweird.f32 %v2000
    %vm2007 = vmor %vm2005, %vm2006
    %v2008 = vsel %vm2007, %v2000, %v2004
    %v2009 = vand.u32 2147483647, %v1999
    %vm2010 = vcmp.eq.f32.partialorder %v2009, 8.507059e+37
    %v2011 = vand.u32 %v1999, 2147483648
    %v2012 = vor.u32 1.1754944e-38, %v2011
    %v2013 = vsel %vm2010, %v2012, %v2008
    %v2014 = vmul.f32 1.0, %v2013
    %v2015 = vtanh.pop %v1975
    %v2016 = vxor.u32 %v1976, 2147483648
    %v2017 = vmul.f32 %v2016, 1.442695
    %v2018 = vpow.pop %v2017
    %v2019 = vadd.f32 %v2018, 1.0
    %v2020 = vrcp.pop %v2019
    %v2021 = vmul.f32 %v2019, %v2020
    %v2022 = vsub.f32 1.0, %v2021
    %v2023 = vmul.f32 %v2020, %v2022
    %v2024 = vadd.f32 %v2020, %v2023
    %vm2025 = vweird.f32 %v2019
    %vm2026 = vweird.f32 %v2020
    %vm2027 = vmor %vm2025, %vm2026
    %v2028 = vsel %vm2027, %v2020, %v2024
    %v2029 = vand.u32 2147483647, %v2019
    %vm2030 = vcmp.eq.f32.partialorder %v2029, 8.507059e+37
    %v2031 = vand.u32 %v2019, 2147483648
    %v2032 = vor.u32 1.1754944e-38, %v2031
    %v2033 = vsel %vm2030, %v2032, %v2028
    %v2034 = vmul.f32 1.0, %v2033
    %v2035 = vmul.f32 %v2014, %v1890
    %v2036 = vmul.f32 %v1995, %v2015
    %v2037 = vadd.f32 %v2035, %v2036
    %v2038 = vtanh.pop %v2037
    %v2039 = vmul.f32 %v2034, %v2038
    %2040 = vmatpush.msra.mxu0 %v503
    %2041 = vmatpush.msra.mxu0 %v499
    %2042 = vmatpush.msra.mxu0 %v495
    %2043 = vmatpush.msra.mxu0 %v491
    %2044 = vmatpush.msra.mxu0 %v487
    %2045 = vmatpush.msra.mxu0 %v483
    %2046 = vmatpush.msra.mxu0 %v479
    %2047 = vmatpush.msra.mxu0 %v475
    %2048 = vmatpush.msra.mxu0 %v471
    %2049 = vmatpush.msra.mxu0 %v467
    %2050 = vmatpush.msra.mxu0 %v463
    %2051 = vmatpush.msra.mxu0 %v459
    %2052 = vmatpush.msra.mxu0 %v455
    %2053 = vmatpush.msra.mxu0 %v451
    %2054 = vmatpush.msra.mxu0 %v447
    %2055 = vmatpush.msra.mxu0 %v443
    %2056 = vmatmul.f32.gmra.mxu0 %v2039
    %v2057 = vpop.f32.mrf.mxu0
    %v2058 = vadd.f32 0.0, %v2057
    %2059 = vdwg.mxu0
    %2060 = vmatpush.msra.mxu0 %v504
    %2061 = vmatpush.msra.mxu0 %v500
    %2062 = vmatpush.msra.mxu0 %v496
    %2063 = vmatpush.msra.mxu0 %v492
    %2064 = vmatpush.msra.mxu0 %v488
    %2065 = vmatpush.msra.mxu0 %v484
    %2066 = vmatpush.msra.mxu0 %v480
    %2067 = vmatpush.msra.mxu0 %v476
    %2068 = vmatpush.msra.mxu0 %v472
    %2069 = vmatpush.msra.mxu0 %v468
    %2070 = vmatpush.msra.mxu0 %v464
    %2071 = vmatpush.msra.mxu0 %v460
    %2072 = vmatpush.msra.mxu0 %v456
    %2073 = vmatpush.msra.mxu0 %v452
    %2074 = vmatpush.msra.mxu0 %v448
    %2075 = vmatpush.msra.mxu0 %v444
    %2076 = vmatmul.f32.gmra.mxu0 %v2039
    %v2077 = vpop.f32.mrf.mxu0
    %v2078 = vadd.f32 0.0, %v2077
    %2079 = vdwg.mxu0
    %2080 = vmatpush.msra.mxu0 %v505
    %2081 = vmatpush.msra.mxu0 %v501
    %2082 = vmatpush.msra.mxu0 %v497
    %2083 = vmatpush.msra.mxu0 %v493
    %2084 = vmatpush.msra.mxu0 %v489
    %2085 = vmatpush.msra.mxu0 %v485
    %2086 = vmatpush.msra.mxu0 %v481
    %2087 = vmatpush.msra.mxu0 %v477
    %2088 = vmatpush.msra.mxu0 %v473
    %2089 = vmatpush.msra.mxu0 %v469
    %2090 = vmatpush.msra.mxu0 %v465
    %2091 = vmatpush.msra.mxu0 %v461
    %2092 = vmatpush.msra.mxu0 %v457
    %2093 = vmatpush.msra.mxu0 %v453
    %2094 = vmatpush.msra.mxu0 %v449
    %2095 = vmatpush.msra.mxu0 %v445
    %2096 = vmatmul.f32.gmra.mxu0 %v2039
    %v2097 = vpop.f32.mrf.mxu0
    %v2098 = vadd.f32 0.0, %v2097
    %2099 = vdwg.mxu0
    %2100 = vmatpush.msra.mxu0 %v506
    %2101 = vmatpush.msra.mxu0 %v502
    %2102 = vmatpush.msra.mxu0 %v498
    %2103 = vmatpush.msra.mxu0 %v494
    %2104 = vmatpush.msra.mxu0 %v490
    %2105 = vmatpush.msra.mxu0 %v486
    %2106 = vmatpush.msra.mxu0 %v482
    %2107 = vmatpush.msra.mxu0 %v478
    %2108 = vmatpush.msra.mxu0 %v474
    %2109 = vmatpush.msra.mxu0 %v470
    %2110 = vmatpush.msra.mxu0 %v466
    %2111 = vmatpush.msra.mxu0 %v462
    %2112 = vmatpush.msra.mxu0 %v458
    %2113 = vmatpush.msra.mxu0 %v454
    %2114 = vmatpush.msra.mxu0 %v450
    %2115 = vmatpush.msra.mxu0 %v446
    %2116 = vmatmul.f32.gmra.mxu0 %v2039
    %v2117 = vpop.f32.mrf.mxu0
    %v2118 = vadd.f32 0.0, %v2117
    %2119 = vdwg.mxu0
    %v2120 = vadd.f32 %v234, %v2058
    %v2121 = vadd.f32 %v299, %v2078
    %v2122 = vadd.f32 %v364, %v2098
    %v2123 = vadd.f32 %v429, %v2118
    %v2124 = vxor.u32 %v2120, 2147483648
    %v2125 = vmul.f32 %v2124, 1.442695
    %v2126 = vpow.pop %v2125
    %v2127 = vadd.f32 %v2126, 1.0
    %v2128 = vrcp.pop %v2127
    %v2129 = vmul.f32 %v2127, %v2128
    %v2130 = vsub.f32 1.0, %v2129
    %v2131 = vmul.f32 %v2128, %v2130
    %v2132 = vadd.f32 %v2128, %v2131
    %vm2133 = vweird.f32 %v2127
    %vm2134 = vweird.f32 %v2128
    %vm2135 = vmor %vm2133, %vm2134
    %v2136 = vsel %vm2135, %v2128, %v2132
    %v2137 = vand.u32 2147483647, %v2127
    %vm2138 = vcmp.eq.f32.partialorder %v2137, 8.507059e+37
    %v2139 = vand.u32 %v2127, 2147483648
    %v2140 = vor.u32 1.1754944e-38, %v2139
    %v2141 = vsel %vm2138, %v2140, %v2136
    %v2142 = vmul.f32 1.0, %v2141
    %v2143 = vxor.u32 %v2121, 2147483648
    %v2144 = vmul.f32 %v2143, 1.442695
    %v2145 = vpow.pop %v2144
    %v2146 = vadd.f32 %v2145, 1.0
    %v2147 = vrcp.pop %v2146
    %v2148 = vmul.f32 %v2146, %v2147
    %v2149 = vsub.f32 1.0, %v2148
    %v2150 = vmul.f32 %v2147, %v2149
    %v2151 = vadd.f32 %v2147, %v2150
    %vm2152 = vweird.f32 %v2146
    %vm2153 = vweird.f32 %v2147
    %vm2154 = vmor %vm2152, %vm2153
    %v2155 = vsel %vm2154, %v2147, %v2151
    %v2156 = vand.u32 2147483647, %v2146
    %vm2157 = vcmp.eq.f32.partialorder %v2156, 8.507059e+37
    %v2158 = vand.u32 %v2146, 2147483648
    %v2159 = vor.u32 1.1754944e-38, %v2158
    %v2160 = vsel %vm2157, %v2159, %v2155
    %v2161 = vmul.f32 1.0, %v2160
    %v2162 = vtanh.pop %v2122
    %v2163 = vxor.u32 %v2123, 2147483648
    %v2164 = vmul.f32 %v2163, 1.442695
    %v2165 = vpow.pop %v2164
    %v2166 = vadd.f32 %v2165, 1.0
    %v2167 = vrcp.pop %v2166
    %v2168 = vmul.f32 %v2166, %v2167
    %v2169 = vsub.f32 1.0, %v2168
    %v2170 = vmul.f32 %v2167, %v2169
    %v2171 = vadd.f32 %v2167, %v2170
    %vm2172 = vweird.f32 %v2166
    %vm2173 = vweird.f32 %v2167
    %vm2174 = vmor %vm2172, %vm2173
    %v2175 = vsel %vm2174, %v2167, %v2171
    %v2176 = vand.u32 2147483647, %v2166
    %vm2177 = vcmp.eq.f32.partialorder %v2176, 8.507059e+37
    %v2178 = vand.u32 %v2166, 2147483648
    %v2179 = vor.u32 1.1754944e-38, %v2178
    %v2180 = vsel %vm2177, %v2179, %v2175
    %v2181 = vmul.f32 1.0, %v2180
    %v2182 = vmul.f32 %v2161, %v2037
    %v2183 = vmul.f32 %v2142, %v2162
    %v2184 = vadd.f32 %v2182, %v2183
    %v2185 = vtanh.pop %v2184
    %v2186 = vmul.f32 %v2181, %v2185
    %2187 = vmatpush.msra.mxu0 %v503
    %2188 = vmatpush.msra.mxu0 %v499
    %2189 = vmatpush.msra.mxu0 %v495
    %2190 = vmatpush.msra.mxu0 %v491
    %2191 = vmatpush.msra.mxu0 %v487
    %2192 = vmatpush.msra.mxu0 %v483
    %2193 = vmatpush.msra.mxu0 %v479
    %2194 = vmatpush.msra.mxu0 %v475
    %2195 = vmatpush.msra.mxu0 %v471
    %2196 = vmatpush.msra.mxu0 %v467
    %2197 = vmatpush.msra.mxu0 %v463
    %2198 = vmatpush.msra.mxu0 %v459
    %2199 = vmatpush.msra.mxu0 %v455
    %2200 = vmatpush.msra.mxu0 %v451
    %2201 = vmatpush.msra.mxu0 %v447
    %2202 = vmatpush.msra.mxu0 %v443
    %2203 = vmatmul.f32.gmra.mxu0 %v2186
    %v2204 = vpop.f32.mrf.mxu0
    %v2205 = vadd.f32 0.0, %v2204
    %2206 = vdwg.mxu0
    %2207 = vmatpush.msra.mxu0 %v504
    %2208 = vmatpush.msra.mxu0 %v500
    %2209 = vmatpush.msra.mxu0 %v496
    %2210 = vmatpush.msra.mxu0 %v492
    %2211 = vmatpush.msra.mxu0 %v488
    %2212 = vmatpush.msra.mxu0 %v484
    %2213 = vmatpush.msra.mxu0 %v480
    %2214 = vmatpush.msra.mxu0 %v476
    %2215 = vmatpush.msra.mxu0 %v472
    %2216 = vmatpush.msra.mxu0 %v468
    %2217 = vmatpush.msra.mxu0 %v464
    %2218 = vmatpush.msra.mxu0 %v460
    %2219 = vmatpush.msra.mxu0 %v456
    %2220 = vmatpush.msra.mxu0 %v452
    %2221 = vmatpush.msra.mxu0 %v448
    %2222 = vmatpush.msra.mxu0 %v444
    %2223 = vmatmul.f32.gmra.mxu0 %v2186
    %v2224 = vpop.f32.mrf.mxu0
    %v2225 = vadd.f32 0.0, %v2224
    %2226 = vdwg.mxu0
    %2227 = vmatpush.msra.mxu0 %v505
    %2228 = vmatpush.msra.mxu0 %v501
    %2229 = vmatpush.msra.mxu0 %v497
    %2230 = vmatpush.msra.mxu0 %v493
    %2231 = vmatpush.msra.mxu0 %v489
    %2232 = vmatpush.msra.mxu0 %v485
    %2233 = vmatpush.msra.mxu0 %v481
    %2234 = vmatpush.msra.mxu0 %v477
    %2235 = vmatpush.msra.mxu0 %v473
    %2236 = vmatpush.msra.mxu0 %v469
    %2237 = vmatpush.msra.mxu0 %v465
    %2238 = vmatpush.msra.mxu0 %v461
    %2239 = vmatpush.msra.mxu0 %v457
    %2240 = vmatpush.msra.mxu0 %v453
    %2241 = vmatpush.msra.mxu0 %v449
    %2242 = vmatpush.msra.mxu0 %v445
    %2243 = vmatmul.f32.gmra.mxu0 %v2186
    %v2244 = vpop.f32.mrf.mxu0
    %v2245 = vadd.f32 0.0, %v2244
    %2246 = vdwg.mxu0
    %2247 = vmatpush.msra.mxu0 %v506
    %2248 = vmatpush.msra.mxu0 %v502
    %2249 = vmatpush.msra.mxu0 %v498
    %2250 = vmatpush.msra.mxu0 %v494
    %2251 = vmatpush.msra.mxu0 %v490
    %2252 = vmatpush.msra.mxu0 %v486
    %2253 = vmatpush.msra.mxu0 %v482
    %2254 = vmatpush.msra.mxu0 %v478
    %2255 = vmatpush.msra.mxu0 %v474
    %2256 = vmatpush.msra.mxu0 %v470
    %2257 = vmatpush.msra.mxu0 %v466
    %2258 = vmatpush.msra.mxu0 %v462
    %2259 = vmatpush.msra.mxu0 %v458
    %2260 = vmatpush.msra.mxu0 %v454
    %2261 = vmatpush.msra.mxu0 %v450
    %2262 = vmatpush.msra.mxu0 %v446
    %2263 = vmatmul.f32.gmra.mxu0 %v2186
    %v2264 = vpop.f32.mrf.mxu0
    %v2265 = vadd.f32 0.0, %v2264
    %2266 = vdwg.mxu0
    %v2267 = vadd.f32 %v237, %v2205
    %v2268 = vadd.f32 %v302, %v2225
    %v2269 = vadd.f32 %v367, %v2245
    %v2270 = vadd.f32 %v432, %v2265
    %v2271 = vxor.u32 %v2267, 2147483648
    %v2272 = vmul.f32 %v2271, 1.442695
    %v2273 = vpow.pop %v2272
    %v2274 = vadd.f32 %v2273, 1.0
    %v2275 = vrcp.pop %v2274
    %v2276 = vmul.f32 %v2274, %v2275
    %v2277 = vsub.f32 1.0, %v2276
    %v2278 = vmul.f32 %v2275, %v2277
    %v2279 = vadd.f32 %v2275, %v2278
    %vm2280 = vweird.f32 %v2274
    %vm2281 = vweird.f32 %v2275
    %vm2282 = vmor %vm2280, %vm2281
    %v2283 = vsel %vm2282, %v2275, %v2279
    %v2284 = vand.u32 2147483647, %v2274
    %vm2285 = vcmp.eq.f32.partialorder %v2284, 8.507059e+37
    %v2286 = vand.u32 %v2274, 2147483648
    %v2287 = vor.u32 1.1754944e-38, %v2286
    %v2288 = vsel %vm2285, %v2287, %v2283
    %v2289 = vmul.f32 1.0, %v2288
    %v2290 = vxor.u32 %v2268, 2147483648
    %v2291 = vmul.f32 %v2290, 1.442695
    %v2292 = vpow.pop %v2291
    %v2293 = vadd.f32 %v2292, 1.0
    %v2294 = vrcp.pop %v2293
    %v2295 = vmul.f32 %v2293, %v2294
    %v2296 = vsub.f32 1.0, %v2295
    %v2297 = vmul.f32 %v2294, %v2296
    %v2298 = vadd.f32 %v2294, %v2297
    %vm2299 = vweird.f32 %v2293
    %vm2300 = vweird.f32 %v2294
    %vm2301 = vmor %vm2299, %vm2300
    %v2302 = vsel %vm2301, %v2294, %v2298
    %v2303 = vand.u32 2147483647, %v2293
    %vm2304 = vcmp.eq.f32.partialorder %v2303, 8.507059e+37
    %v2305 = vand.u32 %v2293, 2147483648
    %v2306 = vor.u32 1.1754944e-38, %v2305
    %v2307 = vsel %vm2304, %v2306, %v2302
    %v2308 = vmul.f32 1.0, %v2307
    %v2309 = vtanh.pop %v2269
    %v2310 = vxor.u32 %v2270, 2147483648
    %v2311 = vmul.f32 %v2310, 1.442695
    %v2312 = vpow.pop %v2311
    %v2313 = vadd.f32 %v2312, 1.0
    %v2314 = vrcp.pop %v2313
    %v2315 = vmul.f32 %v2313, %v2314
    %v2316 = vsub.f32 1.0, %v2315
    %v2317 = vmul.f32 %v2314, %v2316
    %v2318 = vadd.f32 %v2314, %v2317
    %vm2319 = vweird.f32 %v2313
    %vm2320 = vweird.f32 %v2314
    %vm2321 = vmor %vm2319, %vm2320
    %v2322 = vsel %vm2321, %v2314, %v2318
    %v2323 = vand.u32 2147483647, %v2313
    %vm2324 = vcmp.eq.f32.partialorder %v2323, 8.507059e+37
    %v2325 = vand.u32 %v2313, 2147483648
    %v2326 = vor.u32 1.1754944e-38, %v2325
    %v2327 = vsel %vm2324, %v2326, %v2322
    %v2328 = vmul.f32 1.0, %v2327
    %v2329 = vmul.f32 %v2308, %v2184
    %v2330 = vmul.f32 %v2289, %v2309
    %v2331 = vadd.f32 %v2329, %v2330
    %v2332 = vtanh.pop %v2331
    %v2333 = vmul.f32 %v2328, %v2332
    %2334 = vmatpush.msra.mxu0 %v503
    %2335 = vmatpush.msra.mxu0 %v499
    %2336 = vmatpush.msra.mxu0 %v495
    %2337 = vmatpush.msra.mxu0 %v491
    %2338 = vmatpush.msra.mxu0 %v487
    %2339 = vmatpush.msra.mxu0 %v483
    %2340 = vmatpush.msra.mxu0 %v479
    %2341 = vmatpush.msra.mxu0 %v475
    %2342 = vmatpush.msra.mxu0 %v471
    %2343 = vmatpush.msra.mxu0 %v467
    %2344 = vmatpush.msra.mxu0 %v463
    %2345 = vmatpush.msra.mxu0 %v459
    %2346 = vmatpush.msra.mxu0 %v455
    %2347 = vmatpush.msra.mxu0 %v451
    %2348 = vmatpush.msra.mxu0 %v447
    %2349 = vmatpush.msra.mxu0 %v443
    %2350 = vmatmul.f32.gmra.mxu0 %v2333
    %v2351 = vpop.f32.mrf.mxu0
    %v2352 = vadd.f32 0.0, %v2351
    %2353 = vdwg.mxu0
    %2354 = vmatpush.msra.mxu0 %v504
    %2355 = vmatpush.msra.mxu0 %v500
    %2356 = vmatpush.msra.mxu0 %v496
    %2357 = vmatpush.msra.mxu0 %v492
    %2358 = vmatpush.msra.mxu0 %v488
    %2359 = vmatpush.msra.mxu0 %v484
    %2360 = vmatpush.msra.mxu0 %v480
    %2361 = vmatpush.msra.mxu0 %v476
    %2362 = vmatpush.msra.mxu0 %v472
    %2363 = vmatpush.msra.mxu0 %v468
    %2364 = vmatpush.msra.mxu0 %v464
    %2365 = vmatpush.msra.mxu0 %v460
    %2366 = vmatpush.msra.mxu0 %v456
    %2367 = vmatpush.msra.mxu0 %v452
    %2368 = vmatpush.msra.mxu0 %v448
    %2369 = vmatpush.msra.mxu0 %v444
    %2370 = vmatmul.f32.gmra.mxu0 %v2333
    %v2371 = vpop.f32.mrf.mxu0
    %v2372 = vadd.f32 0.0, %v2371
    %2373 = vdwg.mxu0
    %2374 = vmatpush.msra.mxu0 %v505
    %2375 = vmatpush.msra.mxu0 %v501
    %2376 = vmatpush.msra.mxu0 %v497
    %2377 = vmatpush.msra.mxu0 %v493
    %2378 = vmatpush.msra.mxu0 %v489
    %2379 = vmatpush.msra.mxu0 %v485
    %2380 = vmatpush.msra.mxu0 %v481
    %2381 = vmatpush.msra.mxu0 %v477
    %2382 = vmatpush.msra.mxu0 %v473
    %2383 = vmatpush.msra.mxu0 %v469
    %2384 = vmatpush.msra.mxu0 %v465
    %2385 = vmatpush.msra.mxu0 %v461
    %2386 = vmatpush.msra.mxu0 %v457
    %2387 = vmatpush.msra.mxu0 %v453
    %2388 = vmatpush.msra.mxu0 %v449
    %2389 = vmatpush.msra.mxu0 %v445
    %2390 = vmatmul.f32.gmra.mxu0 %v2333
    %v2391 = vpop.f32.mrf.mxu0
    %v2392 = vadd.f32 0.0, %v2391
    %2393 = vdwg.mxu0
    %2394 = vmatpush.msra.mxu0 %v506
    %2395 = vmatpush.msra.mxu0 %v502
    %2396 = vmatpush.msra.mxu0 %v498
    %2397 = vmatpush.msra.mxu0 %v494
    %2398 = vmatpush.msra.mxu0 %v490
    %2399 = vmatpush.msra.mxu0 %v486
    %2400 = vmatpush.msra.mxu0 %v482
    %2401 = vmatpush.msra.mxu0 %v478
    %2402 = vmatpush.msra.mxu0 %v474
    %2403 = vmatpush.msra.mxu0 %v470
    %2404 = vmatpush.msra.mxu0 %v466
    %2405 = vmatpush.msra.mxu0 %v462
    %2406 = vmatpush.msra.mxu0 %v458
    %2407 = vmatpush.msra.mxu0 %v454
    %2408 = vmatpush.msra.mxu0 %v450
    %2409 = vmatpush.msra.mxu0 %v446
    %2410 = vmatmul.f32.gmra.mxu0 %v2333
    %v2411 = vpop.f32.mrf.mxu0
    %v2412 = vadd.f32 0.0, %v2411
    %2413 = vdwg.mxu0
    %v2414 = vadd.f32 %v240, %v2352
    %v2415 = vadd.f32 %v305, %v2372
    %v2416 = vadd.f32 %v370, %v2392
    %v2417 = vadd.f32 %v435, %v2412
    %v2418 = vxor.u32 %v2414, 2147483648
    %v2419 = vmul.f32 %v2418, 1.442695
    %v2420 = vpow.pop %v2419
    %v2421 = vadd.f32 %v2420, 1.0
    %v2422 = vrcp.pop %v2421
    %v2423 = vmul.f32 %v2421, %v2422
    %v2424 = vsub.f32 1.0, %v2423
    %v2425 = vmul.f32 %v2422, %v2424
    %v2426 = vadd.f32 %v2422, %v2425
    %vm2427 = vweird.f32 %v2421
    %vm2428 = vweird.f32 %v2422
    %vm2429 = vmor %vm2427, %vm2428
    %v2430 = vsel %vm2429, %v2422, %v2426
    %v2431 = vand.u32 2147483647, %v2421
    %vm2432 = vcmp.eq.f32.partialorder %v2431, 8.507059e+37
    %v2433 = vand.u32 %v2421, 2147483648
    %v2434 = vor.u32 1.1754944e-38, %v2433
    %v2435 = vsel %vm2432, %v2434, %v2430
    %v2436 = vmul.f32 1.0, %v2435
    %v2437 = vxor.u32 %v2415, 2147483648
    %v2438 = vmul.f32 %v2437, 1.442695
    %v2439 = vpow.pop %v2438
    %v2440 = vadd.f32 %v2439, 1.0
    %v2441 = vrcp.pop %v2440
    %v2442 = vmul.f32 %v2440, %v2441
    %v2443 = vsub.f32 1.0, %v2442
    %v2444 = vmul.f32 %v2441, %v2443
    %v2445 = vadd.f32 %v2441, %v2444
    %vm2446 = vweird.f32 %v2440
    %vm2447 = vweird.f32 %v2441
    %vm2448 = vmor %vm2446, %vm2447
    %v2449 = vsel %vm2448, %v2441, %v2445
    %v2450 = vand.u32 2147483647, %v2440
    %vm2451 = vcmp.eq.f32.partialorder %v2450, 8.507059e+37
    %v2452 = vand.u32 %v2440, 2147483648
    %v2453 = vor.u32 1.1754944e-38, %v2452
    %v2454 = vsel %vm2451, %v2453, %v2449
    %v2455 = vmul.f32 1.0, %v2454
    %v2456 = vtanh.pop %v2416
    %v2457 = vxor.u32 %v2417, 2147483648
    %v2458 = vmul.f32 %v2457, 1.442695
    %v2459 = vpow.pop %v2458
    %v2460 = vadd.f32 %v2459, 1.0
    %v2461 = vrcp.pop %v2460
    %v2462 = vmul.f32 %v2460, %v2461
    %v2463 = vsub.f32 1.0, %v2462
    %v2464 = vmul.f32 %v2461, %v2463
    %v2465 = vadd.f32 %v2461, %v2464
    %vm2466 = vweird.f32 %v2460
    %vm2467 = vweird.f32 %v2461
    %vm2468 = vmor %vm2466, %vm2467
    %v2469 = vsel %vm2468, %v2461, %v2465
    %v2470 = vand.u32 2147483647, %v2460
    %vm2471 = vcmp.eq.f32.partialorder %v2470, 8.507059e+37
    %v2472 = vand.u32 %v2460, 2147483648
    %v2473 = vor.u32 1.1754944e-38, %v2472
    %v2474 = vsel %vm2471, %v2473, %v2469
    %v2475 = vmul.f32 1.0, %v2474
    %v2476 = vmul.f32 %v2455, %v2331
    %v2477 = vmul.f32 %v2436, %v2456
    %v2478 = vadd.f32 %v2476, %v2477
    %v2479 = vtanh.pop %v2478
    %v2480 = vmul.f32 %v2475, %v2479
    %2481 = vmatpush.msra.mxu0 %v503
    %2482 = vmatpush.msra.mxu0 %v499
    %2483 = vmatpush.msra.mxu0 %v495
    %2484 = vmatpush.msra.mxu0 %v491
    %2485 = vmatpush.msra.mxu0 %v487
    %2486 = vmatpush.msra.mxu0 %v483
    %2487 = vmatpush.msra.mxu0 %v479
    %2488 = vmatpush.msra.mxu0 %v475
    %2489 = vmatpush.msra.mxu0 %v471
    %2490 = vmatpush.msra.mxu0 %v467
    %2491 = vmatpush.msra.mxu0 %v463
    %2492 = vmatpush.msra.mxu0 %v459
    %2493 = vmatpush.msra.mxu0 %v455
    %2494 = vmatpush.msra.mxu0 %v451
    %2495 = vmatpush.msra.mxu0 %v447
    %2496 = vmatpush.msra.mxu0 %v443
    %2497 = vmatmul.f32.gmra.mxu0 %v2480
    %v2498 = vpop.f32.mrf.mxu0
    %v2499 = vadd.f32 0.0, %v2498
    %2500 = vdwg.mxu0
    %2501 = vmatpush.msra.mxu0 %v504
    %2502 = vmatpush.msra.mxu0 %v500
    %2503 = vmatpush.msra.mxu0 %v496
    %2504 = vmatpush.msra.mxu0 %v492
    %2505 = vmatpush.msra.mxu0 %v488
    %2506 = vmatpush.msra.mxu0 %v484
    %2507 = vmatpush.msra.mxu0 %v480
    %2508 = vmatpush.msra.mxu0 %v476
    %2509 = vmatpush.msra.mxu0 %v472
    %2510 = vmatpush.msra.mxu0 %v468
    %2511 = vmatpush.msra.mxu0 %v464
    %2512 = vmatpush.msra.mxu0 %v460
    %2513 = vmatpush.msra.mxu0 %v456
    %2514 = vmatpush.msra.mxu0 %v452
    %2515 = vmatpush.msra.mxu0 %v448
    %2516 = vmatpush.msra.mxu0 %v444
    %2517 = vmatmul.f32.gmra.mxu0 %v2480
    %v2518 = vpop.f32.mrf.mxu0
    %v2519 = vadd.f32 0.0, %v2518
    %2520 = vdwg.mxu0
    %2521 = vmatpush.msra.mxu0 %v505
    %2522 = vmatpush.msra.mxu0 %v501
    %2523 = vmatpush.msra.mxu0 %v497
    %2524 = vmatpush.msra.mxu0 %v493
    %2525 = vmatpush.msra.mxu0 %v489
    %2526 = vmatpush.msra.mxu0 %v485
    %2527 = vmatpush.msra.mxu0 %v481
    %2528 = vmatpush.msra.mxu0 %v477
    %2529 = vmatpush.msra.mxu0 %v473
    %2530 = vmatpush.msra.mxu0 %v469
    %2531 = vmatpush.msra.mxu0 %v465
    %2532 = vmatpush.msra.mxu0 %v461
    %2533 = vmatpush.msra.mxu0 %v457
    %2534 = vmatpush.msra.mxu0 %v453
    %2535 = vmatpush.msra.mxu0 %v449
    %2536 = vmatpush.msra.mxu0 %v445
    %2537 = vmatmul.f32.gmra.mxu0 %v2480
    %v2538 = vpop.f32.mrf.mxu0
    %v2539 = vadd.f32 0.0, %v2538
    %2540 = vdwg.mxu0
    %2541 = vmatpush.msra.mxu0 %v506
    %2542 = vmatpush.msra.mxu0 %v502
    %2543 = vmatpush.msra.mxu0 %v498
    %2544 = vmatpush.msra.mxu0 %v494
    %2545 = vmatpush.msra.mxu0 %v490
    %2546 = vmatpush.msra.mxu0 %v486
    %2547 = vmatpush.msra.mxu0 %v482
    %2548 = vmatpush.msra.mxu0 %v478
    %2549 = vmatpush.msra.mxu0 %v474
    %2550 = vmatpush.msra.mxu0 %v470
    %2551 = vmatpush.msra.mxu0 %v466
    %2552 = vmatpush.msra.mxu0 %v462
    %2553 = vmatpush.msra.mxu0 %v458
    %2554 = vmatpush.msra.mxu0 %v454
    %2555 = vmatpush.msra.mxu0 %v450
    %2556 = vmatpush.msra.mxu0 %v446
    %2557 = vmatmul.f32.gmra.mxu0 %v2480
    %v2558 = vpop.f32.mrf.mxu0
    %v2559 = vadd.f32 0.0, %v2558
    %2560 = vdwg.mxu0
    %v2561 = vadd.f32 %v243, %v2499
    %v2562 = vadd.f32 %v308, %v2519
    %v2563 = vadd.f32 %v373, %v2539
    %v2564 = vadd.f32 %v438, %v2559
    %v2565 = vxor.u32 %v2561, 2147483648
    %v2566 = vmul.f32 %v2565, 1.442695
    %v2567 = vpow.pop %v2566
    %v2568 = vadd.f32 %v2567, 1.0
    %v2569 = vrcp.pop %v2568
    %v2570 = vmul.f32 %v2568, %v2569
    %v2571 = vsub.f32 1.0, %v2570
    %v2572 = vmul.f32 %v2569, %v2571
    %v2573 = vadd.f32 %v2569, %v2572
    %vm2574 = vweird.f32 %v2568
    %vm2575 = vweird.f32 %v2569
    %vm2576 = vmor %vm2574, %vm2575
    %v2577 = vsel %vm2576, %v2569, %v2573
    %v2578 = vand.u32 2147483647, %v2568
    %vm2579 = vcmp.eq.f32.partialorder %v2578, 8.507059e+37
    %v2580 = vand.u32 %v2568, 2147483648
    %v2581 = vor.u32 1.1754944e-38, %v2580
    %v2582 = vsel %vm2579, %v2581, %v2577
    %v2583 = vmul.f32 1.0, %v2582
    %v2584 = vxor.u32 %v2562, 2147483648
    %v2585 = vmul.f32 %v2584, 1.442695
    %v2586 = vpow.pop %v2585
    %v2587 = vadd.f32 %v2586, 1.0
    %v2588 = vrcp.pop %v2587
    %v2589 = vmul.f32 %v2587, %v2588
    %v2590 = vsub.f32 1.0, %v2589
    %v2591 = vmul.f32 %v2588, %v2590
    %v2592 = vadd.f32 %v2588, %v2591
    %vm2593 = vweird.f32 %v2587
    %vm2594 = vweird.f32 %v2588
    %vm2595 = vmor %vm2593, %vm2594
    %v2596 = vsel %vm2595, %v2588, %v2592
    %v2597 = vand.u32 2147483647, %v2587
    %vm2598 = vcmp.eq.f32.partialorder %v2597, 8.507059e+37
    %v2599 = vand.u32 %v2587, 2147483648
    %v2600 = vor.u32 1.1754944e-38, %v2599
    %v2601 = vsel %vm2598, %v2600, %v2596
    %v2602 = vmul.f32 1.0, %v2601
    %v2603 = vtanh.pop %v2563
    %v2604 = vxor.u32 %v2564, 2147483648
    %v2605 = vmul.f32 %v2604, 1.442695
    %v2606 = vpow.pop %v2605
    %v2607 = vadd.f32 %v2606, 1.0
    %v2608 = vrcp.pop %v2607
    %v2609 = vmul.f32 %v2607, %v2608
    %v2610 = vsub.f32 1.0, %v2609
    %v2611 = vmul.f32 %v2608, %v2610
    %v2612 = vadd.f32 %v2608, %v2611
    %vm2613 = vweird.f32 %v2607
    %vm2614 = vweird.f32 %v2608
    %vm2615 = vmor %vm2613, %vm2614
    %v2616 = vsel %vm2615, %v2608, %v2612
    %v2617 = vand.u32 2147483647, %v2607
    %vm2618 = vcmp.eq.f32.partialorder %v2617, 8.507059e+37
    %v2619 = vand.u32 %v2607, 2147483648
    %v2620 = vor.u32 1.1754944e-38, %v2619
    %v2621 = vsel %vm2618, %v2620, %v2616
    %v2622 = vmul.f32 1.0, %v2621
    %v2623 = vmul.f32 %v2602, %v2478
    %v2624 = vmul.f32 %v2583, %v2603
    %v2625 = vadd.f32 %v2623, %v2624
    %v2626 = vtanh.pop %v2625
    %v2627 = vmul.f32 %v2622, %v2626
    %2628 = vmatpush.msra.mxu0 %v503
    %2629 = vmatpush.msra.mxu0 %v499
    %2630 = vmatpush.msra.mxu0 %v495
    %2631 = vmatpush.msra.mxu0 %v491
    %2632 = vmatpush.msra.mxu0 %v487
    %2633 = vmatpush.msra.mxu0 %v483
    %2634 = vmatpush.msra.mxu0 %v479
    %2635 = vmatpush.msra.mxu0 %v475
    %2636 = vmatpush.msra.mxu0 %v471
    %2637 = vmatpush.msra.mxu0 %v467
    %2638 = vmatpush.msra.mxu0 %v463
    %2639 = vmatpush.msra.mxu0 %v459
    %2640 = vmatpush.msra.mxu0 %v455
    %2641 = vmatpush.msra.mxu0 %v451
    %2642 = vmatpush.msra.mxu0 %v447
    %2643 = vmatpush.msra.mxu0 %v443
    %2644 = vmatmul.f32.gmra.mxu0 %v2627
    %v2645 = vpop.f32.mrf.mxu0
    %v2646 = vadd.f32 0.0, %v2645
    %2647 = vdwg.mxu0
    %2648 = vmatpush.msra.mxu0 %v504
    %2649 = vmatpush.msra.mxu0 %v500
    %2650 = vmatpush.msra.mxu0 %v496
    %2651 = vmatpush.msra.mxu0 %v492
    %2652 = vmatpush.msra.mxu0 %v488
    %2653 = vmatpush.msra.mxu0 %v484
    %2654 = vmatpush.msra.mxu0 %v480
    %2655 = vmatpush.msra.mxu0 %v476
    %2656 = vmatpush.msra.mxu0 %v472
    %2657 = vmatpush.msra.mxu0 %v468
    %2658 = vmatpush.msra.mxu0 %v464
    %2659 = vmatpush.msra.mxu0 %v460
    %2660 = vmatpush.msra.mxu0 %v456
    %2661 = vmatpush.msra.mxu0 %v452
    %2662 = vmatpush.msra.mxu0 %v448
    %2663 = vmatpush.msra.mxu0 %v444
    %2664 = vmatmul.f32.gmra.mxu0 %v2627
    %v2665 = vpop.f32.mrf.mxu0
    %v2666 = vadd.f32 0.0, %v2665
    %2667 = vdwg.mxu0
    %2668 = vmatpush.msra.mxu0 %v505
    %2669 = vmatpush.msra.mxu0 %v501
    %2670 = vmatpush.msra.mxu0 %v497
    %2671 = vmatpush.msra.mxu0 %v493
    %2672 = vmatpush.msra.mxu0 %v489
    %2673 = vmatpush.msra.mxu0 %v485
    %2674 = vmatpush.msra.mxu0 %v481
    %2675 = vmatpush.msra.mxu0 %v477
    %2676 = vmatpush.msra.mxu0 %v473
    %2677 = vmatpush.msra.mxu0 %v469
    %2678 = vmatpush.msra.mxu0 %v465
    %2679 = vmatpush.msra.mxu0 %v461
    %2680 = vmatpush.msra.mxu0 %v457
    %2681 = vmatpush.msra.mxu0 %v453
    %2682 = vmatpush.msra.mxu0 %v449
    %2683 = vmatpush.msra.mxu0 %v445
    %2684 = vmatmul.f32.gmra.mxu0 %v2627
    %v2685 = vpop.f32.mrf.mxu0
    %v2686 = vadd.f32 0.0, %v2685
    %2687 = vdwg.mxu0
    %2688 = vmatpush.msra.mxu0 %v506
    %2689 = vmatpush.msra.mxu0 %v502
    %2690 = vmatpush.msra.mxu0 %v498
    %2691 = vmatpush.msra.mxu0 %v494
    %2692 = vmatpush.msra.mxu0 %v490
    %2693 = vmatpush.msra.mxu0 %v486
    %2694 = vmatpush.msra.mxu0 %v482
    %2695 = vmatpush.msra.mxu0 %v478
    %2696 = vmatpush.msra.mxu0 %v474
    %2697 = vmatpush.msra.mxu0 %v470
    %2698 = vmatpush.msra.mxu0 %v466
    %2699 = vmatpush.msra.mxu0 %v462
    %2700 = vmatpush.msra.mxu0 %v458
    %2701 = vmatpush.msra.mxu0 %v454
    %2702 = vmatpush.msra.mxu0 %v450
    %2703 = vmatpush.msra.mxu0 %v446
    %2704 = vmatmul.f32.gmra.mxu0 %v2627
    %v2705 = vpop.f32.mrf.mxu0
    %v2706 = vadd.f32 0.0, %v2705
    %2707 = vdwg.mxu0
    %v2708 = vadd.f32 %v246, %v2646
    %v2709 = vadd.f32 %v311, %v2666
    %v2710 = vadd.f32 %v376, %v2686
    %v2711 = vadd.f32 %v441, %v2706
    %v2712 = vxor.u32 %v2708, 2147483648
    %v2713 = vmul.f32 %v2712, 1.442695
    %v2714 = vpow.pop %v2713
    %v2715 = vadd.f32 %v2714, 1.0
    %v2716 = vrcp.pop %v2715
    %v2717 = vmul.f32 %v2715, %v2716
    %v2718 = vsub.f32 1.0, %v2717
    %v2719 = vmul.f32 %v2716, %v2718
    %v2720 = vadd.f32 %v2716, %v2719
    %vm2721 = vweird.f32 %v2715
    %vm2722 = vweird.f32 %v2716
    %vm2723 = vmor %vm2721, %vm2722
    %v2724 = vsel %vm2723, %v2716, %v2720
    %v2725 = vand.u32 2147483647, %v2715
    %vm2726 = vcmp.eq.f32.partialorder %v2725, 8.507059e+37
    %v2727 = vand.u32 %v2715, 2147483648
    %v2728 = vor.u32 1.1754944e-38, %v2727
    %v2729 = vsel %vm2726, %v2728, %v2724
    %v2730 = vmul.f32 1.0, %v2729
    %v2731 = vxor.u32 %v2709, 2147483648
    %v2732 = vmul.f32 %v2731, 1.442695
    %v2733 = vpow.pop %v2732
    %v2734 = vadd.f32 %v2733, 1.0
    %v2735 = vrcp.pop %v2734
    %v2736 = vmul.f32 %v2734, %v2735
    %v2737 = vsub.f32 1.0, %v2736
    %v2738 = vmul.f32 %v2735, %v2737
    %v2739 = vadd.f32 %v2735, %v2738
    %vm2740 = vweird.f32 %v2734
    %vm2741 = vweird.f32 %v2735
    %vm2742 = vmor %vm2740, %vm2741
    %v2743 = vsel %vm2742, %v2735, %v2739
    %v2744 = vand.u32 2147483647, %v2734
    %vm2745 = vcmp.eq.f32.partialorder %v2744, 8.507059e+37
    %v2746 = vand.u32 %v2734, 2147483648
    %v2747 = vor.u32 1.1754944e-38, %v2746
    %v2748 = vsel %vm2745, %v2747, %v2743
    %v2749 = vmul.f32 1.0, %v2748
    %v2750 = vtanh.pop %v2710
    %v2751 = vxor.u32 %v2711, 2147483648
    %v2752 = vmul.f32 %v2751, 1.442695
    %v2753 = vpow.pop %v2752
    %v2754 = vadd.f32 %v2753, 1.0
    %v2755 = vrcp.pop %v2754
    %v2756 = vmul.f32 %v2754, %v2755
    %v2757 = vsub.f32 1.0, %v2756
    %v2758 = vmul.f32 %v2755, %v2757
    %v2759 = vadd.f32 %v2755, %v2758
    %vm2760 = vweird.f32 %v2754
    %vm2761 = vweird.f32 %v2755
    %vm2762 = vmor %vm2760, %vm2761
    %v2763 = vsel %vm2762, %v2755, %v2759
    %v2764 = vand.u32 2147483647, %v2754
    %vm2765 = vcmp.eq.f32.partialorder %v2764, 8.507059e+37
    %v2766 = vand.u32 %v2754, 2147483648
    %v2767 = vor.u32 1.1754944e-38, %v2766
    %v2768 = vsel %vm2765, %v2767, %v2763
    %v2769 = vmul.f32 1.0, %v2768
    %v2770 = vmul.f32 %v2749, %v2625
    %v2771 = vmul.f32 %v2730, %v2750
    %v2772 = vadd.f32 %v2770, %v2771
    %v2773 = vtanh.pop %v2772
    %v2774 = vmul.f32 %v2769, %v2773
    %v2775 = vld [vmem:[#allocation2] sm:$0xff]
    %v2776 = vld [vmem:[#allocation2 + $0x8] sm:$0xff]
    %v2777 = vld [vmem:[#allocation2 + $0x10] sm:$0xff]
    %v2778 = vld [vmem:[#allocation2 + $0x18] sm:$0xff]
    %v2779 = vld [vmem:[#allocation2 + $0x20] sm:$0xff]
    %v2780 = vld [vmem:[#allocation2 + $0x28] sm:$0xff]
    %v2781 = vld [vmem:[#allocation2 + $0x30] sm:$0xff]
    %v2782 = vld [vmem:[#allocation2 + $0x38] sm:$0xff]
    %v2783 = vld [vmem:[#allocation2 + $0x40] sm:$0xff]
    %v2784 = vld [vmem:[#allocation2 + $0x48] sm:$0xff]
    %v2785 = vld [vmem:[#allocation2 + $0x50] sm:$0xff]
    %v2786 = vld [vmem:[#allocation2 + $0x58] sm:$0xff]
    %v2787 = vld [vmem:[#allocation2 + $0x60] sm:$0xff]
    %v2788 = vld [vmem:[#allocation2 + $0x68] sm:$0xff]
    %v2789 = vld [vmem:[#allocation2 + $0x70] sm:$0xff]
    %v2790 = vld [vmem:[#allocation2 + $0x78] sm:$0xff]
    %v2791 = vld [vmem:[#allocation2 + $0x80] sm:$0xff]
    %v2792 = vld [vmem:[#allocation2 + $0x88] sm:$0xff]
    %v2793 = vld [vmem:[#allocation2 + $0x90] sm:$0xff]
    %v2794 = vld [vmem:[#allocation2 + $0x98] sm:$0xff]
    %v2795 = vld [vmem:[#allocation2 + $0xa0] sm:$0xff]
    %v2796 = vld [vmem:[#allocation2 + $0xa8] sm:$0xff]
    %v2797 = vld [vmem:[#allocation2 + $0xb0] sm:$0xff]
    %v2798 = vld [vmem:[#allocation2 + $0xb8] sm:$0xff]
    %v2799 = vld [vmem:[#allocation2 + $0xc0] sm:$0xff]
    %v2800 = vld [vmem:[#allocation2 + $0xc8] sm:$0xff]
    %v2801 = vld [vmem:[#allocation2 + $0xd0] sm:$0xff]
    %v2802 = vld [vmem:[#allocation2 + $0xd8] sm:$0xff]
    %v2803 = vld [vmem:[#allocation2 + $0xe0] sm:$0xff]
    %v2804 = vld [vmem:[#allocation2 + $0xe8] sm:$0xff]
    %v2805 = vld [vmem:[#allocation2 + $0xf0] sm:$0xff]
    %v2806 = vld [vmem:[#allocation2 + $0xf8] sm:$0xff]
    %v2807 = vld [vmem:[%s4] sm:$0xf]
    %v2809 = vperm.slane %v2807, 0
    %v2810 = vperm.slane %v2807, 1
    %v2811 = vperm.slane %v2807, 2
    %v2812 = vperm.slane %v2807, 3
    %2817 = vmatpush.msra.mxu0 0.0
    %2818 = vmatpush.msra.mxu0 0.0
    %2819 = vmatpush.msra.mxu0 0.0
    %2820 = vmatpush.msra.mxu0 0.0
    %2821 = vmatpush.msra.mxu0 0.0
    %2822 = vmatpush.msra.mxu0 0.0
    %2823 = vmatpush.msra.mxu0 0.0
    %2824 = vmatpush.msra.mxu0 0.0
    %2825 = vmatpush.msra.mxu0 %v2803
    %2826 = vmatpush.msra.mxu0 %v2799
    %2827 = vmatpush.msra.mxu0 %v2795
    %2828 = vmatpush.msra.mxu0 %v2791
    %2829 = vmatpush.msra.mxu0 %v2787
    %2830 = vmatpush.msra.mxu0 %v2783
    %2831 = vmatpush.msra.mxu0 %v2779
    %2832 = vmatpush.msra.mxu0 %v2775
    %2833 = vmatmul.f32.gmra.mxu0 %v181
    %v2834 = vpop.f32.mrf.mxu0
    %v2835 = vadd.f32 %v2809, %v2834
    %2836 = vdwg.mxu0
    %2837 = vmatpush.msra.mxu0 0.0
    %2838 = vmatpush.msra.mxu0 0.0
    %2839 = vmatpush.msra.mxu0 0.0
    %2840 = vmatpush.msra.mxu0 0.0
    %2841 = vmatpush.msra.mxu0 0.0
    %2842 = vmatpush.msra.mxu0 0.0
    %2843 = vmatpush.msra.mxu0 0.0
    %2844 = vmatpush.msra.mxu0 0.0
    %2845 = vmatpush.msra.mxu0 %v2804
    %2846 = vmatpush.msra.mxu0 %v2800
    %2847 = vmatpush.msra.mxu0 %v2796
    %2848 = vmatpush.msra.mxu0 %v2792
    %2849 = vmatpush.msra.mxu0 %v2788
    %2850 = vmatpush.msra.mxu0 %v2784
    %2851 = vmatpush.msra.mxu0 %v2780
    %2852 = vmatpush.msra.mxu0 %v2776
    %2853 = vmatmul.f32.gmra.mxu0 %v181
    %v2854 = vpop.f32.mrf.mxu0
    %v2855 = vadd.f32 %v2810, %v2854
    %2856 = vdwg.mxu0
    %2857 = vmatpush.msra.mxu0 0.0
    %2858 = vmatpush.msra.mxu0 0.0
    %2859 = vmatpush.msra.mxu0 0.0
    %2860 = vmatpush.msra.mxu0 0.0
    %2861 = vmatpush.msra.mxu0 0.0
    %2862 = vmatpush.msra.mxu0 0.0
    %2863 = vmatpush.msra.mxu0 0.0
    %2864 = vmatpush.msra.mxu0 0.0
    %2865 = vmatpush.msra.mxu0 %v2805
    %2866 = vmatpush.msra.mxu0 %v2801
    %2867 = vmatpush.msra.mxu0 %v2797
    %2868 = vmatpush.msra.mxu0 %v2793
    %2869 = vmatpush.msra.mxu0 %v2789
    %2870 = vmatpush.msra.mxu0 %v2785
    %2871 = vmatpush.msra.mxu0 %v2781
    %2872 = vmatpush.msra.mxu0 %v2777
    %2873 = vmatmul.f32.gmra.mxu0 %v181
    %v2874 = vpop.f32.mrf.mxu0
    %v2875 = vadd.f32 %v2811, %v2874
    %2876 = vdwg.mxu0
    %2877 = vmatpush.msra.mxu0 0.0
    %2878 = vmatpush.msra.mxu0 0.0
    %2879 = vmatpush.msra.mxu0 0.0
    %2880 = vmatpush.msra.mxu0 0.0
    %2881 = vmatpush.msra.mxu0 0.0
    %2882 = vmatpush.msra.mxu0 0.0
    %2883 = vmatpush.msra.mxu0 0.0
    %2884 = vmatpush.msra.mxu0 0.0
    %2885 = vmatpush.msra.mxu0 %v2806
    %2886 = vmatpush.msra.mxu0 %v2802
    %2887 = vmatpush.msra.mxu0 %v2798
    %2888 = vmatpush.msra.mxu0 %v2794
    %2889 = vmatpush.msra.mxu0 %v2790
    %2890 = vmatpush.msra.mxu0 %v2786
    %2891 = vmatpush.msra.mxu0 %v2782
    %2892 = vmatpush.msra.mxu0 %v2778
    %2893 = vmatmul.f32.gmra.mxu0 %v181
    %v2894 = vpop.f32.mrf.mxu0
    %v2895 = vadd.f32 %v2812, %v2894
    %2896 = vdwg.mxu0
    %v2897 = vxor.u32 %v2835, 2147483648
    %v2898 = vmul.f32 %v2897, 1.442695
    %v2899 = vpow.pop %v2898
    %v2900 = vadd.f32 %v2899, 1.0
    %v2901 = vrcp.pop %v2900
    %v2902 = vmul.f32 %v2900, %v2901
    %v2903 = vsub.f32 1.0, %v2902
    %v2904 = vmul.f32 %v2901, %v2903
    %v2905 = vadd.f32 %v2901, %v2904
    %vm2906 = vweird.f32 %v2900
    %vm2907 = vweird.f32 %v2901
    %vm2908 = vmor %vm2906, %vm2907
    %v2909 = vsel %vm2908, %v2901, %v2905
    %v2910 = vand.u32 2147483647, %v2900
    %vm2911 = vcmp.eq.f32.partialorder %v2910, 8.507059e+37
    %v2912 = vand.u32 %v2900, 2147483648
    %v2913 = vor.u32 1.1754944e-38, %v2912
    %v2914 = vsel %vm2911, %v2913, %v2909
    %v2915 = vmul.f32 1.0, %v2914
    %v2916 = vxor.u32 %v2855, 2147483648
    %v2917 = vmul.f32 %v2916, 1.442695
    %v2918 = vpow.pop %v2917
    %v2919 = vadd.f32 %v2918, 1.0
    %v2920 = vrcp.pop %v2919
    %v2921 = vmul.f32 %v2919, %v2920
    %v2922 = vsub.f32 1.0, %v2921
    %v2923 = vmul.f32 %v2920, %v2922
    %v2924 = vadd.f32 %v2920, %v2923
    %vm2925 = vweird.f32 %v2919
    %vm2926 = vweird.f32 %v2920
    %vm2927 = vmor %vm2925, %vm2926
    %v2928 = vsel %vm2927, %v2920, %v2924
    %v2929 = vand.u32 2147483647, %v2919
    %vm2930 = vcmp.eq.f32.partialorder %v2929, 8.507059e+37
    %v2931 = vand.u32 %v2919, 2147483648
    %v2932 = vor.u32 1.1754944e-38, %v2931
    %v2933 = vsel %vm2930, %v2932, %v2928
    %v2934 = vmul.f32 1.0, %v2933
    %v2935 = vtanh.pop %v2875
    %v2936 = vxor.u32 %v2895, 2147483648
    %v2937 = vmul.f32 %v2936, 1.442695
    %v2938 = vpow.pop %v2937
    %v2939 = vadd.f32 %v2938, 1.0
    %v2940 = vrcp.pop %v2939
    %v2941 = vmul.f32 %v2939, %v2940
    %v2942 = vsub.f32 1.0, %v2941
    %v2943 = vmul.f32 %v2940, %v2942
    %v2944 = vadd.f32 %v2940, %v2943
    %vm2945 = vweird.f32 %v2939
    %vm2946 = vweird.f32 %v2940
    %vm2947 = vmor %vm2945, %vm2946
    %v2948 = vsel %vm2947, %v2940, %v2944
    %v2949 = vand.u32 2147483647, %v2939
    %vm2950 = vcmp.eq.f32.partialorder %v2949, 8.507059e+37
    %v2951 = vand.u32 %v2939, 2147483648
    %v2952 = vor.u32 1.1754944e-38, %v2951
    %v2953 = vsel %vm2950, %v2952, %v2948
    %v2954 = vmul.f32 1.0, %v2953
    %v2955 = vmul.f32 %v2934, 0.0
    %v2956 = vmul.f32 %v2915, %v2935
    %v2957 = vadd.f32 %v2955, %v2956
    %v2958 = vtanh.pop %v2957
    %v2959 = vmul.f32 %v2954, %v2958
    %v2960 = vld [vmem:[#allocation6] sm:$0xff]
    %v2961 = vld [vmem:[#allocation6 + $0x8] sm:$0xff]
    %v2962 = vld [vmem:[#allocation6 + $0x10] sm:$0xff]
    %v2963 = vld [vmem:[#allocation6 + $0x18] sm:$0xff]
    %v2964 = vld [vmem:[#allocation6 + $0x20] sm:$0xff]
    %v2965 = vld [vmem:[#allocation6 + $0x28] sm:$0xff]
    %v2966 = vld [vmem:[#allocation6 + $0x30] sm:$0xff]
    %v2967 = vld [vmem:[#allocation6 + $0x38] sm:$0xff]
    %v2968 = vld [vmem:[#allocation6 + $0x40] sm:$0xff]
    %v2969 = vld [vmem:[#allocation6 + $0x48] sm:$0xff]
    %v2970 = vld [vmem:[#allocation6 + $0x50] sm:$0xff]
    %v2971 = vld [vmem:[#allocation6 + $0x58] sm:$0xff]
    %v2972 = vld [vmem:[#allocation6 + $0x60] sm:$0xff]
    %v2973 = vld [vmem:[#allocation6 + $0x68] sm:$0xff]
    %v2974 = vld [vmem:[#allocation6 + $0x70] sm:$0xff]
    %v2975 = vld [vmem:[#allocation6 + $0x78] sm:$0xff]
    %v2976 = vld [vmem:[#allocation6 + $0x80] sm:$0xff]
    %v2977 = vld [vmem:[#allocation6 + $0x88] sm:$0xff]
    %v2978 = vld [vmem:[#allocation6 + $0x90] sm:$0xff]
    %v2979 = vld [vmem:[#allocation6 + $0x98] sm:$0xff]
    %v2980 = vld [vmem:[#allocation6 + $0xa0] sm:$0xff]
    %v2981 = vld [vmem:[#allocation6 + $0xa8] sm:$0xff]
    %v2982 = vld [vmem:[#allocation6 + $0xb0] sm:$0xff]
    %v2983 = vld [vmem:[#allocation6 + $0xb8] sm:$0xff]
    %v2984 = vld [vmem:[#allocation6 + $0xc0] sm:$0xff]
    %v2985 = vld [vmem:[#allocation6 + $0xc8] sm:$0xff]
    %v2986 = vld [vmem:[#allocation6 + $0xd0] sm:$0xff]
    %v2987 = vld [vmem:[#allocation6 + $0xd8] sm:$0xff]
    %v2988 = vld [vmem:[#allocation6 + $0xe0] sm:$0xff]
    %v2989 = vld [vmem:[#allocation6 + $0xe8] sm:$0xff]
    %v2990 = vld [vmem:[#allocation6 + $0xf0] sm:$0xff]
    %v2991 = vld [vmem:[#allocation6 + $0xf8] sm:$0xff]
    %v2992 = vld [vmem:[%s7] sm:$0x1]
    %v2994 = vperm.slane %v2992, 0
    %2996 = vmatpush.msra.mxu0 %v2975
    %2997 = vmatpush.msra.mxu0 %v2974
    %2998 = vmatpush.msra.mxu0 %v2973
    %2999 = vmatpush.msra.mxu0 %v2972
    %3000 = vmatpush.msra.mxu0 %v2971
    %3001 = vmatpush.msra.mxu0 %v2970
    %3002 = vmatpush.msra.mxu0 %v2969
    %3003 = vmatpush.msra.mxu0 %v2968
    %3004 = vmatpush.msra.mxu0 %v2967
    %3005 = vmatpush.msra.mxu0 %v2966
    %3006 = vmatpush.msra.mxu0 %v2965
    %3007 = vmatpush.msra.mxu0 %v2964
    %3008 = vmatpush.msra.mxu0 %v2963
    %3009 = vmatpush.msra.mxu0 %v2962
    %3010 = vmatpush.msra.mxu0 %v2961
    %3011 = vmatpush.msra.mxu0 %v2960
    %3012 = vmatmul.f32.gmra.mxu0 %v2774
    %v3013 = vpop.f32.mrf.mxu0
    %v3014 = vadd.f32 %v2994, %v3013
    %3015 = vdwg.mxu0
    %3016 = vmatpush.msra.mxu0 %v2991
    %3017 = vmatpush.msra.mxu0 %v2990
    %3018 = vmatpush.msra.mxu0 %v2989
    %3019 = vmatpush.msra.mxu0 %v2988
    %3020 = vmatpush.msra.mxu0 %v2987
    %3021 = vmatpush.msra.mxu0 %v2986
    %3022 = vmatpush.msra.mxu0 %v2985
    %3023 = vmatpush.msra.mxu0 %v2984
    %3024 = vmatpush.msra.mxu0 %v2983
    %3025 = vmatpush.msra.mxu0 %v2982
    %3026 = vmatpush.msra.mxu0 %v2981
    %3027 = vmatpush.msra.mxu0 %v2980
    %3028 = vmatpush.msra.mxu0 %v2979
    %3029 = vmatpush.msra.mxu0 %v2978
    %3030 = vmatpush.msra.mxu0 %v2977
    %3031 = vmatpush.msra.mxu0 %v2976
    %3032 = vmatmul.f32.gmra.mxu0 %v2959
    %v3033 = vpop.f32.mrf.mxu0
    %v3034 = vadd.f32 %v3014, %v3033
    %3035 = vdwg.mxu0
    %3036 = vst [vmem:[%s8] sm:$0xff] %v3034
    // Predicated region
    $region46: #{lstm_bi_forward.1} parent=1 // pred_check
      _
    $region47: #{lstm_bi_forward.1} parent=1 // pred_check_branch
      %3038 = sbr.rel (0) target = $region49
    $region48: #{lstm_bi_forward.1} parent=1 // pred_region
      _
    $region49: #{lstm_bi_forward.1} parent=1 // pred_fallthru
      _
    // Predicated region
    $region50: #{lstm_bi_forward.1} parent=1 // pred_check
      _
    $region51: #{lstm_bi_forward.1} parent=1 // pred_check_branch
      %3040 = sbr.rel (0) target = $region53
    $region52: #{lstm_bi_forward.1} parent=1 // pred_region
      _
    $region53: #{lstm_bi_forward.1} parent=1 // pred_fallthru
      _
    %3041 = vsyncpa [#allocation3], 1
    %3042 = vsyncpa [#allocation5], 1

</llo_original>
